<compile_context>
chip_gen: v5e
topology: v5e:2x2
jax: 0.10.0
libtpu: 0.0.40
codegen_flags: <defaults>
</compile_context>

<pallas_src>
import functools

import jax
import jax.numpy as jnp
from jax.experimental import pallas as pl
from jax.experimental.pallas import tpu as pltpu


# Tap enumeration k = 3*ky + kx  <->  spatial offset (dy, dx) = (ky-1, kx-1).
_TAPS = [(ky - 1, kx - 1) for ky in range(3) for kx in range(3)]
_CENTER = 4  # (dy, dx) == (0, 0)


def _round_up(v, m):
    return (v + m - 1) // m * m


def _sigmoid(x):
    return 1.0 / (1.0 + jnp.exp(-x))


def _build_patch(v, masks_ref, patch_ref, C, W, LB):
    """Write the 9 zero-padded 3x3-neighbour views of v (C, LB) into the bf16
    scratch patch, one sublane slice per tap.  Bounds the live vreg set to
    ~one tap at a time instead of 9 f32 taps + a concatenated copy."""
    for k, (dy, dx) in enumerate(_TAPS):
        off = dy * W + dx
        sv = v if off == 0 else pltpu.roll(v, shift=(-off) % LB, axis=1)
        if k != _CENTER:
            # zero padding at image borders + kills cross-image roll leakage
            sv = sv * masks_ref[pl.ds(k, 1), :]
        patch_ref[pl.ds(k * C, C), :] = sv.astype(jnp.bfloat16)


def _squeeze_excite(x, seg_rows, inv_hw, ctab, vtab):
    """SqueezeExcite on a (C, B*HW) block holding B images on the lane axis.

    ctab = [W1^T | W2 | b2] : (C, 2R+1)   R = Cr rounded up to 8; the padded
                                          rows/cols are zero so they are inert
                                          through the ReLU / W2 contraction.
    vtab = [b1 | ws | bs]   : (1, R+C+1)
    Channel gate: per-image masked lane mean -> 2-layer MLP -> sigmoid.
    Spatial gate: (1,C)x(C,LB) matmul on the otherwise idle MXU.
    out = x * (channel_gate + spatial_gate)
    """
    C = ctab.shape[0]
    R = (ctab.shape[1] - 1) // 2
    w1t = ctab[:, 0:R]                      # (C, R)  == W1.T (zero-padded)
    w2 = ctab[:, R:2 * R]                   # (C, R)  == W2   (zero-padded)
    b2 = ctab[:, 2 * R:2 * R + 1]           # (C, 1)
    b1 = vtab[:, 0:R]                       # (1, R)
    ws = vtab[:, R:R + C]                   # (1, C)
    bs = vtab[:, R + C:R + C + 1]           # (1, 1)

    gate = _sigmoid(jnp.dot(ws, x, preferred_element_type=jnp.float32) + bs)  # (1, LB)
    for sb in seg_rows:                                                        # per image
        pooled = jnp.sum(x * sb, axis=1, keepdims=True) * inv_hw               # (C, 1)
        h = jnp.maximum(jnp.sum(w1t * pooled, axis=0, keepdims=True) + b1, 0.0)  # (1, R)
        cg = _sigmoid(jnp.sum(w2 * h, axis=1, keepdims=True) + b2)             # (C, 1)
        gate = gate + cg * sb                                                  # (C, LB)
    return x * gate


def resdecode_kernel(
    x_ref, masks_ref, seg_ref,
    conv1_w_ref, conv2_w_ref, chan_ref,
    se1_ctab_ref, se1_vtab_ref, se2_ctab_ref, se2_vtab_ref,
    out_ref,
    patch_ref,                  # VMEM scratch (9*max(Cin,Cout), B*HW) bf16
    *, H, W, B,
):
    Cin = x_ref.shape[0]
    Cout = out_ref.shape[0]
    HW = H * W
    LB = B * HW
    inv_hw = 1.0 / HW

    x = x_ref[...].astype(jnp.float32)                        # (Cin, LB)
    seg = seg_ref[...]                                        # (B, LB) 0/1 image indicators
    seg_rows = [seg[b:b + 1, :] for b in range(B)]

    chan = chan_ref[...]                                      # (Cout, 12)
    dw_w = chan[:, 0:9]                                       # depthwise taps
    dw_b = chan[:, 9:10]
    bn1_shift = chan[:, 10:11]                                # BN scales folded into weights
    bn2_shift = chan[:, 11:12]

    # ---------------- attent1: SqueezeExcite(Cin) ----------------
    a1 = _squeeze_excite(x, seg_rows, inv_hw, se1_ctab_ref[...], se1_vtab_ref[...])

    # ------- conv1: 3x3 (Cin->Cout, no bias, BN1 scale pre-folded) -------
    _build_patch(a1, masks_ref, patch_ref, Cin, W, LB)
    y1 = jnp.dot(conv1_w_ref[...], patch_ref[pl.ds(0, 9 * Cin), :],
                 preferred_element_type=jnp.float32) + bn1_shift        # (Cout, LB)

    # EnBatchNorm2d tail: depthwise 3x3 (groups=Cout, bias) then ReLU (f32 VPU).
    dw = y1 * dw_w[:, _CENTER:_CENTER + 1]
    for k, (dy, dx) in enumerate(_TAPS):
        if k == _CENTER:
            continue
        off = dy * W + dx
        sv = pltpu.roll(y1, shift=(-off) % LB, axis=1) * masks_ref[pl.ds(k, 1), :]
        dw = dw + sv * dw_w[:, k:k + 1]
    h1 = jnp.maximum(dw + dw_b, 0.0)

    # ------- conv2: 3x3 (Cout->Cout, no bias, BN2 scale pre-folded) + ReLU -------
    _build_patch(h1, masks_ref, patch_ref, Cout, W, LB)
    y2 = jnp.dot(conv2_w_ref[...], patch_ref[pl.ds(0, 9 * Cout), :],
                 preferred_element_type=jnp.float32) + bn2_shift
    h2 = jnp.maximum(y2, 0.0)

    # ---------------- attent2: SqueezeExcite(Cout) ----------------
    a2 = _squeeze_excite(h2, seg_rows, inv_hw, se2_ctab_ref[...], se2_vtab_ref[...])

    out_ref[...] = a2.astype(out_ref.dtype)


# ----------------------------- host-side helpers -----------------------------

def _make_masks(H, W, B):
    """(9, B*H*W) f32 tap validity masks (zero padding at image borders; the
    same lanes also absorb cross-image leakage of the full-block rolls)."""
    HW = H * W
    p = jnp.arange(HW, dtype=jnp.int32)
    yy, xx = p // W, p % W
    rows = []
    for dy, dx in _TAPS:
        m = jnp.ones((HW,), jnp.float32)
        if dy == -1:
            m = m * (yy >= 1)
        elif dy == 1:
            m = m * (yy < H - 1)
        if dx == -1:
            m = m * (xx >= 1)
        elif dx == 1:
            m = m * (xx < W - 1)
        rows.append(m)
    masks = jnp.stack(rows, axis=0).astype(jnp.float32)       # (9, HW)
    return jnp.tile(masks, (1, B))                            # (9, B*HW)


def _make_seg(HW, B):
    """(B, B*HW) f32: seg[b, p] = 1 iff lane p belongs to image b."""
    lane_img = jnp.arange(B * HW, dtype=jnp.int32) // HW
    return (lane_img[None, :] == jnp.arange(B, dtype=jnp.int32)[:, None]).astype(jnp.float32)


def _estimate_vmem_bytes(Cin, Cout, HW, B):
    LB = B * HW
    Cmax = max(Cin, Cout)
    io = 2 * (Cin + Cout) * LB * 4          # double-buffered input / output blocks
    aux = 2 * (16 + B) * LB * 4             # masks (row-padded) + seg, double-buffered
    patch = 9 * Cmax * LB * 2               # bf16 scratch patch
    live = 8 * Cmax * LB * 4                # headroom for live f32 temporaries
    return io + aux + patch + live


_VMEM_BUDGET = 24 * 1024 * 1024             # conservative: fits inside v7x's 64 MiB


def _pick_images_per_block(N, Cin, Cout, HW):
    if N <= 1:
        return 1
    b = max(1, 2048 // HW)                  # aim for ~2048-lane blocks
    b = min(b, (N + 1) // 2)                # keep >= 2 grid steps (v7x: 2 TensorCores)
    b = min(b, N)
    while b > 1 and _estimate_vmem_bytes(Cin, Cout, HW, b) > _VMEM_BUDGET:
        b -= 1
    return max(b, 1)


def pack_params(raw, eps=1e-5):
    """Fold BatchNorm running stats into the conv weights / per-channel shifts,
    pre-cast conv weights to bf16 and pack ~20 logical params into 7 operands."""
    bn1_scale = 1.0 / jnp.sqrt(raw["bn1_var"] + eps)                    # affine=False
    bn1_shift = -raw["bn1_mean"] * bn1_scale
    conv1_w = (raw["conv1_w"] * bn1_scale[:, None]).astype(jnp.bfloat16)

    bn2_scale = raw["bn2_gamma"] / jnp.sqrt(raw["bn2_var"] + eps)
    bn2_shift = raw["bn2_beta"] - raw["bn2_mean"] * bn2_scale
    conv2_w = (raw["conv2_w"] * bn2_scale[:, None]).astype(jnp.bfloat16)

    chan_tab = jnp.concatenate(
        [raw["dw_w"], raw["dw_b"][:, None], bn1_shift[:, None], bn2_shift[:, None]],
        axis=1).astype(jnp.float32)                                     # (Cout, 12)

    def pack_se(w1, b1, w2, b2, ws, bs):
        cr, c = w1.shape
        r = _round_up(cr, 8)
        w1t = jnp.zeros((c, r), jnp.float32).at[:, :cr].set(w1.T)
        w2p = jnp.zeros((c, r), jnp.float32).at[:, :cr].set(w2)
        ctab = jnp.concatenate([w1t, w2p, b2[:, None]], axis=1)         # (C, 2R+1)
        b1p = jnp.zeros((1, r), jnp.float32).at[0, :cr].set(b1)
        vtab = jnp.concatenate([b1p, ws[None, :], bs.reshape(1, 1)], axis=1)  # (1, R+C+1)
        return ctab, vtab

    se1_ctab, se1_vtab = pack_se(raw["se1_w1"], raw["se1_b1"], raw["se1_w2"],
                                 raw["se1_b2"], raw["se1_ws"], raw["se1_bs"])
    se2_ctab, se2_vtab = pack_se(raw["se2_w1"], raw["se2_b1"], raw["se2_w2"],
                                 raw["se2_b2"], raw["se2_ws"], raw["se2_bs"])

    return [conv1_w, conv2_w, chan_tab, se1_ctab, se1_vtab, se2_ctab, se2_vtab]


def res_decode(xs, packed_params, images_per_block=None):
    """xs: list of NCHW arrays (concatenated on channel dim, like torch.cat(x, 1)).
    packed_params: output of pack_params().  Returns the NCHW ResDecode output."""
    x = jnp.concatenate(list(xs), axis=1)                     # (N, Cin, H, W)
    N, Cin, H, W = x.shape
    HW = H * W
    conv1_w, conv2_w, chan_tab, se1_ctab, se1_vtab, se2_ctab, se2_vtab = packed_params
    Cout = conv1_w.shape[0]

    B = images_per_block or _pick_images_per_block(N, Cin, Cout, HW)
    G = pl.cdiv(N, B)
    Npad = G * B
    LB = B * HW

    # (C, images*HW) working layout: channels on sublanes, per-image flattened
    # spatial stacked on lanes -> lane-dense DMAs, large matmul N dimension.
    xk = jnp.transpose(x.astype(jnp.float32).reshape(N, Cin, HW), (1, 0, 2))
    if Npad != N:
        xk = jnp.pad(xk, ((0, 0), (0, Npad - N), (0, 0)))
    xk = xk.reshape(Cin, Npad * HW)

    masks = _make_masks(H, W, B)                              # (9, LB)
    seg = _make_seg(HW, B)                                    # (B, LB)

    full2d = lambda g: (0, 0)
    in_specs = [
        pl.BlockSpec((Cin, LB), lambda g: (0, g)),
        pl.BlockSpec(masks.shape, full2d),
        pl.BlockSpec(seg.shape, full2d),
        pl.BlockSpec(conv1_w.shape, full2d),
        pl.BlockSpec(conv2_w.shape, full2d),
        pl.BlockSpec(chan_tab.shape, full2d),
        pl.BlockSpec(se1_ctab.shape, full2d),
        pl.BlockSpec(se1_vtab.shape, full2d),
        pl.BlockSpec(se2_ctab.shape, full2d),
        pl.BlockSpec(se2_vtab.shape, full2d),
    ]

    out = pl.pallas_call(
        functools.partial(resdecode_kernel, H=H, W=W, B=B),
        out_shape=jax.ShapeDtypeStruct((Cout, Npad * HW), jnp.float32),
        grid_spec=pltpu.PrefetchScalarGridSpec(
            num_scalar_prefetch=0,
            grid=(G,),
            in_specs=in_specs,
            out_specs=pl.BlockSpec((Cout, LB), lambda g: (0, g)),
            scratch_shapes=[pltpu.VMEM((9 * max(Cin, Cout), LB), jnp.bfloat16)],
        ),
        compiler_params=pltpu.CompilerParams(
            dimension_semantics=("parallel",),   # image blocks are independent
            vmem_limit_bytes=48 * 1024 * 1024,   # explicit headroom, < v7x's 64 MiB
        ),
    )(xk, masks, seg, conv1_w, conv2_w, chan_tab,
      se1_ctab, se1_vtab, se2_ctab, se2_vtab)

    out = out.reshape(Cout, Npad, HW)[:, :N, :]
    return jnp.transpose(out, (1, 0, 2)).reshape(N, Cout, H, W)


def init_raw_params(key, cin, cout, reduction=16):
    """Deterministic synthetic parameters in torch-equivalent layouts.

    conv*_w are im2col-packed: conv1_w[co, k*cin + ci] == torch_w[co, ci, ky, kx]
    with tap index k = 3*ky + kx; dw_w[c, k] == torch_dw[c, 0, ky, kx].  The SE
    1x1 convs use their natural (out, in) matrix layouts.  BatchNorm running
    stats stay explicit here and are folded by pack_params()."""
    cr1 = max(cin // reduction, 1)
    cr2 = max(cout // reduction, 1)
    keys = iter(jax.random.split(key, 32))

    def nrm(shape, scale=0.1):
        return scale * jax.random.normal(next(keys), shape, jnp.float32)

    def uni(shape, lo, hi):
        return jax.random.uniform(next(keys), shape, jnp.float32, lo, hi)

    return dict(
        se1_w1=nrm((cr1, cin)), se1_b1=nrm((cr1,)),
        se1_w2=nrm((cin, cr1)), se1_b2=nrm((cin,)),
        se1_ws=nrm((cin,)), se1_bs=nrm((1,)),
        conv1_w=nrm((cout, 9 * cin)),
        bn1_mean=nrm((cout,)), bn1_var=uni((cout,), 0.5, 1.5),
        dw_w=nrm((cout, 9)), dw_b=nrm((cout,)),
        conv2_w=nrm((cout, 9 * cout)),
        bn2_mean=nrm((cout,)), bn2_var=uni((cout,), 0.5, 1.5),
        bn2_gamma=uni((cout,), 0.8, 1.2), bn2_beta=nrm((cout,)),
        se2_w1=nrm((cr2, cout)), se2_b1=nrm((cr2,)),
        se2_w2=nrm((cout, cr2)), se2_b2=nrm((cout,)),
        se2_ws=nrm((cout,)), se2_bs=nrm((1,)),
    )


if __name__ == "__main__":
    key = jax.random.PRNGKey(0)
    kx1, kx2, kp = jax.random.split(key, 3)

    N, H, W = 4, 16, 16
    c_a, c_b = 16, 16                 # two decoder feature maps to concatenate
    Cin, Cout = c_a + c_b, 32         # ResDecode(in_channel=32, out_channel=32)

    xa = jax.random.normal(kx1, (N, c_a, H, W), jnp.float32)   # NCHW, like PyTorch
    xb = jax.random.normal(kx2, (N, c_b, H, W), jnp.float32)

    raw = init_raw_params(kp, Cin, Cout)
    params = pack_params(raw)

    out = res_decode([xa, xb], params)
    out = jax.block_until_ready(out)
    assert out.shape == (N, Cout, H, W), out.shape
    print("KERNEL_OK")
</pallas_src>

<mosaic_0001>
module attributes {stable_mosaic.version = 11 : i64} {
  func.func @resdecode_kernel(%arg0: i32, %arg1: memref<32x512xf32, #tpu.memory_space<vmem>>, %arg2: memref<9x512xf32, #tpu.memory_space<vmem>>, %arg3: memref<2x512xf32, #tpu.memory_space<vmem>>, %arg4: memref<32x288xbf16, #tpu.memory_space<vmem>>, %arg5: memref<32x288xbf16, #tpu.memory_space<vmem>>, %arg6: memref<32x12xf32, #tpu.memory_space<vmem>>, %arg7: memref<32x17xf32, #tpu.memory_space<vmem>>, %arg8: memref<1x41xf32, #tpu.memory_space<vmem>>, %arg9: memref<32x17xf32, #tpu.memory_space<vmem>>, %arg10: memref<1x41xf32, #tpu.memory_space<vmem>>, %arg11: memref<32x512xf32, #tpu.memory_space<vmem>>, %arg12: memref<288x512xbf16, #tpu.memory_space<vmem>>) attributes {dimension_semantics = [#tpu.dimension_semantics<parallel>], iteration_bounds = array<i64: 2>, scalar_prefetch = 0 : i64, scratch_operands = 1 : i64, tpu.core_type = #tpu.core_type<tc>, window_params = [{transform_indices = @transform_0, window_bounds = array<i64: 32, 512>}, {pipeline_mode = #tpu.pipeline_mode<synchronous>, transform_indices = @transform_1, window_bounds = array<i64: 9, 512>}, {pipeline_mode = #tpu.pipeline_mode<synchronous>, transform_indices = @transform_2, window_bounds = array<i64: 2, 512>}, {pipeline_mode = #tpu.pipeline_mode<synchronous>, transform_indices = @transform_3, window_bounds = array<i64: 32, 288>}, {pipeline_mode = #tpu.pipeline_mode<synchronous>, transform_indices = @transform_4, window_bounds = array<i64: 32, 288>}, {pipeline_mode = #tpu.pipeline_mode<synchronous>, transform_indices = @transform_5, window_bounds = array<i64: 32, 12>}, {pipeline_mode = #tpu.pipeline_mode<synchronous>, transform_indices = @transform_6, window_bounds = array<i64: 32, 17>}, {pipeline_mode = #tpu.pipeline_mode<synchronous>, transform_indices = @transform_7, window_bounds = array<i64: 1, 41>}, {pipeline_mode = #tpu.pipeline_mode<synchronous>, transform_indices = @transform_8, window_bounds = array<i64: 32, 17>}, {pipeline_mode = #tpu.pipeline_mode<synchronous>, transform_indices = @transform_9, window_bounds = array<i64: 1, 41>}, {transform_indices = @transform_10, window_bounds = array<i64: 32, 512>}]} {
    %c0 = arith.constant 0 : index
    %c0_0 = arith.constant 0 : index
    %0 = vector.load %arg1[%c0, %c0_0] : memref<32x512xf32, #tpu.memory_space<vmem>>, vector<32x512xf32>
    %c0_1 = arith.constant 0 : index
    %c0_2 = arith.constant 0 : index
    %1 = vector.load %arg3[%c0_1, %c0_2] : memref<2x512xf32, #tpu.memory_space<vmem>>, vector<2x512xf32>
    %2 = vector.extract_strided_slice %1 {offsets = [0, 0], sizes = [1, 512], strides = [1, 1]} : vector<2x512xf32> to vector<1x512xf32>
    %3 = vector.extract_strided_slice %1 {offsets = [1, 0], sizes = [1, 512], strides = [1, 1]} : vector<2x512xf32> to vector<1x512xf32>
    %c0_3 = arith.constant 0 : index
    %c0_4 = arith.constant 0 : index
    %4 = vector.load %arg6[%c0_3, %c0_4] : memref<32x12xf32, #tpu.memory_space<vmem>>, vector<32x12xf32>
    %5 = vector.extract_strided_slice %4 {offsets = [0, 0], sizes = [32, 9], strides = [1, 1]} : vector<32x12xf32> to vector<32x9xf32>
    %6 = vector.extract_strided_slice %4 {offsets = [0, 9], sizes = [32, 1], strides = [1, 1]} : vector<32x12xf32> to vector<32x1xf32>
    %7 = vector.extract_strided_slice %4 {offsets = [0, 10], sizes = [32, 1], strides = [1, 1]} : vector<32x12xf32> to vector<32x1xf32>
    %8 = vector.extract_strided_slice %4 {offsets = [0, 11], sizes = [32, 1], strides = [1, 1]} : vector<32x12xf32> to vector<32x1xf32>
    %c0_5 = arith.constant 0 : index
    %c0_6 = arith.constant 0 : index
    %9 = vector.load %arg7[%c0_5, %c0_6] : memref<32x17xf32, #tpu.memory_space<vmem>>, vector<32x17xf32>
    %c0_7 = arith.constant 0 : index
    %c0_8 = arith.constant 0 : index
    %10 = vector.load %arg8[%c0_7, %c0_8] : memref<1x41xf32, #tpu.memory_space<vmem>>, vector<1x41xf32>
    %11 = vector.extract_strided_slice %9 {offsets = [0, 0], sizes = [32, 8], strides = [1, 1]} : vector<32x17xf32> to vector<32x8xf32>
    %12 = vector.extract_strided_slice %9 {offsets = [0, 8], sizes = [32, 8], strides = [1, 1]} : vector<32x17xf32> to vector<32x8xf32>
    %13 = vector.extract_strided_slice %9 {offsets = [0, 16], sizes = [32, 1], strides = [1, 1]} : vector<32x17xf32> to vector<32x1xf32>
    %14 = vector.extract_strided_slice %10 {offsets = [0, 0], sizes = [1, 8], strides = [1, 1]} : vector<1x41xf32> to vector<1x8xf32>
    %15 = vector.extract_strided_slice %10 {offsets = [0, 8], sizes = [1, 32], strides = [1, 1]} : vector<1x41xf32> to vector<1x32xf32>
    %16 = vector.extract_strided_slice %10 {offsets = [0, 40], sizes = [1, 1], strides = [1, 1]} : vector<1x41xf32> to vector<1x1xf32>
    %cst = arith.constant dense<0.000000e+00> : vector<1x512xf32>
    %17 = tpu.matmul %15, %0, %cst {dimension_numbers = #tpu.dot_dimension_numbers<[1], [0], [0], [1], [0, 0, 1, 1], [], []>} : vector<1x32xf32>, vector<32x512xf32>, vector<1x512xf32> -> vector<1x512xf32>
    %18 = vector.broadcast %16 : vector<1x1xf32> to vector<1x512xf32>
    %19 = arith.addf %17, %18 : vector<1x512xf32>
    %cst_9 = arith.constant 0.000000e+00 : f32
    %20 = vector.broadcast %cst_9 : f32 to vector<1x512xf32>
    %21 = arith.subf %20, %19 : vector<1x512xf32>
    %22 = math.exp %21 : vector<1x512xf32>
    %cst_10 = arith.constant 1.000000e+00 : f32
    %23 = vector.broadcast %cst_10 : f32 to vector<1x512xf32>
    %24 = arith.addf %23, %22 : vector<1x512xf32>
    %cst_11 = arith.constant 1.000000e+00 : f32
    %25 = vector.broadcast %cst_11 : f32 to vector<1x512xf32>
    %26 = arith.divf %25, %24 : vector<1x512xf32>
    %27 = vector.broadcast %2 : vector<1x512xf32> to vector<32x512xf32>
    %28 = arith.mulf %0, %27 : vector<32x512xf32>
    %cst_12 = arith.constant dense<0.000000e+00> : vector<32xf32>
    %29 = vector.multi_reduction <add>, %28, %cst_12 [1] : vector<32x512xf32> to vector<32xf32>
    %30 = vector.shape_cast %29 : vector<32xf32> to vector<32x1xf32>
    %cst_13 = arith.constant 3.906250e-03 : f32
    %31 = vector.broadcast %cst_13 : f32 to vector<32x1xf32>
    %32 = arith.mulf %30, %31 : vector<32x1xf32>
    %33 = vector.broadcast %32 : vector<32x1xf32> to vector<32x8xf32>
    %34 = arith.mulf %11, %33 : vector<32x8xf32>
    %cst_14 = arith.constant dense<0.000000e+00> : vector<8xf32>
    %35 = vector.multi_reduction <add>, %34, %cst_14 [0] : vector<32x8xf32> to vector<8xf32>
    %36 = vector.shape_cast %35 : vector<8xf32> to vector<1x8xf32>
    %37 = arith.addf %36, %14 : vector<1x8xf32>
    %cst_15 = arith.constant 0.000000e+00 : f32
    %38 = vector.broadcast %cst_15 : f32 to vector<1x8xf32>
    %39 = arith.maximumf %37, %38 : vector<1x8xf32>
    %40 = vector.broadcast %39 : vector<1x8xf32> to vector<32x8xf32>
    %41 = arith.mulf %12, %40 : vector<32x8xf32>
    %cst_16 = arith.constant dense<0.000000e+00> : vector<32xf32>
    %42 = vector.multi_reduction <add>, %41, %cst_16 [1] : vector<32x8xf32> to vector<32xf32>
    %43 = vector.shape_cast %42 : vector<32xf32> to vector<32x1xf32>
    %44 = arith.addf %43, %13 : vector<32x1xf32>
    %cst_17 = arith.constant 0.000000e+00 : f32
    %45 = vector.broadcast %cst_17 : f32 to vector<32x1xf32>
    %46 = arith.subf %45, %44 : vector<32x1xf32>
    %47 = math.exp %46 : vector<32x1xf32>
    %cst_18 = arith.constant 1.000000e+00 : f32
    %48 = vector.broadcast %cst_18 : f32 to vector<32x1xf32>
    %49 = arith.addf %48, %47 : vector<32x1xf32>
    %cst_19 = arith.constant 1.000000e+00 : f32
    %50 = vector.broadcast %cst_19 : f32 to vector<32x1xf32>
    %51 = arith.divf %50, %49 : vector<32x1xf32>
    %52 = vector.broadcast %51 : vector<32x1xf32> to vector<32x512xf32>
    %53 = vector.broadcast %2 : vector<1x512xf32> to vector<32x512xf32>
    %54 = arith.mulf %52, %53 : vector<32x512xf32>
    %55 = vector.broadcast %26 : vector<1x512xf32> to vector<32x512xf32>
    %56 = arith.addf %55, %54 : vector<32x512xf32>
    %57 = vector.broadcast %3 : vector<1x512xf32> to vector<32x512xf32>
    %58 = arith.mulf %0, %57 : vector<32x512xf32>
    %cst_20 = arith.constant dense<0.000000e+00> : vector<32xf32>
    %59 = vector.multi_reduction <add>, %58, %cst_20 [1] : vector<32x512xf32> to vector<32xf32>
    %60 = vector.shape_cast %59 : vector<32xf32> to vector<32x1xf32>
    %cst_21 = arith.constant 3.906250e-03 : f32
    %61 = vector.broadcast %cst_21 : f32 to vector<32x1xf32>
    %62 = arith.mulf %60, %61 : vector<32x1xf32>
    %63 = vector.broadcast %62 : vector<32x1xf32> to vector<32x8xf32>
    %64 = arith.mulf %11, %63 : vector<32x8xf32>
    %cst_22 = arith.constant dense<0.000000e+00> : vector<8xf32>
    %65 = vector.multi_reduction <add>, %64, %cst_22 [0] : vector<32x8xf32> to vector<8xf32>
    %66 = vector.shape_cast %65 : vector<8xf32> to vector<1x8xf32>
    %67 = arith.addf %66, %14 : vector<1x8xf32>
    %cst_23 = arith.constant 0.000000e+00 : f32
    %68 = vector.broadcast %cst_23 : f32 to vector<1x8xf32>
    %69 = arith.maximumf %67, %68 : vector<1x8xf32>
    %70 = vector.broadcast %69 : vector<1x8xf32> to vector<32x8xf32>
    %71 = arith.mulf %12, %70 : vector<32x8xf32>
    %cst_24 = arith.constant dense<0.000000e+00> : vector<32xf32>
    %72 = vector.multi_reduction <add>, %71, %cst_24 [1] : vector<32x8xf32> to vector<32xf32>
    %73 = vector.shape_cast %72 : vector<32xf32> to vector<32x1xf32>
    %74 = arith.addf %73, %13 : vector<32x1xf32>
    %cst_25 = arith.constant 0.000000e+00 : f32
    %75 = vector.broadcast %cst_25 : f32 to vector<32x1xf32>
    %76 = arith.subf %75, %74 : vector<32x1xf32>
    %77 = math.exp %76 : vector<32x1xf32>
    %cst_26 = arith.constant 1.000000e+00 : f32
    %78 = vector.broadcast %cst_26 : f32 to vector<32x1xf32>
    %79 = arith.addf %78, %77 : vector<32x1xf32>
    %cst_27 = arith.constant 1.000000e+00 : f32
    %80 = vector.broadcast %cst_27 : f32 to vector<32x1xf32>
    %81 = arith.divf %80, %79 : vector<32x1xf32>
    %82 = vector.broadcast %81 : vector<32x1xf32> to vector<32x512xf32>
    %83 = vector.broadcast %3 : vector<1x512xf32> to vector<32x512xf32>
    %84 = arith.mulf %82, %83 : vector<32x512xf32>
    %85 = arith.addf %56, %84 : vector<32x512xf32>
    %86 = arith.mulf %0, %85 : vector<32x512xf32>
    %c17_i32 = arith.constant 17 : i32
    %87 = tpu.dynamic_rotate %86 by %c17_i32 dim 1 : vector<32x512xf32>, i32 -> vector<32x512xf32>
    %c0_28 = arith.constant 0 : index
    %c0_29 = arith.constant 0 : index
    %88 = vector.load %arg2[%c0_28, %c0_29] : memref<9x512xf32, #tpu.memory_space<vmem>>, vector<1x512xf32>
    %89 = vector.broadcast %88 : vector<1x512xf32> to vector<32x512xf32>
    %90 = arith.mulf %87, %89 : vector<32x512xf32>
    %91 = arith.truncf %90 : vector<32x512xf32> to vector<32x512xbf16>
    %c0_30 = arith.constant 0 : index
    %c0_31 = arith.constant 0 : index
    %92 = vector.load %arg12[%c0_30, %c0_31] : memref<288x512xbf16, #tpu.memory_space<vmem>>, vector<32x512xbf16>
    tpu.vector_store %arg12[%c0_30, %c0_31], %91 {strides = array<i32>} : memref<288x512xbf16, #tpu.memory_space<vmem>>, vector<32x512xbf16>,
    %c16_i32 = arith.constant 16 : i32
    %93 = tpu.dynamic_rotate %86 by %c16_i32 dim 1 : vector<32x512xf32>, i32 -> vector<32x512xf32>
    %c1 = arith.constant 1 : index
    %c0_32 = arith.constant 0 : index
    %94 = vector.load %arg2[%c1, %c0_32] : memref<9x512xf32, #tpu.memory_space<vmem>>, vector<1x512xf32>
    %95 = vector.broadcast %94 : vector<1x512xf32> to vector<32x512xf32>
    %96 = arith.mulf %93, %95 : vector<32x512xf32>
    %97 = arith.truncf %96 : vector<32x512xf32> to vector<32x512xbf16>
    %c32 = arith.constant 32 : index
    %c0_33 = arith.constant 0 : index
    %98 = vector.load %arg12[%c32, %c0_33] : memref<288x512xbf16, #tpu.memory_space<vmem>>, vector<32x512xbf16>
    tpu.vector_store %arg12[%c32, %c0_33], %97 {strides = array<i32>} : memref<288x512xbf16, #tpu.memory_space<vmem>>, vector<32x512xbf16>,
    %c15_i32 = arith.constant 15 : i32
    %99 = tpu.dynamic_rotate %86 by %c15_i32 dim 1 : vector<32x512xf32>, i32 -> vector<32x512xf32>
    %c2 = arith.constant 2 : index
    %c0_34 = arith.constant 0 : index
    %100 = vector.load %arg2[%c2, %c0_34] : memref<9x512xf32, #tpu.memory_space<vmem>>, vector<1x512xf32>
    %101 = vector.broadcast %100 : vector<1x512xf32> to vector<32x512xf32>
    %102 = arith.mulf %99, %101 : vector<32x512xf32>
    %103 = arith.truncf %102 : vector<32x512xf32> to vector<32x512xbf16>
    %c64 = arith.constant 64 : index
    %c0_35 = arith.constant 0 : index
    %104 = vector.load %arg12[%c64, %c0_35] : memref<288x512xbf16, #tpu.memory_space<vmem>>, vector<32x512xbf16>
    tpu.vector_store %arg12[%c64, %c0_35], %103 {strides = array<i32>} : memref<288x512xbf16, #tpu.memory_space<vmem>>, vector<32x512xbf16>,
    %c1_i32 = arith.constant 1 : i32
    %105 = tpu.dynamic_rotate %86 by %c1_i32 dim 1 : vector<32x512xf32>, i32 -> vector<32x512xf32>
    %c3 = arith.constant 3 : index
    %c0_36 = arith.constant 0 : index
    %106 = vector.load %arg2[%c3, %c0_36] : memref<9x512xf32, #tpu.memory_space<vmem>>, vector<1x512xf32>
    %107 = vector.broadcast %106 : vector<1x512xf32> to vector<32x512xf32>
    %108 = arith.mulf %105, %107 : vector<32x512xf32>
    %109 = arith.truncf %108 : vector<32x512xf32> to vector<32x512xbf16>
    %c96 = arith.constant 96 : index
    %c0_37 = arith.constant 0 : index
    %110 = vector.load %arg12[%c96, %c0_37] : memref<288x512xbf16, #tpu.memory_space<vmem>>, vector<32x512xbf16>
    tpu.vector_store %arg12[%c96, %c0_37], %109 {strides = array<i32>} : memref<288x512xbf16, #tpu.memory_space<vmem>>, vector<32x512xbf16>,
    %111 = arith.truncf %86 : vector<32x512xf32> to vector<32x512xbf16>
    %c128 = arith.constant 128 : index
    %c0_38 = arith.constant 0 : index
    %112 = vector.load %arg12[%c128, %c0_38] : memref<288x512xbf16, #tpu.memory_space<vmem>>, vector<32x512xbf16>
    tpu.vector_store %arg12[%c128, %c0_38], %111 {strides = array<i32>} : memref<288x512xbf16, #tpu.memory_space<vmem>>, vector<32x512xbf16>,
    %c511_i32 = arith.constant 511 : i32
    %113 = tpu.dynamic_rotate %86 by %c511_i32 dim 1 : vector<32x512xf32>, i32 -> vector<32x512xf32>
    %c5 = arith.constant 5 : index
    %c0_39 = arith.constant 0 : index
    %114 = vector.load %arg2[%c5, %c0_39] : memref<9x512xf32, #tpu.memory_space<vmem>>, vector<1x512xf32>
    %115 = vector.broadcast %114 : vector<1x512xf32> to vector<32x512xf32>
    %116 = arith.mulf %113, %115 : vector<32x512xf32>
    %117 = arith.truncf %116 : vector<32x512xf32> to vector<32x512xbf16>
    %c160 = arith.constant 160 : index
    %c0_40 = arith.constant 0 : index
    %118 = vector.load %arg12[%c160, %c0_40] : memref<288x512xbf16, #tpu.memory_space<vmem>>, vector<32x512xbf16>
    tpu.vector_store %arg12[%c160, %c0_40], %117 {strides = array<i32>} : memref<288x512xbf16, #tpu.memory_space<vmem>>, vector<32x512xbf16>,
    %c497_i32 = arith.constant 497 : i32
    %119 = tpu.dynamic_rotate %86 by %c497_i32 dim 1 : vector<32x512xf32>, i32 -> vector<32x512xf32>
    %c6 = arith.constant 6 : index
    %c0_41 = arith.constant 0 : index
    %120 = vector.load %arg2[%c6, %c0_41] : memref<9x512xf32, #tpu.memory_space<vmem>>, vector<1x512xf32>
    %121 = vector.broadcast %120 : vector<1x512xf32> to vector<32x512xf32>
    %122 = arith.mulf %119, %121 : vector<32x512xf32>
    %123 = arith.truncf %122 : vector<32x512xf32> to vector<32x512xbf16>
    %c192 = arith.constant 192 : index
    %c0_42 = arith.constant 0 : index
    %124 = vector.load %arg12[%c192, %c0_42] : memref<288x512xbf16, #tpu.memory_space<vmem>>, vector<32x512xbf16>
    tpu.vector_store %arg12[%c192, %c0_42], %123 {strides = array<i32>} : memref<288x512xbf16, #tpu.memory_space<vmem>>, vector<32x512xbf16>,
    %c496_i32 = arith.constant 496 : i32
    %125 = tpu.dynamic_rotate %86 by %c496_i32 dim 1 : vector<32x512xf32>, i32 -> vector<32x512xf32>
    %c7 = arith.constant 7 : index
    %c0_43 = arith.constant 0 : index
    %126 = vector.load %arg2[%c7, %c0_43] : memref<9x512xf32, #tpu.memory_space<vmem>>, vector<1x512xf32>
    %127 = vector.broadcast %126 : vector<1x512xf32> to vector<32x512xf32>
    %128 = arith.mulf %125, %127 : vector<32x512xf32>
    %129 = arith.truncf %128 : vector<32x512xf32> to vector<32x512xbf16>
    %c224 = arith.constant 224 : index
    %c0_44 = arith.constant 0 : index
    %130 = vector.load %arg12[%c224, %c0_44] : memref<288x512xbf16, #tpu.memory_space<vmem>>, vector<32x512xbf16>
    tpu.vector_store %arg12[%c224, %c0_44], %129 {strides = array<i32>} : memref<288x512xbf16, #tpu.memory_space<vmem>>, vector<32x512xbf16>,
    %c495_i32 = arith.constant 495 : i32
    %131 = tpu.dynamic_rotate %86 by %c495_i32 dim 1 : vector<32x512xf32>, i32 -> vector<32x512xf32>
    %c8 = arith.constant 8 : index
    %c0_45 = arith.constant 0 : index
    %132 = vector.load %arg2[%c8, %c0_45] : memref<9x512xf32, #tpu.memory_space<vmem>>, vector<1x512xf32>
    %133 = vector.broadcast %132 : vector<1x512xf32> to vector<32x512xf32>
    %134 = arith.mulf %131, %133 : vector<32x512xf32>
    %135 = arith.truncf %134 : vector<32x512xf32> to vector<32x512xbf16>
    %c256 = arith.constant 256 : index
    %c0_46 = arith.constant 0 : index
    %136 = vector.load %arg12[%c256, %c0_46] : memref<288x512xbf16, #tpu.memory_space<vmem>>, vector<32x512xbf16>
    tpu.vector_store %arg12[%c256, %c0_46], %135 {strides = array<i32>} : memref<288x512xbf16, #tpu.memory_space<vmem>>, vector<32x512xbf16>,
    %c0_47 = arith.constant 0 : index
    %c0_48 = arith.constant 0 : index
    %137 = vector.load %arg4[%c0_47, %c0_48] : memref<32x288xbf16, #tpu.memory_space<vmem>>, vector<32x288xbf16>
    %c0_49 = arith.constant 0 : index
    %c0_50 = arith.constant 0 : index
    %138 = vector.load %arg12[%c0_49, %c0_50] : memref<288x512xbf16, #tpu.memory_space<vmem>>, vector<288x512xbf16>
    %cst_51 = arith.constant dense<0.000000e+00> : vector<32x512xf32>
    %139 = tpu.matmul %137, %138, %cst_51 {dimension_numbers = #tpu.dot_dimension_numbers<[1], [0], [0], [1], [0, 0, 1, 1], [], []>} : vector<32x288xbf16>, vector<288x512xbf16>, vector<32x512xf32> -> vector<32x512xf32>
    %140 = vector.broadcast %7 : vector<32x1xf32> to vector<32x512xf32>
    %141 = arith.addf %139, %140 : vector<32x512xf32>
    %142 = vector.extract_strided_slice %5 {offsets = [0, 4], sizes = [32, 1], strides = [1, 1]} : vector<32x9xf32> to vector<32x1xf32>
    %143 = vector.broadcast %142 : vector<32x1xf32> to vector<32x512xf32>
    %144 = arith.mulf %141, %143 : vector<32x512xf32>
    %c17_i32_52 = arith.constant 17 : i32
    %145 = tpu.dynamic_rotate %141 by %c17_i32_52 dim 1 : vector<32x512xf32>, i32 -> vector<32x512xf32>
    %c0_53 = arith.constant 0 : index
    %c0_54 = arith.constant 0 : index
    %146 = vector.load %arg2[%c0_53, %c0_54] : memref<9x512xf32, #tpu.memory_space<vmem>>, vector<1x512xf32>
    %147 = vector.broadcast %146 : vector<1x512xf32> to vector<32x512xf32>
    %148 = arith.mulf %145, %147 : vector<32x512xf32>
    %149 = vector.extract_strided_slice %5 {offsets = [0, 0], sizes = [32, 1], strides = [1, 1]} : vector<32x9xf32> to vector<32x1xf32>
    %150 = vector.broadcast %149 : vector<32x1xf32> to vector<32x512xf32>
    %151 = arith.mulf %148, %150 : vector<32x512xf32>
    %152 = arith.addf %144, %151 : vector<32x512xf32>
    %c16_i32_55 = arith.constant 16 : i32
    %153 = tpu.dynamic_rotate %141 by %c16_i32_55 dim 1 : vector<32x512xf32>, i32 -> vector<32x512xf32>
    %c1_56 = arith.constant 1 : index
    %c0_57 = arith.constant 0 : index
    %154 = vector.load %arg2[%c1_56, %c0_57] : memref<9x512xf32, #tpu.memory_space<vmem>>, vector<1x512xf32>
    %155 = vector.broadcast %154 : vector<1x512xf32> to vector<32x512xf32>
    %156 = arith.mulf %153, %155 : vector<32x512xf32>
    %157 = vector.extract_strided_slice %5 {offsets = [0, 1], sizes = [32, 1], strides = [1, 1]} : vector<32x9xf32> to vector<32x1xf32>
    %158 = vector.broadcast %157 : vector<32x1xf32> to vector<32x512xf32>
    %159 = arith.mulf %156, %158 : vector<32x512xf32>
    %160 = arith.addf %152, %159 : vector<32x512xf32>
    %c15_i32_58 = arith.constant 15 : i32
    %161 = tpu.dynamic_rotate %141 by %c15_i32_58 dim 1 : vector<32x512xf32>, i32 -> vector<32x512xf32>
    %c2_59 = arith.constant 2 : index
    %c0_60 = arith.constant 0 : index
    %162 = vector.load %arg2[%c2_59, %c0_60] : memref<9x512xf32, #tpu.memory_space<vmem>>, vector<1x512xf32>
    %163 = vector.broadcast %162 : vector<1x512xf32> to vector<32x512xf32>
    %164 = arith.mulf %161, %163 : vector<32x512xf32>
    %165 = vector.extract_strided_slice %5 {offsets = [0, 2], sizes = [32, 1], strides = [1, 1]} : vector<32x9xf32> to vector<32x1xf32>
    %166 = vector.broadcast %165 : vector<32x1xf32> to vector<32x512xf32>
    %167 = arith.mulf %164, %166 : vector<32x512xf32>
    %168 = arith.addf %160, %167 : vector<32x512xf32>
    %c1_i32_61 = arith.constant 1 : i32
    %169 = tpu.dynamic_rotate %141 by %c1_i32_61 dim 1 : vector<32x512xf32>, i32 -> vector<32x512xf32>
    %c3_62 = arith.constant 3 : index
    %c0_63 = arith.constant 0 : index
    %170 = vector.load %arg2[%c3_62, %c0_63] : memref<9x512xf32, #tpu.memory_space<vmem>>, vector<1x512xf32>
    %171 = vector.broadcast %170 : vector<1x512xf32> to vector<32x512xf32>
    %172 = arith.mulf %169, %171 : vector<32x512xf32>
    %173 = vector.extract_strided_slice %5 {offsets = [0, 3], sizes = [32, 1], strides = [1, 1]} : vector<32x9xf32> to vector<32x1xf32>
    %174 = vector.broadcast %173 : vector<32x1xf32> to vector<32x512xf32>
    %175 = arith.mulf %172, %174 : vector<32x512xf32>
    %176 = arith.addf %168, %175 : vector<32x512xf32>
    %c511_i32_64 = arith.constant 511 : i32
    %177 = tpu.dynamic_rotate %141 by %c511_i32_64 dim 1 : vector<32x512xf32>, i32 -> vector<32x512xf32>
    %c5_65 = arith.constant 5 : index
    %c0_66 = arith.constant 0 : index
    %178 = vector.load %arg2[%c5_65, %c0_66] : memref<9x512xf32, #tpu.memory_space<vmem>>, vector<1x512xf32>
    %179 = vector.broadcast %178 : vector<1x512xf32> to vector<32x512xf32>
    %180 = arith.mulf %177, %179 : vector<32x512xf32>
    %181 = vector.extract_strided_slice %5 {offsets = [0, 5], sizes = [32, 1], strides = [1, 1]} : vector<32x9xf32> to vector<32x1xf32>
    %182 = vector.broadcast %181 : vector<32x1xf32> to vector<32x512xf32>
    %183 = arith.mulf %180, %182 : vector<32x512xf32>
    %184 = arith.addf %176, %183 : vector<32x512xf32>
    %c497_i32_67 = arith.constant 497 : i32
    %185 = tpu.dynamic_rotate %141 by %c497_i32_67 dim 1 : vector<32x512xf32>, i32 -> vector<32x512xf32>
    %c6_68 = arith.constant 6 : index
    %c0_69 = arith.constant 0 : index
    %186 = vector.load %arg2[%c6_68, %c0_69] : memref<9x512xf32, #tpu.memory_space<vmem>>, vector<1x512xf32>
    %187 = vector.broadcast %186 : vector<1x512xf32> to vector<32x512xf32>
    %188 = arith.mulf %185, %187 : vector<32x512xf32>
    %189 = vector.extract_strided_slice %5 {offsets = [0, 6], sizes = [32, 1], strides = [1, 1]} : vector<32x9xf32> to vector<32x1xf32>
    %190 = vector.broadcast %189 : vector<32x1xf32> to vector<32x512xf32>
    %191 = arith.mulf %188, %190 : vector<32x512xf32>
    %192 = arith.addf %184, %191 : vector<32x512xf32>
    %c496_i32_70 = arith.constant 496 : i32
    %193 = tpu.dynamic_rotate %141 by %c496_i32_70 dim 1 : vector<32x512xf32>, i32 -> vector<32x512xf32>
    %c7_71 = arith.constant 7 : index
    %c0_72 = arith.constant 0 : index
    %194 = vector.load %arg2[%c7_71, %c0_72] : memref<9x512xf32, #tpu.memory_space<vmem>>, vector<1x512xf32>
    %195 = vector.broadcast %194 : vector<1x512xf32> to vector<32x512xf32>
    %196 = arith.mulf %193, %195 : vector<32x512xf32>
    %197 = vector.extract_strided_slice %5 {offsets = [0, 7], sizes = [32, 1], strides = [1, 1]} : vector<32x9xf32> to vector<32x1xf32>
    %198 = vector.broadcast %197 : vector<32x1xf32> to vector<32x512xf32>
    %199 = arith.mulf %196, %198 : vector<32x512xf32>
    %200 = arith.addf %192, %199 : vector<32x512xf32>
    %c495_i32_73 = arith.constant 495 : i32
    %201 = tpu.dynamic_rotate %141 by %c495_i32_73 dim 1 : vector<32x512xf32>, i32 -> vector<32x512xf32>
    %c8_74 = arith.constant 8 : index
    %c0_75 = arith.constant 0 : index
    %202 = vector.load %arg2[%c8_74, %c0_75] : memref<9x512xf32, #tpu.memory_space<vmem>>, vector<1x512xf32>
    %203 = vector.broadcast %202 : vector<1x512xf32> to vector<32x512xf32>
    %204 = arith.mulf %201, %203 : vector<32x512xf32>
    %205 = vector.extract_strided_slice %5 {offsets = [0, 8], sizes = [32, 1], strides = [1, 1]} : vector<32x9xf32> to vector<32x1xf32>
    %206 = vector.broadcast %205 : vector<32x1xf32> to vector<32x512xf32>
    %207 = arith.mulf %204, %206 : vector<32x512xf32>
    %208 = arith.addf %200, %207 : vector<32x512xf32>
    %209 = vector.broadcast %6 : vector<32x1xf32> to vector<32x512xf32>
    %210 = arith.addf %208, %209 : vector<32x512xf32>
    %cst_76 = arith.constant 0.000000e+00 : f32
    %211 = vector.broadcast %cst_76 : f32 to vector<32x512xf32>
    %212 = arith.maximumf %210, %211 : vector<32x512xf32>
    %c17_i32_77 = arith.constant 17 : i32
    %213 = tpu.dynamic_rotate %212 by %c17_i32_77 dim 1 : vector<32x512xf32>, i32 -> vector<32x512xf32>
    %c0_78 = arith.constant 0 : index
    %c0_79 = arith.constant 0 : index
    %214 = vector.load %arg2[%c0_78, %c0_79] : memref<9x512xf32, #tpu.memory_space<vmem>>, vector<1x512xf32>
    %215 = vector.broadcast %214 : vector<1x512xf32> to vector<32x512xf32>
    %216 = arith.mulf %213, %215 : vector<32x512xf32>
    %217 = arith.truncf %216 : vector<32x512xf32> to vector<32x512xbf16>
    %c0_80 = arith.constant 0 : index
    %c0_81 = arith.constant 0 : index
    %218 = vector.load %arg12[%c0_80, %c0_81] : memref<288x512xbf16, #tpu.memory_space<vmem>>, vector<32x512xbf16>
    tpu.vector_store %arg12[%c0_80, %c0_81], %217 {strides = array<i32>} : memref<288x512xbf16, #tpu.memory_space<vmem>>, vector<32x512xbf16>,
    %c16_i32_82 = arith.constant 16 : i32
    %219 = tpu.dynamic_rotate %212 by %c16_i32_82 dim 1 : vector<32x512xf32>, i32 -> vector<32x512xf32>
    %c1_83 = arith.constant 1 : index
    %c0_84 = arith.constant 0 : index
    %220 = vector.load %arg2[%c1_83, %c0_84] : memref<9x512xf32, #tpu.memory_space<vmem>>, vector<1x512xf32>
    %221 = vector.broadcast %220 : vector<1x512xf32> to vector<32x512xf32>
    %222 = arith.mulf %219, %221 : vector<32x512xf32>
    %223 = arith.truncf %222 : vector<32x512xf32> to vector<32x512xbf16>
    %c32_85 = arith.constant 32 : index
    %c0_86 = arith.constant 0 : index
    %224 = vector.load %arg12[%c32_85, %c0_86] : memref<288x512xbf16, #tpu.memory_space<vmem>>, vector<32x512xbf16>
    tpu.vector_store %arg12[%c32_85, %c0_86], %223 {strides = array<i32>} : memref<288x512xbf16, #tpu.memory_space<vmem>>, vector<32x512xbf16>,
    %c15_i32_87 = arith.constant 15 : i32
    %225 = tpu.dynamic_rotate %212 by %c15_i32_87 dim 1 : vector<32x512xf32>, i32 -> vector<32x512xf32>
    %c2_88 = arith.constant 2 : index
    %c0_89 = arith.constant 0 : index
    %226 = vector.load %arg2[%c2_88, %c0_89] : memref<9x512xf32, #tpu.memory_space<vmem>>, vector<1x512xf32>
    %227 = vector.broadcast %226 : vector<1x512xf32> to vector<32x512xf32>
    %228 = arith.mulf %225, %227 : vector<32x512xf32>
    %229 = arith.truncf %228 : vector<32x512xf32> to vector<32x512xbf16>
    %c64_90 = arith.constant 64 : index
    %c0_91 = arith.constant 0 : index
    %230 = vector.load %arg12[%c64_90, %c0_91] : memref<288x512xbf16, #tpu.memory_space<vmem>>, vector<32x512xbf16>
    tpu.vector_store %arg12[%c64_90, %c0_91], %229 {strides = array<i32>} : memref<288x512xbf16, #tpu.memory_space<vmem>>, vector<32x512xbf16>,
    %c1_i32_92 = arith.constant 1 : i32
    %231 = tpu.dynamic_rotate %212 by %c1_i32_92 dim 1 : vector<32x512xf32>, i32 -> vector<32x512xf32>
    %c3_93 = arith.constant 3 : index
    %c0_94 = arith.constant 0 : index
    %232 = vector.load %arg2[%c3_93, %c0_94] : memref<9x512xf32, #tpu.memory_space<vmem>>, vector<1x512xf32>
    %233 = vector.broadcast %232 : vector<1x512xf32> to vector<32x512xf32>
    %234 = arith.mulf %231, %233 : vector<32x512xf32>
    %235 = arith.truncf %234 : vector<32x512xf32> to vector<32x512xbf16>
    %c96_95 = arith.constant 96 : index
    %c0_96 = arith.constant 0 : index
    %236 = vector.load %arg12[%c96_95, %c0_96] : memref<288x512xbf16, #tpu.memory_space<vmem>>, vector<32x512xbf16>
    tpu.vector_store %arg12[%c96_95, %c0_96], %235 {strides = array<i32>} : memref<288x512xbf16, #tpu.memory_space<vmem>>, vector<32x512xbf16>,
    %237 = arith.truncf %212 : vector<32x512xf32> to vector<32x512xbf16>
    %c128_97 = arith.constant 128 : index
    %c0_98 = arith.constant 0 : index
    %238 = vector.load %arg12[%c128_97, %c0_98] : memref<288x512xbf16, #tpu.memory_space<vmem>>, vector<32x512xbf16>
    tpu.vector_store %arg12[%c128_97, %c0_98], %237 {strides = array<i32>} : memref<288x512xbf16, #tpu.memory_space<vmem>>, vector<32x512xbf16>,
    %c511_i32_99 = arith.constant 511 : i32
    %239 = tpu.dynamic_rotate %212 by %c511_i32_99 dim 1 : vector<32x512xf32>, i32 -> vector<32x512xf32>
    %c5_100 = arith.constant 5 : index
    %c0_101 = arith.constant 0 : index
    %240 = vector.load %arg2[%c5_100, %c0_101] : memref<9x512xf32, #tpu.memory_space<vmem>>, vector<1x512xf32>
    %241 = vector.broadcast %240 : vector<1x512xf32> to vector<32x512xf32>
    %242 = arith.mulf %239, %241 : vector<32x512xf32>
    %243 = arith.truncf %242 : vector<32x512xf32> to vector<32x512xbf16>
    %c160_102 = arith.constant 160 : index
    %c0_103 = arith.constant 0 : index
    %244 = vector.load %arg12[%c160_102, %c0_103] : memref<288x512xbf16, #tpu.memory_space<vmem>>, vector<32x512xbf16>
    tpu.vector_store %arg12[%c160_102, %c0_103], %243 {strides = array<i32>} : memref<288x512xbf16, #tpu.memory_space<vmem>>, vector<32x512xbf16>,
    %c497_i32_104 = arith.constant 497 : i32
    %245 = tpu.dynamic_rotate %212 by %c497_i32_104 dim 1 : vector<32x512xf32>, i32 -> vector<32x512xf32>
    %c6_105 = arith.constant 6 : index
    %c0_106 = arith.constant 0 : index
    %246 = vector.load %arg2[%c6_105, %c0_106] : memref<9x512xf32, #tpu.memory_space<vmem>>, vector<1x512xf32>
    %247 = vector.broadcast %246 : vector<1x512xf32> to vector<32x512xf32>
    %248 = arith.mulf %245, %247 : vector<32x512xf32>
    %249 = arith.truncf %248 : vector<32x512xf32> to vector<32x512xbf16>
    %c192_107 = arith.constant 192 : index
    %c0_108 = arith.constant 0 : index
    %250 = vector.load %arg12[%c192_107, %c0_108] : memref<288x512xbf16, #tpu.memory_space<vmem>>, vector<32x512xbf16>
    tpu.vector_store %arg12[%c192_107, %c0_108], %249 {strides = array<i32>} : memref<288x512xbf16, #tpu.memory_space<vmem>>, vector<32x512xbf16>,
    %c496_i32_109 = arith.constant 496 : i32
    %251 = tpu.dynamic_rotate %212 by %c496_i32_109 dim 1 : vector<32x512xf32>, i32 -> vector<32x512xf32>
    %c7_110 = arith.constant 7 : index
    %c0_111 = arith.constant 0 : index
    %252 = vector.load %arg2[%c7_110, %c0_111] : memref<9x512xf32, #tpu.memory_space<vmem>>, vector<1x512xf32>
    %253 = vector.broadcast %252 : vector<1x512xf32> to vector<32x512xf32>
    %254 = arith.mulf %251, %253 : vector<32x512xf32>
    %255 = arith.truncf %254 : vector<32x512xf32> to vector<32x512xbf16>
    %c224_112 = arith.constant 224 : index
    %c0_113 = arith.constant 0 : index
    %256 = vector.load %arg12[%c224_112, %c0_113] : memref<288x512xbf16, #tpu.memory_space<vmem>>, vector<32x512xbf16>
    tpu.vector_store %arg12[%c224_112, %c0_113], %255 {strides = array<i32>} : memref<288x512xbf16, #tpu.memory_space<vmem>>, vector<32x512xbf16>,
    %c495_i32_114 = arith.constant 495 : i32
    %257 = tpu.dynamic_rotate %212 by %c495_i32_114 dim 1 : vector<32x512xf32>, i32 -> vector<32x512xf32>
    %c8_115 = arith.constant 8 : index
    %c0_116 = arith.constant 0 : index
    %258 = vector.load %arg2[%c8_115, %c0_116] : memref<9x512xf32, #tpu.memory_space<vmem>>, vector<1x512xf32>
    %259 = vector.broadcast %258 : vector<1x512xf32> to vector<32x512xf32>
    %260 = arith.mulf %257, %259 : vector<32x512xf32>
    %261 = arith.truncf %260 : vector<32x512xf32> to vector<32x512xbf16>
    %c256_117 = arith.constant 256 : index
    %c0_118 = arith.constant 0 : index
    %262 = vector.load %arg12[%c256_117, %c0_118] : memref<288x512xbf16, #tpu.memory_space<vmem>>, vector<32x512xbf16>
    tpu.vector_store %arg12[%c256_117, %c0_118], %261 {strides = array<i32>} : memref<288x512xbf16, #tpu.memory_space<vmem>>, vector<32x512xbf16>,
    %c0_119 = arith.constant 0 : index
    %c0_120 = arith.constant 0 : index
    %263 = vector.load %arg5[%c0_119, %c0_120] : memref<32x288xbf16, #tpu.memory_space<vmem>>, vector<32x288xbf16>
    %c0_121 = arith.constant 0 : index
    %c0_122 = arith.constant 0 : index
    %264 = vector.load %arg12[%c0_121, %c0_122] : memref<288x512xbf16, #tpu.memory_space<vmem>>, vector<288x512xbf16>
    %cst_123 = arith.constant dense<0.000000e+00> : vector<32x512xf32>
    %265 = tpu.matmul %263, %264, %cst_123 {dimension_numbers = #tpu.dot_dimension_numbers<[1], [0], [0], [1], [0, 0, 1, 1], [], []>} : vector<32x288xbf16>, vector<288x512xbf16>, vector<32x512xf32> -> vector<32x512xf32>
    %266 = vector.broadcast %8 : vector<32x1xf32> to vector<32x512xf32>
    %267 = arith.addf %265, %266 : vector<32x512xf32>
    %cst_124 = arith.constant 0.000000e+00 : f32
    %268 = vector.broadcast %cst_124 : f32 to vector<32x512xf32>
    %269 = arith.maximumf %267, %268 : vector<32x512xf32>
    %c0_125 = arith.constant 0 : index
    %c0_126 = arith.constant 0 : index
    %270 = vector.load %arg9[%c0_125, %c0_126] : memref<32x17xf32, #tpu.memory_space<vmem>>, vector<32x17xf32>
    %c0_127 = arith.constant 0 : index
    %c0_128 = arith.constant 0 : index
    %271 = vector.load %arg10[%c0_127, %c0_128] : memref<1x41xf32, #tpu.memory_space<vmem>>, vector<1x41xf32>
    %272 = vector.extract_strided_slice %270 {offsets = [0, 0], sizes = [32, 8], strides = [1, 1]} : vector<32x17xf32> to vector<32x8xf32>
    %273 = vector.extract_strided_slice %270 {offsets = [0, 8], sizes = [32, 8], strides = [1, 1]} : vector<32x17xf32> to vector<32x8xf32>
    %274 = vector.extract_strided_slice %270 {offsets = [0, 16], sizes = [32, 1], strides = [1, 1]} : vector<32x17xf32> to vector<32x1xf32>
    %275 = vector.extract_strided_slice %271 {offsets = [0, 0], sizes = [1, 8], strides = [1, 1]} : vector<1x41xf32> to vector<1x8xf32>
    %276 = vector.extract_strided_slice %271 {offsets = [0, 8], sizes = [1, 32], strides = [1, 1]} : vector<1x41xf32> to vector<1x32xf32>
    %277 = vector.extract_strided_slice %271 {offsets = [0, 40], sizes = [1, 1], strides = [1, 1]} : vector<1x41xf32> to vector<1x1xf32>
    %cst_129 = arith.constant dense<0.000000e+00> : vector<1x512xf32>
    %278 = tpu.matmul %276, %269, %cst_129 {dimension_numbers = #tpu.dot_dimension_numbers<[1], [0], [0], [1], [0, 0, 1, 1], [], []>} : vector<1x32xf32>, vector<32x512xf32>, vector<1x512xf32> -> vector<1x512xf32>
    %279 = vector.broadcast %277 : vector<1x1xf32> to vector<1x512xf32>
    %280 = arith.addf %278, %279 : vector<1x512xf32>
    %cst_130 = arith.constant 0.000000e+00 : f32
    %281 = vector.broadcast %cst_130 : f32 to vector<1x512xf32>
    %282 = arith.subf %281, %280 : vector<1x512xf32>
    %283 = math.exp %282 : vector<1x512xf32>
    %cst_131 = arith.constant 1.000000e+00 : f32
    %284 = vector.broadcast %cst_131 : f32 to vector<1x512xf32>
    %285 = arith.addf %284, %283 : vector<1x512xf32>
    %cst_132 = arith.constant 1.000000e+00 : f32
    %286 = vector.broadcast %cst_132 : f32 to vector<1x512xf32>
    %287 = arith.divf %286, %285 : vector<1x512xf32>
    %288 = vector.broadcast %2 : vector<1x512xf32> to vector<32x512xf32>
    %289 = arith.mulf %269, %288 : vector<32x512xf32>
    %cst_133 = arith.constant dense<0.000000e+00> : vector<32xf32>
    %290 = vector.multi_reduction <add>, %289, %cst_133 [1] : vector<32x512xf32> to vector<32xf32>
    %291 = vector.shape_cast %290 : vector<32xf32> to vector<32x1xf32>
    %cst_134 = arith.constant 3.906250e-03 : f32
    %292 = vector.broadcast %cst_134 : f32 to vector<32x1xf32>
    %293 = arith.mulf %291, %292 : vector<32x1xf32>
    %294 = vector.broadcast %293 : vector<32x1xf32> to vector<32x8xf32>
    %295 = arith.mulf %272, %294 : vector<32x8xf32>
    %cst_135 = arith.constant dense<0.000000e+00> : vector<8xf32>
    %296 = vector.multi_reduction <add>, %295, %cst_135 [0] : vector<32x8xf32> to vector<8xf32>
    %297 = vector.shape_cast %296 : vector<8xf32> to vector<1x8xf32>
    %298 = arith.addf %297, %275 : vector<1x8xf32>
    %cst_136 = arith.constant 0.000000e+00 : f32
    %299 = vector.broadcast %cst_136 : f32 to vector<1x8xf32>
    %300 = arith.maximumf %298, %299 : vector<1x8xf32>
    %301 = vector.broadcast %300 : vector<1x8xf32> to vector<32x8xf32>
    %302 = arith.mulf %273, %301 : vector<32x8xf32>
    %cst_137 = arith.constant dense<0.000000e+00> : vector<32xf32>
    %303 = vector.multi_reduction <add>, %302, %cst_137 [1] : vector<32x8xf32> to vector<32xf32>
    %304 = vector.shape_cast %303 : vector<32xf32> to vector<32x1xf32>
    %305 = arith.addf %304, %274 : vector<32x1xf32>
    %cst_138 = arith.constant 0.000000e+00 : f32
    %306 = vector.broadcast %cst_138 : f32 to vector<32x1xf32>
    %307 = arith.subf %306, %305 : vector<32x1xf32>
    %308 = math.exp %307 : vector<32x1xf32>
    %cst_139 = arith.constant 1.000000e+00 : f32
    %309 = vector.broadcast %cst_139 : f32 to vector<32x1xf32>
    %310 = arith.addf %309, %308 : vector<32x1xf32>
    %cst_140 = arith.constant 1.000000e+00 : f32
    %311 = vector.broadcast %cst_140 : f32 to vector<32x1xf32>
    %312 = arith.divf %311, %310 : vector<32x1xf32>
    %313 = vector.broadcast %312 : vector<32x1xf32> to vector<32x512xf32>
    %314 = vector.broadcast %2 : vector<1x512xf32> to vector<32x512xf32>
    %315 = arith.mulf %313, %314 : vector<32x512xf32>
    %316 = vector.broadcast %287 : vector<1x512xf32> to vector<32x512xf32>
    %317 = arith.addf %316, %315 : vector<32x512xf32>
    %318 = vector.broadcast %3 : vector<1x512xf32> to vector<32x512xf32>
    %319 = arith.mulf %269, %318 : vector<32x512xf32>
    %cst_141 = arith.constant dense<0.000000e+00> : vector<32xf32>
    %320 = vector.multi_reduction <add>, %319, %cst_141 [1] : vector<32x512xf32> to vector<32xf32>
    %321 = vector.shape_cast %320 : vector<32xf32> to vector<32x1xf32>
    %cst_142 = arith.constant 3.906250e-03 : f32
    %322 = vector.broadcast %cst_142 : f32 to vector<32x1xf32>
    %323 = arith.mulf %321, %322 : vector<32x1xf32>
    %324 = vector.broadcast %323 : vector<32x1xf32> to vector<32x8xf32>
    %325 = arith.mulf %272, %324 : vector<32x8xf32>
    %cst_143 = arith.constant dense<0.000000e+00> : vector<8xf32>
    %326 = vector.multi_reduction <add>, %325, %cst_143 [0] : vector<32x8xf32> to vector<8xf32>
    %327 = vector.shape_cast %326 : vector<8xf32> to vector<1x8xf32>
    %328 = arith.addf %327, %275 : vector<1x8xf32>
    %cst_144 = arith.constant 0.000000e+00 : f32
    %329 = vector.broadcast %cst_144 : f32 to vector<1x8xf32>
    %330 = arith.maximumf %328, %329 : vector<1x8xf32>
    %331 = vector.broadcast %330 : vector<1x8xf32> to vector<32x8xf32>
    %332 = arith.mulf %273, %331 : vector<32x8xf32>
    %cst_145 = arith.constant dense<0.000000e+00> : vector<32xf32>
    %333 = vector.multi_reduction <add>, %332, %cst_145 [1] : vector<32x8xf32> to vector<32xf32>
    %334 = vector.shape_cast %333 : vector<32xf32> to vector<32x1xf32>
    %335 = arith.addf %334, %274 : vector<32x1xf32>
    %cst_146 = arith.constant 0.000000e+00 : f32
    %336 = vector.broadcast %cst_146 : f32 to vector<32x1xf32>
    %337 = arith.subf %336, %335 : vector<32x1xf32>
    %338 = math.exp %337 : vector<32x1xf32>
    %cst_147 = arith.constant 1.000000e+00 : f32
    %339 = vector.broadcast %cst_147 : f32 to vector<32x1xf32>
    %340 = arith.addf %339, %338 : vector<32x1xf32>
    %cst_148 = arith.constant 1.000000e+00 : f32
    %341 = vector.broadcast %cst_148 : f32 to vector<32x1xf32>
    %342 = arith.divf %341, %340 : vector<32x1xf32>
    %343 = vector.broadcast %342 : vector<32x1xf32> to vector<32x512xf32>
    %344 = vector.broadcast %3 : vector<1x512xf32> to vector<32x512xf32>
    %345 = arith.mulf %343, %344 : vector<32x512xf32>
    %346 = arith.addf %317, %345 : vector<32x512xf32>
    %347 = arith.mulf %269, %346 : vector<32x512xf32>
    %c0_149 = arith.constant 0 : index
    %c0_150 = arith.constant 0 : index
    %348 = vector.load %arg11[%c0_149, %c0_150] : memref<32x512xf32, #tpu.memory_space<vmem>>, vector<32x512xf32>
    tpu.vector_store %arg11[%c0_149, %c0_150], %347 {strides = array<i32>} : memref<32x512xf32, #tpu.memory_space<vmem>>, vector<32x512xf32>,
    return
  }
  func.func @transform_0(%arg0: i32) -> (i32, i32) {
    %c0_i32 = arith.constant 0 : i32
    %c0_i32_0 = arith.constant 0 : i32
    return %c0_i32, %arg0 : i32, i32
  }
  func.func @transform_1(%arg0: i32) -> (i32, i32) {
    %c0_i32 = arith.constant 0 : i32
    %c0_i32_0 = arith.constant 0 : i32
    %c0_i32_1 = arith.constant 0 : i32
    return %c0_i32, %c0_i32_0 : i32, i32
  }
  func.func @transform_2(%arg0: i32) -> (i32, i32) {
    %c0_i32 = arith.constant 0 : i32
    %c0_i32_0 = arith.constant 0 : i32
    %c0_i32_1 = arith.constant 0 : i32
    return %c0_i32, %c0_i32_0 : i32, i32
  }
  func.func @transform_3(%arg0: i32) -> (i32, i32) {
    %c0_i32 = arith.constant 0 : i32
    %c0_i32_0 = arith.constant 0 : i32
    %c0_i32_1 = arith.constant 0 : i32
    return %c0_i32, %c0_i32_0 : i32, i32
  }
  func.func @transform_4(%arg0: i32) -> (i32, i32) {
    %c0_i32 = arith.constant 0 : i32
    %c0_i32_0 = arith.constant 0 : i32
    %c0_i32_1 = arith.constant 0 : i32
    return %c0_i32, %c0_i32_0 : i32, i32
  }
  func.func @transform_5(%arg0: i32) -> (i32, i32) {
    %c0_i32 = arith.constant 0 : i32
    %c0_i32_0 = arith.constant 0 : i32
    %c0_i32_1 = arith.constant 0 : i32
    return %c0_i32, %c0_i32_0 : i32, i32
  }
  func.func @transform_6(%arg0: i32) -> (i32, i32) {
    %c0_i32 = arith.constant 0 : i32
    %c0_i32_0 = arith.constant 0 : i32
    %c0_i32_1 = arith.constant 0 : i32
    return %c0_i32, %c0_i32_0 : i32, i32
  }
  func.func @transform_7(%arg0: i32) -> (i32, i32) {
    %c0_i32 = arith.constant 0 : i32
    %c0_i32_0 = arith.constant 0 : i32
    %c0_i32_1 = arith.constant 0 : i32
    return %c0_i32, %c0_i32_0 : i32, i32
  }
  func.func @transform_8(%arg0: i32) -> (i32, i32) {
    %c0_i32 = arith.constant 0 : i32
    %c0_i32_0 = arith.constant 0 : i32
    %c0_i32_1 = arith.constant 0 : i32
    return %c0_i32, %c0_i32_0 : i32, i32
  }
  func.func @transform_9(%arg0: i32) -> (i32, i32) {
    %c0_i32 = arith.constant 0 : i32
    %c0_i32_0 = arith.constant 0 : i32
    %c0_i32_1 = arith.constant 0 : i32
    return %c0_i32, %c0_i32_0 : i32, i32
  }
  func.func @transform_10(%arg0: i32) -> (i32, i32) {
    %c0_i32 = arith.constant 0 : i32
    %c0_i32_0 = arith.constant 0 : i32
    return %c0_i32, %arg0 : i32, i32
  }
}

</mosaic_0001>

<llo_original>
// kernel: tpu_custom_call.1
$region0: #{tpu_custom_call.1}
  #allocation0 [shape = 'u32[]', space=smem, size = 0x4, offset = 0x4, fixed_abs, tag = 'smem constant byte address 0x4 - core index']
  #allocation1 [shape = 'u32[72,128]{1,0:T(1,128)}', space=vmem, size = 0x9000, scoped, tag = 'internal scratch']
  #allocation2 [shape = 'bf16[288,512]{1,0:T(8,128)(2,1)}', space=vmem, size = 0x48000, scoped, tag = 'scratch operand']
  %s0 = inlined_call_operand.hbm [shape: f32[32,1024], index: 0, kind: input, shape index: {}]
  %s1 = inlined_call_operand.vmem [shape: f32[9,512], index: 1, kind: input, shape index: {}]
  %s2 = inlined_call_operand.hbm [shape: f32[2,512], index: 2, kind: input, shape index: {}]
  %s3 = inlined_call_operand.vmem [shape: bf16[32,288], index: 3, kind: input, shape index: {}]
  %s4 = inlined_call_operand.hbm [shape: bf16[32,288], index: 4, kind: input, shape index: {}]
  %s5 = inlined_call_operand.vmem [shape: f32[32,12], index: 5, kind: input, shape index: {}]
  %s6 = inlined_call_operand.vmem [shape: f32[32,17], index: 6, kind: input, shape index: {}]
  %s7 = inlined_call_operand.vmem [shape: f32[1,41], index: 7, kind: input, shape index: {}]
  %s8 = inlined_call_operand.vmem [shape: f32[32,17], index: 8, kind: input, shape index: {}]
  %s9 = inlined_call_operand.vmem [shape: f32[1,41], index: 9, kind: input, shape index: {}]
  %s10 = inlined_call_operand.hbm [shape: f32[32,1024], index: 10, kind: output, shape index: {}]
  %s11 = sld [smem:[#allocation0]]
  $region85: #{tpu_custom_call.1} parent=0
    _
  %s13 = ssub.s32 1, %s11
  %s14 = scalar_select 0, %s13, %s11
  $region1: #{tpu_custom_call.1} parent=0
    #allocation3 [shape = 'u8[131072]{0}', space=vmem, size = 0x20000, scoped, tag = 'input window, operand 0']
    #allocation4 [shape = 's32[2]{0}', space=sflag, size = 0x8, scoped, tag = 'scoped memory for tpu_custom_call.1']
    #allocation5 [shape = 's32[2]{0}', space=sflag, size = 0x8, scoped, tag = 'scoped memory for tpu_custom_call.1']
    #allocation6 [shape = 'u8[4096]{0}', space=vmem, size = 0x1000, scoped, tag = 'input window, operand 2, single buffered']
    #allocation7 [shape = 's32[1]{0}', space=sflag, size = 0x4, scoped, tag = 'scoped memory for tpu_custom_call.1']
    #allocation8 [shape = 'u8[24576]{0}', space=vmem, size = 0x6000, scoped, tag = 'input window, operand 4, single buffered']
    #allocation9 [shape = 'u8[131072]{0}', space=vmem, size = 0x20000, scoped, tag = 'output window, operand 0']
    %15 = vsyncpa [#allocation4], 0
    %s16 = scalar_lea.sflag [#allocation4], 1
    %17 = vsyncpa %s16, 0
    %18 = vsyncpa [#allocation7], 0
    %19 = vsyncpa [#allocation5], 0
    %s20 = scalar_lea.sflag [#allocation5], 1
    %21 = vsyncpa %s20, 0
    loop: start=0, step=1, limit=4
    $region2: #{tpu_custom_call.1} parent=1 // loop_pre_header
      _
    $region3: #{tpu_custom_call.1} parent=1 // loop_header
      %s23 = sphi 0, %s27
      %p24 = scmp.ge.s32.totalorder %s23, 4
      %s33 = sphi 0, %s35
      %s36 = sphi 0, %s33
      %s37 = sphi 0, %s36
      %s53 = sphi 0, %s37
      %s57 = sphi 0, %s57
      %s59 = sphi 0, %s57
      %s60 = sphi 0, %s59
      %s74 = sphi 0, %s60
      %s78 = sphi 0, %s78
      %s80 = sphi 0, %s78
      %s81 = sphi 0, %s80
      %s95 = sphi 0, %s81
      %s99 = sphi 0, %s99
      %s101 = sphi 0, %s99
      %s102 = sphi 0, %s101
      %s116 = sphi 0, %s102
      %s120 = sphi 0, %s120
      %s122 = sphi 0, %s120
      %s123 = sphi 0, %s122
      %s137 = sphi 0, %s123
      %s141 = sphi 0, %s141
      %s143 = sphi 0, %s141
      %s144 = sphi 0, %s143
      %s158 = sphi 0, %s144
      %s162 = sphi 0, %s162
      %s164 = sphi 0, %s162
      %s165 = sphi 0, %s164
      %s179 = sphi 0, %s165
      %s183 = sphi 0, %s183
      %s185 = sphi 0, %s183
      %s186 = sphi 0, %s185
      %s200 = sphi 0, %s186
      %s204 = sphi 0, %s204
      %s206 = sphi 0, %s204
      %s207 = sphi 0, %s206
      %s221 = sphi 0, %s207
      %s225 = sphi 0, %s225
      %s227 = sphi 0, %s225
      %s228 = sphi 0, %s227
      %s242 = sphi 0, %s228
      %s248 = sphi 0, %s250
      %s251 = sphi 0, %s248
      %s252 = sphi 0, %s251
      %s268 = sphi 0, %s252
    $region4: #{tpu_custom_call.1} parent=1 // loop_header_branch
      %26 = sbr.rel (%p24) target = $region8
    $region5: #{tpu_custom_call.1} parent=1 // loop_body
      %s28 = ssub.s32 %s23, 1
      %s29 = ssub.s32 %s23, 2
      %s30 = sadd.s32 %s23, 1
      %s31 = ssub.s32 %s23, %s30
      %p32 = scmp.eq.s32.totalorder %s31, 0
      %s34 = sadd.s32 %s33, 1
      %s35 = scalar_select %p32, %s33, %s34
      %p38 = pneg %p32
      %p39 = scmp.eq.s32.totalorder %s23, 1
      %p40 = por %p38, %p39
      %p41 = scmp.ne.s32.totalorder %s33, %s36
      %p42 = scmp.eq.s32.totalorder %s23, 0
      %p43 = por %p41, %p42
      %p44 = scmp.ne.s32.totalorder %s33, %s36
      %p45 = scmp.eq.s32.totalorder %s28, 1
      %p46 = por %p44, %p45
      %p47 = scmp.ne.s32.totalorder %s36, %s37
      %p48 = scmp.eq.s32.totalorder %s28, 0
      %p49 = por %p47, %p48
      %p50 = scmp.ne.s32.totalorder %s36, %s37
      %p51 = scmp.eq.s32.totalorder %s29, 1
      %p52 = por %p50, %p51
      %p54 = scmp.ne.s32.totalorder %s37, %s53
      %p55 = scmp.eq.s32.totalorder %s29, 0
      %p56 = por %p54, %p55
      %s58 = sadd.s32 %s57, 1
      %p61 = scmp.eq.s32.totalorder %s23, 1
      %p62 = scmp.ne.s32.totalorder %s57, %s59
      %p63 = scmp.eq.s32.totalorder %s23, 0
      %p64 = por %p62, %p63
      %p65 = scmp.ne.s32.totalorder %s57, %s59
      %p66 = scmp.eq.s32.totalorder %s28, 1
      %p67 = por %p65, %p66
      %p68 = scmp.ne.s32.totalorder %s59, %s60
      %p69 = scmp.eq.s32.totalorder %s28, 0
      %p70 = por %p68, %p69
      %p71 = scmp.ne.s32.totalorder %s59, %s60
      %p72 = scmp.eq.s32.totalorder %s29, 1
      %p73 = por %p71, %p72
      %p75 = scmp.ne.s32.totalorder %s60, %s74
      %p76 = scmp.eq.s32.totalorder %s29, 0
      %p77 = por %p75, %p76
      %s79 = sadd.s32 %s78, 1
      %p82 = scmp.eq.s32.totalorder %s23, 1
      %p83 = scmp.ne.s32.totalorder %s78, %s80
      %p84 = scmp.eq.s32.totalorder %s23, 0
      %p85 = por %p83, %p84
      %p86 = scmp.ne.s32.totalorder %s78, %s80
      %p87 = scmp.eq.s32.totalorder %s28, 1
      %p88 = por %p86, %p87
      %p89 = scmp.ne.s32.totalorder %s80, %s81
      %p90 = scmp.eq.s32.totalorder %s28, 0
      %p91 = por %p89, %p90
      %p92 = scmp.ne.s32.totalorder %s80, %s81
      %p93 = scmp.eq.s32.totalorder %s29, 1
      %p94 = por %p92, %p93
      %p96 = scmp.ne.s32.totalorder %s81, %s95
      %p97 = scmp.eq.s32.totalorder %s29, 0
      %p98 = por %p96, %p97
      %s100 = sadd.s32 %s99, 1
      %p103 = scmp.eq.s32.totalorder %s23, 1
      %p104 = scmp.ne.s32.totalorder %s99, %s101
      %p105 = scmp.eq.s32.totalorder %s23, 0
      %p106 = por %p104, %p105
      %p107 = scmp.ne.s32.totalorder %s99, %s101
      %p108 = scmp.eq.s32.totalorder %s28, 1
      %p109 = por %p107, %p108
      %p110 = scmp.ne.s32.totalorder %s101, %s102
      %p111 = scmp.eq.s32.totalorder %s28, 0
      %p112 = por %p110, %p111
      %p113 = scmp.ne.s32.totalorder %s101, %s102
      %p114 = scmp.eq.s32.totalorder %s29, 1
      %p115 = por %p113, %p114
      %p117 = scmp.ne.s32.totalorder %s102, %s116
      %p118 = scmp.eq.s32.totalorder %s29, 0
      %p119 = por %p117, %p118
      %s121 = sadd.s32 %s120, 1
      %p124 = scmp.eq.s32.totalorder %s23, 1
      %p125 = scmp.ne.s32.totalorder %s120, %s122
      %p126 = scmp.eq.s32.totalorder %s23, 0
      %p127 = por %p125, %p126
      %p128 = scmp.ne.s32.totalorder %s120, %s122
      %p129 = scmp.eq.s32.totalorder %s28, 1
      %p130 = por %p128, %p129
      %p131 = scmp.ne.s32.totalorder %s122, %s123
      %p132 = scmp.eq.s32.totalorder %s28, 0
      %p133 = por %p131, %p132
      %p134 = scmp.ne.s32.totalorder %s122, %s123
      %p135 = scmp.eq.s32.totalorder %s29, 1
      %p136 = por %p134, %p135
      %p138 = scmp.ne.s32.totalorder %s123, %s137
      %p139 = scmp.eq.s32.totalorder %s29, 0
      %p140 = por %p138, %p139
      %s142 = sadd.s32 %s141, 1
      %p145 = scmp.eq.s32.totalorder %s23, 1
      %p146 = scmp.ne.s32.totalorder %s141, %s143
      %p147 = scmp.eq.s32.totalorder %s23, 0
      %p148 = por %p146, %p147
      %p149 = scmp.ne.s32.totalorder %s141, %s143
      %p150 = scmp.eq.s32.totalorder %s28, 1
      %p151 = por %p149, %p150
      %p152 = scmp.ne.s32.totalorder %s143, %s144
      %p153 = scmp.eq.s32.totalorder %s28, 0
      %p154 = por %p152, %p153
      %p155 = scmp.ne.s32.totalorder %s143, %s144
      %p156 = scmp.eq.s32.totalorder %s29, 1
      %p157 = por %p155, %p156
      %p159 = scmp.ne.s32.totalorder %s144, %s158
      %p160 = scmp.eq.s32.totalorder %s29, 0
      %p161 = por %p159, %p160
      %s163 = sadd.s32 %s162, 1
      %p166 = scmp.eq.s32.totalorder %s23, 1
      %p167 = scmp.ne.s32.totalorder %s162, %s164
      %p168 = scmp.eq.s32.totalorder %s23, 0
      %p169 = por %p167, %p168
      %p170 = scmp.ne.s32.totalorder %s162, %s164
      %p171 = scmp.eq.s32.totalorder %s28, 1
      %p172 = por %p170, %p171
      %p173 = scmp.ne.s32.totalorder %s164, %s165
      %p174 = scmp.eq.s32.totalorder %s28, 0
      %p175 = por %p173, %p174
      %p176 = scmp.ne.s32.totalorder %s164, %s165
      %p177 = scmp.eq.s32.totalorder %s29, 1
      %p178 = por %p176, %p177
      %p180 = scmp.ne.s32.totalorder %s165, %s179
      %p181 = scmp.eq.s32.totalorder %s29, 0
      %p182 = por %p180, %p181
      %s184 = sadd.s32 %s183, 1
      %p187 = scmp.eq.s32.totalorder %s23, 1
      %p188 = scmp.ne.s32.totalorder %s183, %s185
      %p189 = scmp.eq.s32.totalorder %s23, 0
      %p190 = por %p188, %p189
      %p191 = scmp.ne.s32.totalorder %s183, %s185
      %p192 = scmp.eq.s32.totalorder %s28, 1
      %p193 = por %p191, %p192
      %p194 = scmp.ne.s32.totalorder %s185, %s186
      %p195 = scmp.eq.s32.totalorder %s28, 0
      %p196 = por %p194, %p195
      %p197 = scmp.ne.s32.totalorder %s185, %s186
      %p198 = scmp.eq.s32.totalorder %s29, 1
      %p199 = por %p197, %p198
      %p201 = scmp.ne.s32.totalorder %s186, %s200
      %p202 = scmp.eq.s32.totalorder %s29, 0
      %p203 = por %p201, %p202
      %s205 = sadd.s32 %s204, 1
      %p208 = scmp.eq.s32.totalorder %s23, 1
      %p209 = scmp.ne.s32.totalorder %s204, %s206
      %p210 = scmp.eq.s32.totalorder %s23, 0
      %p211 = por %p209, %p210
      %p212 = scmp.ne.s32.totalorder %s204, %s206
      %p213 = scmp.eq.s32.totalorder %s28, 1
      %p214 = por %p212, %p213
      %p215 = scmp.ne.s32.totalorder %s206, %s207
      %p216 = scmp.eq.s32.totalorder %s28, 0
      %p217 = por %p215, %p216
      %p218 = scmp.ne.s32.totalorder %s206, %s207
      %p219 = scmp.eq.s32.totalorder %s29, 1
      %p220 = por %p218, %p219
      %p222 = scmp.ne.s32.totalorder %s207, %s221
      %p223 = scmp.eq.s32.totalorder %s29, 0
      %p224 = por %p222, %p223
      %s226 = sadd.s32 %s225, 1
      %p229 = scmp.eq.s32.totalorder %s23, 1
      %p230 = scmp.ne.s32.totalorder %s225, %s227
      %p231 = scmp.eq.s32.totalorder %s23, 0
      %p232 = por %p230, %p231
      %p233 = scmp.ne.s32.totalorder %s225, %s227
      %p234 = scmp.eq.s32.totalorder %s28, 1
      %p235 = por %p233, %p234
      %p236 = scmp.ne.s32.totalorder %s227, %s228
      %p237 = scmp.eq.s32.totalorder %s28, 0
      %p238 = por %p236, %p237
      %p239 = scmp.ne.s32.totalorder %s227, %s228
      %p240 = scmp.eq.s32.totalorder %s29, 1
      %p241 = por %p239, %p240
      %p243 = scmp.ne.s32.totalorder %s228, %s242
      %p244 = scmp.eq.s32.totalorder %s29, 0
      %p245 = por %p243, %p244
      %s246 = ssub.s32 %s23, %s30
      %p247 = scmp.eq.s32.totalorder %s246, 0
      %s249 = sadd.s32 %s248, 1
      %s250 = scalar_select %p247, %s248, %s249
      %p253 = pneg %p247
      %p254 = scmp.eq.s32.totalorder %s23, 1
      %p255 = por %p253, %p254
      %p256 = scmp.ne.s32.totalorder %s248, %s251
      %p257 = scmp.eq.s32.totalorder %s23, 0
      %p258 = por %p256, %p257
      %p259 = scmp.ne.s32.totalorder %s248, %s251
      %p260 = scmp.eq.s32.totalorder %s28, 1
      %p261 = por %p259, %p260
      %p262 = scmp.ne.s32.totalorder %s251, %s252
      %p263 = scmp.eq.s32.totalorder %s28, 0
      %p264 = por %p262, %p263
      %p265 = scmp.ne.s32.totalorder %s251, %s252
      %p266 = scmp.eq.s32.totalorder %s29, 1
      %p267 = por %p265, %p266
      %p269 = scmp.ne.s32.totalorder %s252, %s268
      %p270 = scmp.eq.s32.totalorder %s29, 0
      %p271 = por %p269, %p270
      %p272 = scmp.le.s32.totalorder 1, %s23
      %p273 = scmp.lt.s32.totalorder %s23, 3
      %p274 = pnand %p272, %p273
      %p275 = pneg %p274
      // Predicated region
      $region9: #{tpu_custom_call.1} parent=5 // pred_check
        _
      $region10: #{tpu_custom_call.1} parent=5 // pred_check_branch
        %277 = sbr.rel (%p274) target = $region12
      $region11: #{tpu_custom_call.1} parent=5 // pred_region
        %s278 = ssub.s32 %s23, 1
        // Predicated region
        $region13: #{tpu_custom_call.1} parent=11 // pred_check
          %p279 = pneg %p70
        $region14: #{tpu_custom_call.1} parent=11 // pred_check_branch
          %281 = sbr.rel (%p279) target = $region16
        $region15: #{tpu_custom_call.1} parent=11 // pred_region
          _
        $region16: #{tpu_custom_call.1} parent=11 // pred_fallthru
          _
        // Predicated region
        $region17: #{tpu_custom_call.1} parent=11 // pred_check
          %p282 = pneg %p91
        $region18: #{tpu_custom_call.1} parent=11 // pred_check_branch
          %284 = sbr.rel (%p282) target = $region20
        $region19: #{tpu_custom_call.1} parent=11 // pred_region
          %286 = vsyncadd [#allocation7], 0
          %s288 = sshll.u32 %s2, 4
          %s289 = int_to_ptr.hbm [resolvable:$true] %s288
          %s290 = sshll.u32 [#allocation6], 4
          %s291 = int_to_ptr.vmem [resolvable:$true] %s290
          %293 = dma.hbm_to_vmem [thread:$0]  %s289, 128, %s291, [#allocation7]
        $region20: #{tpu_custom_call.1} parent=11 // pred_fallthru
          _
        // Predicated region
        $region21: #{tpu_custom_call.1} parent=11 // pred_check
          %p294 = pneg %p112
        $region22: #{tpu_custom_call.1} parent=11 // pred_check_branch
          %296 = sbr.rel (%p294) target = $region24
        $region23: #{tpu_custom_call.1} parent=11 // pred_region
          _
        $region24: #{tpu_custom_call.1} parent=11 // pred_fallthru
          _
        // Predicated region
        $region25: #{tpu_custom_call.1} parent=11 // pred_check
          %p297 = pneg %p133
        $region26: #{tpu_custom_call.1} parent=11 // pred_check_branch
          %299 = sbr.rel (%p297) target = $region28
        $region27: #{tpu_custom_call.1} parent=11 // pred_region
          %301 = vsyncadd [#allocation7], 0
          %s302 = sshll.u32 %s4, 4
          %s303 = int_to_ptr.hbm [resolvable:$true] %s302
          %s304 = sshll.u32 [#allocation8], 4
          %s305 = int_to_ptr.vmem [resolvable:$true] %s304
          %310 = dma.hbm_to_vmem [thread:$0]  %s303, 768, %s305, [#allocation7], 192, 192, 12
        $region28: #{tpu_custom_call.1} parent=11 // pred_fallthru
          _
        // Predicated region
        $region29: #{tpu_custom_call.1} parent=11 // pred_check
          %p311 = pneg %p154
        $region30: #{tpu_custom_call.1} parent=11 // pred_check_branch
          %313 = sbr.rel (%p311) target = $region32
        $region31: #{tpu_custom_call.1} parent=11 // pred_region
          _
        $region32: #{tpu_custom_call.1} parent=11 // pred_fallthru
          _
        // Predicated region
        $region33: #{tpu_custom_call.1} parent=11 // pred_check
          %p314 = pneg %p175
        $region34: #{tpu_custom_call.1} parent=11 // pred_check_branch
          %316 = sbr.rel (%p314) target = $region36
        $region35: #{tpu_custom_call.1} parent=11 // pred_region
          _
        $region36: #{tpu_custom_call.1} parent=11 // pred_fallthru
          _
        // Predicated region
        $region37: #{tpu_custom_call.1} parent=11 // pred_check
          %p317 = pneg %p196
        $region38: #{tpu_custom_call.1} parent=11 // pred_check_branch
          %319 = sbr.rel (%p317) target = $region40
        $region39: #{tpu_custom_call.1} parent=11 // pred_region
          _
        $region40: #{tpu_custom_call.1} parent=11 // pred_fallthru
          _
        // Predicated region
        $region41: #{tpu_custom_call.1} parent=11 // pred_check
          %p320 = pneg %p217
        $region42: #{tpu_custom_call.1} parent=11 // pred_check_branch
          %322 = sbr.rel (%p320) target = $region44
        $region43: #{tpu_custom_call.1} parent=11 // pred_region
          _
        $region44: #{tpu_custom_call.1} parent=11 // pred_fallthru
          _
        // Predicated region
        $region45: #{tpu_custom_call.1} parent=11 // pred_check
          %p323 = pneg %p238
        $region46: #{tpu_custom_call.1} parent=11 // pred_check_branch
          %325 = sbr.rel (%p323) target = $region48
        $region47: #{tpu_custom_call.1} parent=11 // pred_region
          _
        $region48: #{tpu_custom_call.1} parent=11 // pred_fallthru
          _
      $region12: #{tpu_custom_call.1} parent=5 // pred_fallthru
        _
      %p326 = scmp.lt.s32.totalorder %s23, 2
      // Predicated region
      $region49: #{tpu_custom_call.1} parent=5 // pred_check
        %p327 = pneg %p326
      $region50: #{tpu_custom_call.1} parent=5 // pred_check_branch
        %329 = sbr.rel (%p327) target = $region52
      $region51: #{tpu_custom_call.1} parent=5 // pred_region
        // Predicated region
        $region53: #{tpu_custom_call.1} parent=51 // pred_check
          %p330 = pneg %p43
        $region54: #{tpu_custom_call.1} parent=51 // pred_check_branch
          %332 = sbr.rel (%p330) target = $region56
        $region55: #{tpu_custom_call.1} parent=51 // pred_region
          %s333 = sand.u32 %s33, 1
          %s334 = scalar_lea.sflag [#allocation4], %s333
          %s335 = sand.u32 %s33, 1
          %s336 = smul.addr %s335, 128
          %s337 = scalar_lea.vmem [#allocation3], %s336
          %s338 = smul.u32 4, %s23
          %340 = vsyncadd %s334, 0
          %s341 = smul.addr %s338, 8
          %s342 = scalar_lea.hbm %s0, %s341
          %s343 = sshll.u32 %s342, 4
          %s344 = int_to_ptr.hbm [resolvable:$true] %s343
          %s345 = sshll.u32 %s337, 4
          %s346 = int_to_ptr.vmem [resolvable:$true] %s345
          %351 = dma.hbm_to_vmem [thread:$0]  %s344, 2048, %s346, %s334, 1024, 512, 32
        $region56: #{tpu_custom_call.1} parent=51 // pred_fallthru
          _
      $region52: #{tpu_custom_call.1} parent=5 // pred_fallthru
        _
      %p352 = scmp.le.s32.totalorder 1, %s23
      %p353 = scmp.lt.s32.totalorder %s23, 3
      %p354 = pnand %p352, %p353
      %p355 = pneg %p354
      // Predicated region
      $region57: #{tpu_custom_call.1} parent=5 // pred_check
        _
      $region58: #{tpu_custom_call.1} parent=5 // pred_check_branch
        %357 = sbr.rel (%p354) target = $region60
      $region59: #{tpu_custom_call.1} parent=5 // pred_region
        %s358 = ssub.s32 %s23, 1
        %s359 = sand.u32 %s36, 1
        %s360 = scalar_lea.sflag [#allocation4], %s359
        %s361 = sand.u32 %s36, 1
        %s362 = smul.addr %s361, 128
        %s363 = scalar_lea.vmem [#allocation3], %s362
        // Predicated region
        $region61: #{tpu_custom_call.1} parent=59 // pred_check
          %p364 = pneg %p49
        $region62: #{tpu_custom_call.1} parent=59 // pred_check_branch
          %366 = sbr.rel (%p364) target = $region64
        $region63: #{tpu_custom_call.1} parent=59 // pred_region
          %368 = dma.done %s360, 2048
        $region64: #{tpu_custom_call.1} parent=59 // pred_fallthru
          _
        // Predicated region
        $region65: #{tpu_custom_call.1} parent=59 // pred_check
          %p369 = pneg %p91
        $region66: #{tpu_custom_call.1} parent=59 // pred_check_branch
          %371 = sbr.rel (%p369) target = $region68
        $region67: #{tpu_custom_call.1} parent=59 // pred_region
          %373 = dma.done [#allocation7], 128
        $region68: #{tpu_custom_call.1} parent=59 // pred_fallthru
          _
        // Predicated region
        $region69: #{tpu_custom_call.1} parent=59 // pred_check
          %p374 = pneg %p133
        $region70: #{tpu_custom_call.1} parent=59 // pred_check_branch
          %376 = sbr.rel (%p374) target = $region72
        $region71: #{tpu_custom_call.1} parent=59 // pred_region
          %378 = dma.done [#allocation7], 768
        $region72: #{tpu_custom_call.1} parent=59 // pred_fallthru
          _
        %s379 = sand.u32 %s36, 1
        %s380 = scalar_lea.sflag [#allocation4], %s379
        %s381 = sand.u32 %s36, 1
        %s382 = smul.addr %s381, 128
        %s383 = scalar_lea.vmem [#allocation3], %s382
        %p384 = pneg %p49
        %p385 = pneg %p46
        %p386 = pneg %p70
        %p387 = pneg %p67
        %p388 = pneg %p91
        %p389 = pneg %p88
        %p390 = pneg %p112
        %p391 = pneg %p109
        %p392 = pneg %p133
        %p393 = pneg %p130
        %p394 = pneg %p154
        %p395 = pneg %p151
        %p396 = pneg %p175
        %p397 = pneg %p172
        %p398 = pneg %p196
        %p399 = pneg %p193
        %p400 = pneg %p217
        %p401 = pneg %p214
        %p402 = pneg %p238
        %p403 = pneg %p235
        %p404 = pneg %p264
        %p405 = pneg %p261
        %s406 = sand.u32 %s251, 1
        %s407 = scalar_lea.sflag [#allocation5], %s406
        %s408 = sand.u32 %s251, 1
        %s409 = smul.addr %s408, 128
        %s410 = scalar_lea.vmem [#allocation9], %s409
        %s411 = smul.u32 4, %s28
        %s412 = smul.u32 4, %s28
        %v414 = vld [vmem:[%s363] sm:$0xff]
        %v415 = vld [vmem:[%s363 + $0x8] sm:$0xff]
        %v416 = vld [vmem:[%s363 + $0x10] sm:$0xff]
        %v417 = vld [vmem:[%s363 + $0x18] sm:$0xff]
        %v418 = vld [vmem:[%s363 + $0x20] sm:$0xff]
        %v419 = vld [vmem:[%s363 + $0x28] sm:$0xff]
        %v420 = vld [vmem:[%s363 + $0x30] sm:$0xff]
        %v421 = vld [vmem:[%s363 + $0x38] sm:$0xff]
        %v422 = vld [vmem:[%s363 + $0x40] sm:$0xff]
        %v423 = vld [vmem:[%s363 + $0x48] sm:$0xff]
        %v424 = vld [vmem:[%s363 + $0x50] sm:$0xff]
        %v425 = vld [vmem:[%s363 + $0x58] sm:$0xff]
        %v426 = vld [vmem:[%s363 + $0x60] sm:$0xff]
        %v427 = vld [vmem:[%s363 + $0x68] sm:$0xff]
        %v428 = vld [vmem:[%s363 + $0x70] sm:$0xff]
        %v429 = vld [vmem:[%s363 + $0x78] sm:$0xff]
        %v430 = vld [vmem:[#allocation6] sm:$0xff]
        %v431 = vld [vmem:[%s5] sm:$0xff]
        %v432 = vld [vmem:[%s5 + $0x8] sm:$0xff]
        %v433 = vld [vmem:[%s5 + $0x10] sm:$0xff]
        %v434 = vld [vmem:[%s5 + $0x18] sm:$0xff]
        %v435 = vld [vmem:[%s6] sm:$0xff]
        %v436 = vld [vmem:[%s6 + $0x8] sm:$0xff]
        %v437 = vld [vmem:[%s6 + $0x10] sm:$0xff]
        %v438 = vld [vmem:[%s6 + $0x18] sm:$0xff]
        %v439 = vld [vmem:[%s7] sm:$0x1]
        %441 = vset.pattern.permute.xlu0 40
        %442 = vperm.xlu0 %441, %v439
        %v443 = vpop.permute.xlu0 %442
        %v445 = vperm.slane %v443, 0
        %v446 = vperm.slane %v439, 0
        %447 = vrot.lane.b32.xlu0 %v446, 120
        %v448 = vpop.permute.xlu0 %447
        %vm449 = vcmask 261120
        %v450 = vsel %vm449, %v448, 0
        %452 = vmatpush.msra.mxu0 0.0
        %453 = vmatpush.msra.mxu0 0.0
        %454 = vmatpush.msra.mxu0 0.0
        %455 = vmatpush.msra.mxu0 0.0
        %456 = vmatpush.msra.mxu0 0.0
        %457 = vmatpush.msra.mxu0 0.0
        %458 = vmatpush.msra.mxu0 0.0
        %459 = vmatpush.msra.mxu0 0.0
        %460 = vmatpush.msra.mxu0 0.0
        %461 = vmatpush.msra.mxu0 0.0
        %462 = vmatpush.msra.mxu0 0.0
        %463 = vmatpush.msra.mxu0 0.0
        %464 = vmatpush.msra.mxu0 %v426
        %465 = vmatpush.msra.mxu0 %v422
        %466 = vmatpush.msra.mxu0 %v418
        %467 = vmatpush.msra.mxu0 %v414
        %468 = vmatmul.f32.gmra.mxu0 %v450
        %v469 = vpop.f32.mrf.mxu0
        %v470 = vadd.f32 %v445, %v469
        %471 = vdwg.mxu0
        %472 = vmatpush.msra.mxu0 0.0
        %473 = vmatpush.msra.mxu0 0.0
        %474 = vmatpush.msra.mxu0 0.0
        %475 = vmatpush.msra.mxu0 0.0
        %476 = vmatpush.msra.mxu0 0.0
        %477 = vmatpush.msra.mxu0 0.0
        %478 = vmatpush.msra.mxu0 0.0
        %479 = vmatpush.msra.mxu0 0.0
        %480 = vmatpush.msra.mxu0 0.0
        %481 = vmatpush.msra.mxu0 0.0
        %482 = vmatpush.msra.mxu0 0.0
        %483 = vmatpush.msra.mxu0 0.0
        %484 = vmatpush.msra.mxu0 %v427
        %485 = vmatpush.msra.mxu0 %v423
        %486 = vmatpush.msra.mxu0 %v419
        %487 = vmatpush.msra.mxu0 %v415
        %488 = vmatmul.f32.gmra.mxu0 %v450
        %v489 = vpop.f32.mrf.mxu0
        %v490 = vadd.f32 %v445, %v489
        %491 = vdwg.mxu0
        %492 = vmatpush.msra.mxu0 0.0
        %493 = vmatpush.msra.mxu0 0.0
        %494 = vmatpush.msra.mxu0 0.0
        %495 = vmatpush.msra.mxu0 0.0
        %496 = vmatpush.msra.mxu0 0.0
        %497 = vmatpush.msra.mxu0 0.0
        %498 = vmatpush.msra.mxu0 0.0
        %499 = vmatpush.msra.mxu0 0.0
        %500 = vmatpush.msra.mxu0 0.0
        %501 = vmatpush.msra.mxu0 0.0
        %502 = vmatpush.msra.mxu0 0.0
        %503 = vmatpush.msra.mxu0 0.0
        %504 = vmatpush.msra.mxu0 %v428
        %505 = vmatpush.msra.mxu0 %v424
        %506 = vmatpush.msra.mxu0 %v420
        %507 = vmatpush.msra.mxu0 %v416
        %508 = vmatmul.f32.gmra.mxu0 %v450
        %v509 = vpop.f32.mrf.mxu0
        %v510 = vadd.f32 %v445, %v509
        %511 = vdwg.mxu0
        %512 = vmatpush.msra.mxu0 0.0
        %513 = vmatpush.msra.mxu0 0.0
        %514 = vmatpush.msra.mxu0 0.0
        %515 = vmatpush.msra.mxu0 0.0
        %516 = vmatpush.msra.mxu0 0.0
        %517 = vmatpush.msra.mxu0 0.0
        %518 = vmatpush.msra.mxu0 0.0
        %519 = vmatpush.msra.mxu0 0.0
        %520 = vmatpush.msra.mxu0 0.0
        %521 = vmatpush.msra.mxu0 0.0
        %522 = vmatpush.msra.mxu0 0.0
        %523 = vmatpush.msra.mxu0 0.0
        %524 = vmatpush.msra.mxu0 %v429
        %525 = vmatpush.msra.mxu0 %v425
        %526 = vmatpush.msra.mxu0 %v421
        %527 = vmatpush.msra.mxu0 %v417
        %528 = vmatmul.f32.gmra.mxu0 %v450
        %v529 = vpop.f32.mrf.mxu0
        %v530 = vadd.f32 %v445, %v529
        %531 = vdwg.mxu0
        %v532 = vsub.f32 0.0, %v470
        %v533 = vsub.f32 0.0, %v490
        %v534 = vsub.f32 0.0, %v510
        %v535 = vsub.f32 0.0, %v530
        %v536 = vmul.f32 %v532, 1.442695
        %v537 = vpow.pop %v536
        %v538 = vmul.f32 %v533, 1.442695
        %v539 = vpow.pop %v538
        %v540 = vmul.f32 %v534, 1.442695
        %v541 = vpow.pop %v540
        %v542 = vmul.f32 %v535, 1.442695
        %v543 = vpow.pop %v542
        %v544 = vadd.f32 %v537, 1.0
        %v545 = vadd.f32 %v539, 1.0
        %v546 = vadd.f32 %v541, 1.0
        %v547 = vadd.f32 %v543, 1.0
        %v548 = vrcp.pop %v544
        %v549 = vmul.f32 %v544, %v548
        %v550 = vsub.f32 1.0, %v549
        %v551 = vmul.f32 %v548, %v550
        %v552 = vadd.f32 %v548, %v551
        %vm553 = vweird.f32 %v544
        %vm554 = vweird.f32 %v548
        %vm555 = vmor %vm553, %vm554
        %v556 = vsel %vm555, %v548, %v552
        %v557 = vand.u32 2147483647, %v544
        %vm558 = vcmp.eq.f32.partialorder %v557, 8.507059e+37
        %v559 = vand.u32 %v544, 2147483648
        %v560 = vor.u32 1.1754944e-38, %v559
        %v561 = vsel %vm558, %v560, %v556
        %v562 = vmul.f32 1.0, %v561
        %v563 = vrcp.pop %v545
        %v564 = vmul.f32 %v545, %v563
        %v565 = vsub.f32 1.0, %v564
        %v566 = vmul.f32 %v563, %v565
        %v567 = vadd.f32 %v563, %v566
        %vm568 = vweird.f32 %v545
        %vm569 = vweird.f32 %v563
        %vm570 = vmor %vm568, %vm569
        %v571 = vsel %vm570, %v563, %v567
        %v572 = vand.u32 2147483647, %v545
        %vm573 = vcmp.eq.f32.partialorder %v572, 8.507059e+37
        %v574 = vand.u32 %v545, 2147483648
        %v575 = vor.u32 1.1754944e-38, %v574
        %v576 = vsel %vm573, %v575, %v571
        %v577 = vmul.f32 1.0, %v576
        %v578 = vrcp.pop %v546
        %v579 = vmul.f32 %v546, %v578
        %v580 = vsub.f32 1.0, %v579
        %v581 = vmul.f32 %v578, %v580
        %v582 = vadd.f32 %v578, %v581
        %vm583 = vweird.f32 %v546
        %vm584 = vweird.f32 %v578
        %vm585 = vmor %vm583, %vm584
        %v586 = vsel %vm585, %v578, %v582
        %v587 = vand.u32 2147483647, %v546
        %vm588 = vcmp.eq.f32.partialorder %v587, 8.507059e+37
        %v589 = vand.u32 %v546, 2147483648
        %v590 = vor.u32 1.1754944e-38, %v589
        %v591 = vsel %vm588, %v590, %v586
        %v592 = vmul.f32 1.0, %v591
        %v593 = vrcp.pop %v547
        %v594 = vmul.f32 %v547, %v593
        %v595 = vsub.f32 1.0, %v594
        %v596 = vmul.f32 %v593, %v595
        %v597 = vadd.f32 %v593, %v596
        %vm598 = vweird.f32 %v547
        %vm599 = vweird.f32 %v593
        %vm600 = vmor %vm598, %vm599
        %v601 = vsel %vm600, %v593, %v597
        %v602 = vand.u32 2147483647, %v547
        %vm603 = vcmp.eq.f32.partialorder %v602, 8.507059e+37
        %v604 = vand.u32 %v547, 2147483648
        %v605 = vor.u32 1.1754944e-38, %v604
        %v606 = vsel %vm603, %v605, %v601
        %v607 = vmul.f32 1.0, %v606
        %v609 = vperm.slane %v430, 0
        %v610 = vperm.slane %v430, 2
        %v611 = vperm.slane %v430, 4
        %v612 = vperm.slane %v430, 6
        %v617 = vperm.slane %v609, 0
        %v618 = vperm.slane %v610, 0
        %v619 = vperm.slane %v611, 0
        %v620 = vperm.slane %v612, 0
        %v621 = vmul.f32 %v414, %v617
        %v622 = vmul.f32 %v415, %v618
        %v623 = vmul.f32 %v416, %v619
        %v624 = vmul.f32 %v417, %v620
        %v625 = vmul.f32 %v418, %v617
        %v626 = vmul.f32 %v419, %v618
        %v627 = vmul.f32 %v420, %v619
        %v628 = vmul.f32 %v421, %v620
        %v629 = vmul.f32 %v422, %v617
        %v630 = vmul.f32 %v423, %v618
        %v631 = vmul.f32 %v424, %v619
        %v632 = vmul.f32 %v425, %v620
        %v633 = vmul.f32 %v426, %v617
        %v634 = vmul.f32 %v427, %v618
        %v635 = vmul.f32 %v428, %v619
        %v636 = vmul.f32 %v429, %v620
        %v637 = vadd.f32 %v621, %v622
        %v638 = vadd.f32 %v637, %v623
        %v639 = vadd.f32 %v638, %v624
        %640 = vadd.xlane.f32.xlu0 %v639
        %v641 = vpop.xlane.xlu0 %640
        %v642 = vadd.f32 %v625, %v626
        %v643 = vadd.f32 %v642, %v627
        %v644 = vadd.f32 %v643, %v628
        %645 = vadd.xlane.f32.xlu0 %v644
        %v646 = vpop.xlane.xlu0 %645
        %v647 = vadd.f32 %v629, %v630
        %v648 = vadd.f32 %v647, %v631
        %v649 = vadd.f32 %v648, %v632
        %650 = vadd.xlane.f32.xlu0 %v649
        %v651 = vpop.xlane.xlu0 %650
        %v652 = vadd.f32 %v633, %v634
        %v653 = vadd.f32 %v652, %v635
        %v654 = vadd.f32 %v653, %v636
        %655 = vadd.xlane.f32.xlu0 %v654
        %v656 = vpop.xlane.xlu0 %655
        %v657 = vmul.f32 %v641, 0.00390625
        %v658 = vmul.f32 %v646, 0.00390625
        %v659 = vmul.f32 %v651, 0.00390625
        %v660 = vmul.f32 %v656, 0.00390625
        %v661 = vmul.f32 %v435, %v657
        %v662 = vmul.f32 %v436, %v658
        %v663 = vmul.f32 %v437, %v659
        %v664 = vmul.f32 %v438, %v660
        %vm665 = vcmask 64512
        %v666 = vsel %vm665, %v661, 0.0
        %v667 = vsel %vm665, %v662, 0.0
        %v668 = vadd.f32 %v666, %v667
        %v669 = vsel %vm665, %v663, 0.0
        %v670 = vadd.f32 %v668, %v669
        %v671 = vsel %vm665, %v664, 0.0
        %v672 = vadd.f32 %v670, %v671
        %v673 = vrot.slane %v672, 4
        %v674 = vadd.f32 %v672, %v673
        %v675 = vrot.slane %v674, 2
        %v676 = vadd.f32 %v674, %v675
        %v677 = vrot.slane %v676, 1
        %v678 = vadd.f32 %v676, %v677
        %v679 = vadd.f32 %v678, %v439
        %v680 = vmax.f32 %v679, 0.0
        %v681 = vperm.slane %v680, 0
        %683 = vrot.lane.b32.xlu0 %v681, 8
        %v684 = vpop.permute.xlu0 %683
        %v686 = vmul.f32 %v435, %v684
        %v687 = vmul.f32 %v436, %v684
        %v688 = vmul.f32 %v437, %v684
        %v689 = vmul.f32 %v438, %v684
        %694 = vrot.lane.b32.xlu0 %v686, 120
        %v695 = vpop.permute.xlu0 %694
        %696 = vrot.lane.b32.xlu0 %v687, 120
        %v697 = vpop.permute.xlu0 %696
        %698 = vrot.lane.b32.xlu0 %v688, 120
        %v699 = vpop.permute.xlu0 %698
        %700 = vrot.lane.b32.xlu0 %v689, 120
        %v701 = vpop.permute.xlu0 %700
        %v706 = vsel %vm665, %v695, 0.0
        %707 = vadd.xlane.f32.xlu0 %v706
        %v708 = vpop.xlane.xlu0 %707
        %v709 = vsel %vm665, %v697, 0.0
        %710 = vadd.xlane.f32.xlu0 %v709
        %v711 = vpop.xlane.xlu0 %710
        %v712 = vsel %vm665, %v699, 0.0
        %713 = vadd.xlane.f32.xlu0 %v712
        %v714 = vpop.xlane.xlu0 %713
        %v715 = vsel %vm665, %v701, 0.0
        %716 = vadd.xlane.f32.xlu0 %v715
        %v717 = vpop.xlane.xlu0 %716
        %v718 = vadd.f32 %v708, %v435
        %v719 = vadd.f32 %v711, %v436
        %v720 = vadd.f32 %v714, %v437
        %v721 = vadd.f32 %v717, %v438
        %v722 = vsub.f32 0.0, %v718
        %v723 = vsub.f32 0.0, %v719
        %v724 = vsub.f32 0.0, %v720
        %v725 = vsub.f32 0.0, %v721
        %v726 = vmul.f32 %v722, 1.442695
        %v727 = vpow.pop %v726
        %v728 = vmul.f32 %v723, 1.442695
        %v729 = vpow.pop %v728
        %v730 = vmul.f32 %v724, 1.442695
        %v731 = vpow.pop %v730
        %v732 = vmul.f32 %v725, 1.442695
        %v733 = vpow.pop %v732
        %v734 = vadd.f32 %v727, 1.0
        %v735 = vadd.f32 %v729, 1.0
        %v736 = vadd.f32 %v731, 1.0
        %v737 = vadd.f32 %v733, 1.0
        %v738 = vrcp.pop %v734
        %v739 = vmul.f32 %v734, %v738
        %v740 = vsub.f32 1.0, %v739
        %v741 = vmul.f32 %v738, %v740
        %v742 = vadd.f32 %v738, %v741
        %vm743 = vweird.f32 %v734
        %vm744 = vweird.f32 %v738
        %vm745 = vmor %vm743, %vm744
        %v746 = vsel %vm745, %v738, %v742
        %v747 = vand.u32 2147483647, %v734
        %vm748 = vcmp.eq.f32.partialorder %v747, 8.507059e+37
        %v749 = vand.u32 %v734, 2147483648
        %v750 = vor.u32 1.1754944e-38, %v749
        %v751 = vsel %vm748, %v750, %v746
        %v752 = vmul.f32 1.0, %v751
        %v753 = vrcp.pop %v735
        %v754 = vmul.f32 %v735, %v753
        %v755 = vsub.f32 1.0, %v754
        %v756 = vmul.f32 %v753, %v755
        %v757 = vadd.f32 %v753, %v756
        %vm758 = vweird.f32 %v735
        %vm759 = vweird.f32 %v753
        %vm760 = vmor %vm758, %vm759
        %v761 = vsel %vm760, %v753, %v757
        %v762 = vand.u32 2147483647, %v735
        %vm763 = vcmp.eq.f32.partialorder %v762, 8.507059e+37
        %v764 = vand.u32 %v735, 2147483648
        %v765 = vor.u32 1.1754944e-38, %v764
        %v766 = vsel %vm763, %v765, %v761
        %v767 = vmul.f32 1.0, %v766
        %v768 = vrcp.pop %v736
        %v769 = vmul.f32 %v736, %v768
        %v770 = vsub.f32 1.0, %v769
        %v771 = vmul.f32 %v768, %v770
        %v772 = vadd.f32 %v768, %v771
        %vm773 = vweird.f32 %v736
        %vm774 = vweird.f32 %v768
        %vm775 = vmor %vm773, %vm774
        %v776 = vsel %vm775, %v768, %v772
        %v777 = vand.u32 2147483647, %v736
        %vm778 = vcmp.eq.f32.partialorder %v777, 8.507059e+37
        %v779 = vand.u32 %v736, 2147483648
        %v780 = vor.u32 1.1754944e-38, %v779
        %v781 = vsel %vm778, %v780, %v776
        %v782 = vmul.f32 1.0, %v781
        %v783 = vrcp.pop %v737
        %v784 = vmul.f32 %v737, %v783
        %v785 = vsub.f32 1.0, %v784
        %v786 = vmul.f32 %v783, %v785
        %v787 = vadd.f32 %v783, %v786
        %vm788 = vweird.f32 %v737
        %vm789 = vweird.f32 %v783
        %vm790 = vmor %vm788, %vm789
        %v791 = vsel %vm790, %v783, %v787
        %v792 = vand.u32 2147483647, %v737
        %vm793 = vcmp.eq.f32.partialorder %v792, 8.507059e+37
        %v794 = vand.u32 %v737, 2147483648
        %v795 = vor.u32 1.1754944e-38, %v794
        %v796 = vsel %vm793, %v795, %v791
        %v797 = vmul.f32 1.0, %v796
        %799 = vset.pattern.permute.xlu0 16
        %800 = vperm.xlu0 %799, %v752
        %v801 = vpop.permute.xlu0 %800
        %804 = vset.pattern.permute.xlu0 16
        %805 = vperm.xlu0 %804, %v767
        %v806 = vpop.permute.xlu0 %805
        %809 = vset.pattern.permute.xlu0 16
        %810 = vperm.xlu0 %809, %v782
        %v811 = vpop.permute.xlu0 %810
        %814 = vset.pattern.permute.xlu0 16
        %815 = vperm.xlu0 %814, %v797
        %v816 = vpop.permute.xlu0 %815
        %v818 = vmul.f32 %v801, %v617
        %v819 = vmul.f32 %v801, %v618
        %v820 = vmul.f32 %v801, %v619
        %v821 = vmul.f32 %v801, %v620
        %v822 = vmul.f32 %v806, %v617
        %v823 = vmul.f32 %v806, %v618
        %v824 = vmul.f32 %v806, %v619
        %v825 = vmul.f32 %v806, %v620
        %v826 = vmul.f32 %v811, %v617
        %v827 = vmul.f32 %v811, %v618
        %v828 = vmul.f32 %v811, %v619
        %v829 = vmul.f32 %v811, %v620
        %v830 = vmul.f32 %v816, %v617
        %v831 = vmul.f32 %v816, %v618
        %v832 = vmul.f32 %v816, %v619
        %v833 = vmul.f32 %v816, %v620
        %v834 = vperm.slane %v562, 0
        %v835 = vperm.slane %v577, 0
        %v836 = vperm.slane %v592, 0
        %v837 = vperm.slane %v607, 0
        %v838 = vadd.f32 %v834, %v818
        %v839 = vadd.f32 %v835, %v819
        %v840 = vadd.f32 %v836, %v820
        %v841 = vadd.f32 %v837, %v821
        %v842 = vadd.f32 %v834, %v822
        %v843 = vadd.f32 %v835, %v823
        %v844 = vadd.f32 %v836, %v824
        %v845 = vadd.f32 %v837, %v825
        %v846 = vadd.f32 %v834, %v826
        %v847 = vadd.f32 %v835, %v827
        %v848 = vadd.f32 %v836, %v828
        %v849 = vadd.f32 %v837, %v829
        %v850 = vadd.f32 %v834, %v830
        %v851 = vadd.f32 %v835, %v831
        %v852 = vadd.f32 %v836, %v832
        %v853 = vadd.f32 %v837, %v833
        %v854 = vperm.slane %v430, 1
        %v855 = vperm.slane %v430, 3
        %v856 = vperm.slane %v430, 5
        %v857 = vperm.slane %v430, 7
        %v862 = vperm.slane %v854, 1
        %v863 = vperm.slane %v855, 1
        %v864 = vperm.slane %v856, 1
        %v865 = vperm.slane %v857, 1
        %v866 = vmul.f32 %v414, %v862
        %v867 = vmul.f32 %v415, %v863
        %v868 = vmul.f32 %v416, %v864
        %v869 = vmul.f32 %v417, %v865
        %v870 = vmul.f32 %v418, %v862
        %v871 = vmul.f32 %v419, %v863
        %v872 = vmul.f32 %v420, %v864
        %v873 = vmul.f32 %v421, %v865
        %v874 = vmul.f32 %v422, %v862
        %v875 = vmul.f32 %v423, %v863
        %v876 = vmul.f32 %v424, %v864
        %v877 = vmul.f32 %v425, %v865
        %v878 = vmul.f32 %v426, %v862
        %v879 = vmul.f32 %v427, %v863
        %v880 = vmul.f32 %v428, %v864
        %v881 = vmul.f32 %v429, %v865
        %v882 = vadd.f32 %v866, %v867
        %v883 = vadd.f32 %v882, %v868
        %v884 = vadd.f32 %v883, %v869
        %885 = vadd.xlane.f32.xlu0 %v884
        %v886 = vpop.xlane.xlu0 %885
        %v887 = vadd.f32 %v870, %v871
        %v888 = vadd.f32 %v887, %v872
        %v889 = vadd.f32 %v888, %v873
        %890 = vadd.xlane.f32.xlu0 %v889
        %v891 = vpop.xlane.xlu0 %890
        %v892 = vadd.f32 %v874, %v875
        %v893 = vadd.f32 %v892, %v876
        %v894 = vadd.f32 %v893, %v877
        %895 = vadd.xlane.f32.xlu0 %v894
        %v896 = vpop.xlane.xlu0 %895
        %v897 = vadd.f32 %v878, %v879
        %v898 = vadd.f32 %v897, %v880
        %v899 = vadd.f32 %v898, %v881
        %900 = vadd.xlane.f32.xlu0 %v899
        %v901 = vpop.xlane.xlu0 %900
        %v902 = vmul.f32 %v886, 0.00390625
        %v903 = vmul.f32 %v891, 0.00390625
        %v904 = vmul.f32 %v896, 0.00390625
        %v905 = vmul.f32 %v901, 0.00390625
        %v906 = vmul.f32 %v435, %v902
        %v907 = vmul.f32 %v436, %v903
        %v908 = vmul.f32 %v437, %v904
        %v909 = vmul.f32 %v438, %v905
        %v910 = vsel %vm665, %v906, 0.0
        %v911 = vsel %vm665, %v907, 0.0
        %v912 = vadd.f32 %v910, %v911
        %v913 = vsel %vm665, %v908, 0.0
        %v914 = vadd.f32 %v912, %v913
        %v915 = vsel %vm665, %v909, 0.0
        %v916 = vadd.f32 %v914, %v915
        %v917 = vrot.slane %v916, 4
        %v918 = vadd.f32 %v916, %v917
        %v919 = vrot.slane %v918, 2
        %v920 = vadd.f32 %v918, %v919
        %v921 = vrot.slane %v920, 1
        %v922 = vadd.f32 %v920, %v921
        %v923 = vadd.f32 %v922, %v439
        %v924 = vmax.f32 %v923, 0.0
        %v925 = vperm.slane %v924, 0
        %927 = vrot.lane.b32.xlu0 %v925, 8
        %v928 = vpop.permute.xlu0 %927
        %v930 = vmul.f32 %v435, %v928
        %v931 = vmul.f32 %v436, %v928
        %v932 = vmul.f32 %v437, %v928
        %v933 = vmul.f32 %v438, %v928
        %938 = vrot.lane.b32.xlu0 %v930, 120
        %v939 = vpop.permute.xlu0 %938
        %940 = vrot.lane.b32.xlu0 %v931, 120
        %v941 = vpop.permute.xlu0 %940
        %942 = vrot.lane.b32.xlu0 %v932, 120
        %v943 = vpop.permute.xlu0 %942
        %944 = vrot.lane.b32.xlu0 %v933, 120
        %v945 = vpop.permute.xlu0 %944
        %v950 = vsel %vm665, %v939, 0.0
        %951 = vadd.xlane.f32.xlu0 %v950
        %v952 = vpop.xlane.xlu0 %951
        %v953 = vsel %vm665, %v941, 0.0
        %954 = vadd.xlane.f32.xlu0 %v953
        %v955 = vpop.xlane.xlu0 %954
        %v956 = vsel %vm665, %v943, 0.0
        %957 = vadd.xlane.f32.xlu0 %v956
        %v958 = vpop.xlane.xlu0 %957
        %v959 = vsel %vm665, %v945, 0.0
        %960 = vadd.xlane.f32.xlu0 %v959
        %v961 = vpop.xlane.xlu0 %960
        %v962 = vadd.f32 %v952, %v435
        %v963 = vadd.f32 %v955, %v436
        %v964 = vadd.f32 %v958, %v437
        %v965 = vadd.f32 %v961, %v438
        %v966 = vsub.f32 0.0, %v962
        %v967 = vsub.f32 0.0, %v963
        %v968 = vsub.f32 0.0, %v964
        %v969 = vsub.f32 0.0, %v965
        %v970 = vmul.f32 %v966, 1.442695
        %v971 = vpow.pop %v970
        %v972 = vmul.f32 %v967, 1.442695
        %v973 = vpow.pop %v972
        %v974 = vmul.f32 %v968, 1.442695
        %v975 = vpow.pop %v974
        %v976 = vmul.f32 %v969, 1.442695
        %v977 = vpow.pop %v976
        %v978 = vadd.f32 %v971, 1.0
        %v979 = vadd.f32 %v973, 1.0
        %v980 = vadd.f32 %v975, 1.0
        %v981 = vadd.f32 %v977, 1.0
        %v982 = vrcp.pop %v978
        %v983 = vmul.f32 %v978, %v982
        %v984 = vsub.f32 1.0, %v983
        %v985 = vmul.f32 %v982, %v984
        %v986 = vadd.f32 %v982, %v985
        %vm987 = vweird.f32 %v978
        %vm988 = vweird.f32 %v982
        %vm989 = vmor %vm987, %vm988
        %v990 = vsel %vm989, %v982, %v986
        %v991 = vand.u32 2147483647, %v978
        %vm992 = vcmp.eq.f32.partialorder %v991, 8.507059e+37
        %v993 = vand.u32 %v978, 2147483648
        %v994 = vor.u32 1.1754944e-38, %v993
        %v995 = vsel %vm992, %v994, %v990
        %v996 = vmul.f32 1.0, %v995
        %v997 = vrcp.pop %v979
        %v998 = vmul.f32 %v979, %v997
        %v999 = vsub.f32 1.0, %v998
        %v1000 = vmul.f32 %v997, %v999
        %v1001 = vadd.f32 %v997, %v1000
        %vm1002 = vweird.f32 %v979
        %vm1003 = vweird.f32 %v997
        %vm1004 = vmor %vm1002, %vm1003
        %v1005 = vsel %vm1004, %v997, %v1001
        %v1006 = vand.u32 2147483647, %v979
        %vm1007 = vcmp.eq.f32.partialorder %v1006, 8.507059e+37
        %v1008 = vand.u32 %v979, 2147483648
        %v1009 = vor.u32 1.1754944e-38, %v1008
        %v1010 = vsel %vm1007, %v1009, %v1005
        %v1011 = vmul.f32 1.0, %v1010
        %v1012 = vrcp.pop %v980
        %v1013 = vmul.f32 %v980, %v1012
        %v1014 = vsub.f32 1.0, %v1013
        %v1015 = vmul.f32 %v1012, %v1014
        %v1016 = vadd.f32 %v1012, %v1015
        %vm1017 = vweird.f32 %v980
        %vm1018 = vweird.f32 %v1012
        %vm1019 = vmor %vm1017, %vm1018
        %v1020 = vsel %vm1019, %v1012, %v1016
        %v1021 = vand.u32 2147483647, %v980
        %vm1022 = vcmp.eq.f32.partialorder %v1021, 8.507059e+37
        %v1023 = vand.u32 %v980, 2147483648
        %v1024 = vor.u32 1.1754944e-38, %v1023
        %v1025 = vsel %vm1022, %v1024, %v1020
        %v1026 = vmul.f32 1.0, %v1025
        %v1027 = vrcp.pop %v981
        %v1028 = vmul.f32 %v981, %v1027
        %v1029 = vsub.f32 1.0, %v1028
        %v1030 = vmul.f32 %v1027, %v1029
        %v1031 = vadd.f32 %v1027, %v1030
        %vm1032 = vweird.f32 %v981
        %vm1033 = vweird.f32 %v1027
        %vm1034 = vmor %vm1032, %vm1033
        %v1035 = vsel %vm1034, %v1027, %v1031
        %v1036 = vand.u32 2147483647, %v981
        %vm1037 = vcmp.eq.f32.partialorder %v1036, 8.507059e+37
        %v1038 = vand.u32 %v981, 2147483648
        %v1039 = vor.u32 1.1754944e-38, %v1038
        %v1040 = vsel %vm1037, %v1039, %v1035
        %v1041 = vmul.f32 1.0, %v1040
        %1043 = vset.pattern.permute.xlu0 16
        %1044 = vperm.xlu0 %1043, %v996
        %v1045 = vpop.permute.xlu0 %1044
        %1048 = vset.pattern.permute.xlu0 16
        %1049 = vperm.xlu0 %1048, %v1011
        %v1050 = vpop.permute.xlu0 %1049
        %1053 = vset.pattern.permute.xlu0 16
        %1054 = vperm.xlu0 %1053, %v1026
        %v1055 = vpop.permute.xlu0 %1054
        %1058 = vset.pattern.permute.xlu0 16
        %1059 = vperm.xlu0 %1058, %v1041
        %v1060 = vpop.permute.xlu0 %1059
        %v1062 = vmul.f32 %v1045, %v862
        %v1063 = vmul.f32 %v1045, %v863
        %v1064 = vmul.f32 %v1045, %v864
        %v1065 = vmul.f32 %v1045, %v865
        %v1066 = vmul.f32 %v1050, %v862
        %v1067 = vmul.f32 %v1050, %v863
        %v1068 = vmul.f32 %v1050, %v864
        %v1069 = vmul.f32 %v1050, %v865
        %v1070 = vmul.f32 %v1055, %v862
        %v1071 = vmul.f32 %v1055, %v863
        %v1072 = vmul.f32 %v1055, %v864
        %v1073 = vmul.f32 %v1055, %v865
        %v1074 = vmul.f32 %v1060, %v862
        %v1075 = vmul.f32 %v1060, %v863
        %v1076 = vmul.f32 %v1060, %v864
        %v1077 = vmul.f32 %v1060, %v865
        %v1078 = vadd.f32 %v838, %v1062
        %v1079 = vadd.f32 %v839, %v1063
        %v1080 = vadd.f32 %v840, %v1064
        %v1081 = vadd.f32 %v841, %v1065
        %v1082 = vadd.f32 %v842, %v1066
        %v1083 = vadd.f32 %v843, %v1067
        %v1084 = vadd.f32 %v844, %v1068
        %v1085 = vadd.f32 %v845, %v1069
        %v1086 = vadd.f32 %v846, %v1070
        %v1087 = vadd.f32 %v847, %v1071
        %v1088 = vadd.f32 %v848, %v1072
        %v1089 = vadd.f32 %v849, %v1073
        %v1090 = vadd.f32 %v850, %v1074
        %v1091 = vadd.f32 %v851, %v1075
        %v1092 = vadd.f32 %v852, %v1076
        %v1093 = vadd.f32 %v853, %v1077
        %v1094 = vmul.f32 %v414, %v1078
        %v1095 = vmul.f32 %v415, %v1079
        %v1096 = vmul.f32 %v416, %v1080
        %v1097 = vmul.f32 %v417, %v1081
        %v1098 = vmul.f32 %v418, %v1082
        %v1099 = vmul.f32 %v419, %v1083
        %v1100 = vmul.f32 %v420, %v1084
        %v1101 = vmul.f32 %v421, %v1085
        %v1102 = vmul.f32 %v422, %v1086
        %v1103 = vmul.f32 %v423, %v1087
        %v1104 = vmul.f32 %v424, %v1088
        %v1105 = vmul.f32 %v425, %v1089
        %v1106 = vmul.f32 %v426, %v1090
        %v1107 = vmul.f32 %v427, %v1091
        %v1108 = vmul.f32 %v428, %v1092
        %v1109 = vmul.f32 %v429, %v1093
        %1110 = vrot.lane.b32.xlu0 %v1094, 17
        %v1111 = vpop.permute.xlu0 %1110
        %1112 = vrot.lane.b32.xlu0 %v1098, 17
        %v1113 = vpop.permute.xlu0 %1112
        %1114 = vrot.lane.b32.xlu0 %v1102, 17
        %v1115 = vpop.permute.xlu0 %1114
        %1116 = vrot.lane.b32.xlu0 %v1106, 17
        %v1117 = vpop.permute.xlu0 %1116
        %1118 = vrot.lane.b32.xlu0 %v1095, 17
        %v1119 = vpop.permute.xlu0 %1118
        %1120 = vrot.lane.b32.xlu0 %v1099, 17
        %v1121 = vpop.permute.xlu0 %1120
        %1122 = vrot.lane.b32.xlu0 %v1103, 17
        %v1123 = vpop.permute.xlu0 %1122
        %1124 = vrot.lane.b32.xlu0 %v1107, 17
        %v1125 = vpop.permute.xlu0 %1124
        %1126 = vrot.lane.b32.xlu0 %v1096, 17
        %v1127 = vpop.permute.xlu0 %1126
        %1128 = vrot.lane.b32.xlu0 %v1100, 17
        %v1129 = vpop.permute.xlu0 %1128
        %1130 = vrot.lane.b32.xlu0 %v1104, 17
        %v1131 = vpop.permute.xlu0 %1130
        %1132 = vrot.lane.b32.xlu0 %v1108, 17
        %v1133 = vpop.permute.xlu0 %1132
        %1134 = vrot.lane.b32.xlu0 %v1097, 17
        %v1135 = vpop.permute.xlu0 %1134
        %1136 = vrot.lane.b32.xlu0 %v1101, 17
        %v1137 = vpop.permute.xlu0 %1136
        %1138 = vrot.lane.b32.xlu0 %v1105, 17
        %v1139 = vpop.permute.xlu0 %1138
        %1140 = vrot.lane.b32.xlu0 %v1109, 17
        %v1141 = vpop.permute.xlu0 %1140
        %v1142 = vlaneseq
        %v1143 = vand.u32 %v1142, 127
        %vm1144 = vcmp.lt.s32.totalorder %v1143, 17
        %v1145 = vsel %vm1144, %v1127, %v1135
        %v1146 = vsel %vm1144, %v1129, %v1137
        %v1147 = vsel %vm1144, %v1131, %v1139
        %v1148 = vsel %vm1144, %v1133, %v1141
        %v1149 = vsel %vm1144, %v1119, %v1127
        %v1150 = vsel %vm1144, %v1121, %v1129
        %v1151 = vsel %vm1144, %v1123, %v1131
        %v1152 = vsel %vm1144, %v1125, %v1133
        %v1153 = vsel %vm1144, %v1111, %v1119
        %v1154 = vsel %vm1144, %v1113, %v1121
        %v1155 = vsel %vm1144, %v1115, %v1123
        %v1156 = vsel %vm1144, %v1117, %v1125
        %v1157 = vsel %vm1144, %v1135, %v1111
        %v1158 = vsel %vm1144, %v1137, %v1113
        %v1159 = vsel %vm1144, %v1139, %v1115
        %v1160 = vsel %vm1144, %v1141, %v1117
        %v1161 = vld [vmem:[%s1] ss:$8 sm:$0xf]
        %v1163 = vperm.slane %v1161, 0
        %v1164 = vperm.slane %v1161, 1
        %v1165 = vperm.slane %v1161, 2
        %v1166 = vperm.slane %v1161, 3
        %v1171 = vmul.f32 %v1157, %v1163
        %v1172 = vmul.f32 %v1153, %v1164
        %v1173 = vmul.f32 %v1149, %v1165
        %v1174 = vmul.f32 %v1145, %v1166
        %v1175 = vmul.f32 %v1158, %v1163
        %v1176 = vmul.f32 %v1154, %v1164
        %v1177 = vmul.f32 %v1150, %v1165
        %v1178 = vmul.f32 %v1146, %v1166
        %v1179 = vmul.f32 %v1159, %v1163
        %v1180 = vmul.f32 %v1155, %v1164
        %v1181 = vmul.f32 %v1151, %v1165
        %v1182 = vmul.f32 %v1147, %v1166
        %v1183 = vmul.f32 %v1160, %v1163
        %v1184 = vmul.f32 %v1156, %v1164
        %v1185 = vmul.f32 %v1152, %v1165
        %v1186 = vmul.f32 %v1148, %v1166
        %v1187 = vpack.c.bf16 %v1172, %v1171
        %v1188 = vpack.c.bf16 %v1174, %v1173
        %v1189 = vpack.c.bf16 %v1176, %v1175
        %v1190 = vpack.c.bf16 %v1178, %v1177
        %v1191 = vpack.c.bf16 %v1180, %v1179
        %v1192 = vpack.c.bf16 %v1182, %v1181
        %v1193 = vpack.c.bf16 %v1184, %v1183
        %v1194 = vpack.c.bf16 %v1186, %v1185
        %1195 = vst [vmem:[#allocation2] sm:$0xff] %v1187
        %1196 = vst [vmem:[#allocation2 + $0x8] sm:$0xff] %v1188
        %1197 = vst [vmem:[#allocation2 + $0x10] sm:$0xff] %v1189
        %1198 = vst [vmem:[#allocation2 + $0x18] sm:$0xff] %v1190
        %1199 = vst [vmem:[#allocation2 + $0x20] sm:$0xff] %v1191
        %1200 = vst [vmem:[#allocation2 + $0x28] sm:$0xff] %v1192
        %1201 = vst [vmem:[#allocation2 + $0x30] sm:$0xff] %v1193
        %1202 = vst [vmem:[#allocation2 + $0x38] sm:$0xff] %v1194
        %1203 = vrot.lane.b32.xlu0 %v1094, 16
        %v1204 = vpop.permute.xlu0 %1203
        %1205 = vrot.lane.b32.xlu0 %v1098, 16
        %v1206 = vpop.permute.xlu0 %1205
        %1207 = vrot.lane.b32.xlu0 %v1102, 16
        %v1208 = vpop.permute.xlu0 %1207
        %1209 = vrot.lane.b32.xlu0 %v1106, 16
        %v1210 = vpop.permute.xlu0 %1209
        %1211 = vrot.lane.b32.xlu0 %v1095, 16
        %v1212 = vpop.permute.xlu0 %1211
        %1213 = vrot.lane.b32.xlu0 %v1099, 16
        %v1214 = vpop.permute.xlu0 %1213
        %1215 = vrot.lane.b32.xlu0 %v1103, 16
        %v1216 = vpop.permute.xlu0 %1215
        %1217 = vrot.lane.b32.xlu0 %v1107, 16
        %v1218 = vpop.permute.xlu0 %1217
        %1219 = vrot.lane.b32.xlu0 %v1096, 16
        %v1220 = vpop.permute.xlu0 %1219
        %1221 = vrot.lane.b32.xlu0 %v1100, 16
        %v1222 = vpop.permute.xlu0 %1221
        %1223 = vrot.lane.b32.xlu0 %v1104, 16
        %v1224 = vpop.permute.xlu0 %1223
        %1225 = vrot.lane.b32.xlu0 %v1108, 16
        %v1226 = vpop.permute.xlu0 %1225
        %1227 = vrot.lane.b32.xlu0 %v1097, 16
        %v1228 = vpop.permute.xlu0 %1227
        %1229 = vrot.lane.b32.xlu0 %v1101, 16
        %v1230 = vpop.permute.xlu0 %1229
        %1231 = vrot.lane.b32.xlu0 %v1105, 16
        %v1232 = vpop.permute.xlu0 %1231
        %1233 = vrot.lane.b32.xlu0 %v1109, 16
        %v1234 = vpop.permute.xlu0 %1233
        %vm1235 = vcmp.lt.s32.totalorder %v1143, 16
        %v1236 = vsel %vm1235, %v1220, %v1228
        %v1237 = vsel %vm1235, %v1222, %v1230
        %v1238 = vsel %vm1235, %v1224, %v1232
        %v1239 = vsel %vm1235, %v1226, %v1234
        %v1240 = vsel %vm1235, %v1212, %v1220
        %v1241 = vsel %vm1235, %v1214, %v1222
        %v1242 = vsel %vm1235, %v1216, %v1224
        %v1243 = vsel %vm1235, %v1218, %v1226
        %v1244 = vsel %vm1235, %v1204, %v1212
        %v1245 = vsel %vm1235, %v1206, %v1214
        %v1246 = vsel %vm1235, %v1208, %v1216
        %v1247 = vsel %vm1235, %v1210, %v1218
        %v1248 = vsel %vm1235, %v1228, %v1204
        %v1249 = vsel %vm1235, %v1230, %v1206
        %v1250 = vsel %vm1235, %v1232, %v1208
        %v1251 = vsel %vm1235, %v1234, %v1210
        %s1252 = scalar_lea.vmem %s1, 1
        %v1253 = vld [vmem:[%s1252] ss:$8 sm:$0xf]
        %v1255 = vperm.slane %v1253, 0
        %v1256 = vperm.slane %v1253, 1
        %v1257 = vperm.slane %v1253, 2
        %v1258 = vperm.slane %v1253, 3
        %v1263 = vmul.f32 %v1248, %v1255
        %v1264 = vmul.f32 %v1244, %v1256
        %v1265 = vmul.f32 %v1240, %v1257
        %v1266 = vmul.f32 %v1236, %v1258
        %v1267 = vmul.f32 %v1249, %v1255
        %v1268 = vmul.f32 %v1245, %v1256
        %v1269 = vmul.f32 %v1241, %v1257
        %v1270 = vmul.f32 %v1237, %v1258
        %v1271 = vmul.f32 %v1250, %v1255
        %v1272 = vmul.f32 %v1246, %v1256
        %v1273 = vmul.f32 %v1242, %v1257
        %v1274 = vmul.f32 %v1238, %v1258
        %v1275 = vmul.f32 %v1251, %v1255
        %v1276 = vmul.f32 %v1247, %v1256
        %v1277 = vmul.f32 %v1243, %v1257
        %v1278 = vmul.f32 %v1239, %v1258
        %v1279 = vpack.c.bf16 %v1264, %v1263
        %v1280 = vpack.c.bf16 %v1266, %v1265
        %v1281 = vpack.c.bf16 %v1268, %v1267
        %v1282 = vpack.c.bf16 %v1270, %v1269
        %v1283 = vpack.c.bf16 %v1272, %v1271
        %v1284 = vpack.c.bf16 %v1274, %v1273
        %v1285 = vpack.c.bf16 %v1276, %v1275
        %v1286 = vpack.c.bf16 %v1278, %v1277
        %1287 = vst [vmem:[#allocation2 + $0x40] sm:$0xff] %v1279
        %1288 = vst [vmem:[#allocation2 + $0x48] sm:$0xff] %v1280
        %1289 = vst [vmem:[#allocation2 + $0x50] sm:$0xff] %v1281
        %1290 = vst [vmem:[#allocation2 + $0x58] sm:$0xff] %v1282
        %1291 = vst [vmem:[#allocation2 + $0x60] sm:$0xff] %v1283
        %1292 = vst [vmem:[#allocation2 + $0x68] sm:$0xff] %v1284
        %1293 = vst [vmem:[#allocation2 + $0x70] sm:$0xff] %v1285
        %1294 = vst [vmem:[#allocation2 + $0x78] sm:$0xff] %v1286
        %1295 = vrot.lane.b32.xlu0 %v1094, 15
        %v1296 = vpop.permute.xlu0 %1295
        %1297 = vrot.lane.b32.xlu0 %v1098, 15
        %v1298 = vpop.permute.xlu0 %1297
        %1299 = vrot.lane.b32.xlu0 %v1102, 15
        %v1300 = vpop.permute.xlu0 %1299
        %1301 = vrot.lane.b32.xlu0 %v1106, 15
        %v1302 = vpop.permute.xlu0 %1301
        %1303 = vrot.lane.b32.xlu0 %v1095, 15
        %v1304 = vpop.permute.xlu0 %1303
        %1305 = vrot.lane.b32.xlu0 %v1099, 15
        %v1306 = vpop.permute.xlu0 %1305
        %1307 = vrot.lane.b32.xlu0 %v1103, 15
        %v1308 = vpop.permute.xlu0 %1307
        %1309 = vrot.lane.b32.xlu0 %v1107, 15
        %v1310 = vpop.permute.xlu0 %1309
        %1311 = vrot.lane.b32.xlu0 %v1096, 15
        %v1312 = vpop.permute.xlu0 %1311
        %1313 = vrot.lane.b32.xlu0 %v1100, 15
        %v1314 = vpop.permute.xlu0 %1313
        %1315 = vrot.lane.b32.xlu0 %v1104, 15
        %v1316 = vpop.permute.xlu0 %1315
        %1317 = vrot.lane.b32.xlu0 %v1108, 15
        %v1318 = vpop.permute.xlu0 %1317
        %1319 = vrot.lane.b32.xlu0 %v1097, 15
        %v1320 = vpop.permute.xlu0 %1319
        %1321 = vrot.lane.b32.xlu0 %v1101, 15
        %v1322 = vpop.permute.xlu0 %1321
        %1323 = vrot.lane.b32.xlu0 %v1105, 15
        %v1324 = vpop.permute.xlu0 %1323
        %1325 = vrot.lane.b32.xlu0 %v1109, 15
        %v1326 = vpop.permute.xlu0 %1325
        %vm1327 = vcmp.lt.s32.totalorder %v1143, 15
        %v1328 = vsel %vm1327, %v1312, %v1320
        %v1329 = vsel %vm1327, %v1314, %v1322
        %v1330 = vsel %vm1327, %v1316, %v1324
        %v1331 = vsel %vm1327, %v1318, %v1326
        %v1332 = vsel %vm1327, %v1304, %v1312
        %v1333 = vsel %vm1327, %v1306, %v1314
        %v1334 = vsel %vm1327, %v1308, %v1316
        %v1335 = vsel %vm1327, %v1310, %v1318
        %v1336 = vsel %vm1327, %v1296, %v1304
        %v1337 = vsel %vm1327, %v1298, %v1306
        %v1338 = vsel %vm1327, %v1300, %v1308
        %v1339 = vsel %vm1327, %v1302, %v1310
        %v1340 = vsel %vm1327, %v1320, %v1296
        %v1341 = vsel %vm1327, %v1322, %v1298
        %v1342 = vsel %vm1327, %v1324, %v1300
        %v1343 = vsel %vm1327, %v1326, %v1302
        %s1344 = scalar_lea.vmem %s1, 2
        %v1345 = vld [vmem:[%s1344] ss:$8 sm:$0xf]
        %v1347 = vperm.slane %v1345, 0
        %v1348 = vperm.slane %v1345, 1
        %v1349 = vperm.slane %v1345, 2
        %v1350 = vperm.slane %v1345, 3
        %v1355 = vmul.f32 %v1340, %v1347
        %v1356 = vmul.f32 %v1336, %v1348
        %v1357 = vmul.f32 %v1332, %v1349
        %v1358 = vmul.f32 %v1328, %v1350
        %v1359 = vmul.f32 %v1341, %v1347
        %v1360 = vmul.f32 %v1337, %v1348
        %v1361 = vmul.f32 %v1333, %v1349
        %v1362 = vmul.f32 %v1329, %v1350
        %v1363 = vmul.f32 %v1342, %v1347
        %v1364 = vmul.f32 %v1338, %v1348
        %v1365 = vmul.f32 %v1334, %v1349
        %v1366 = vmul.f32 %v1330, %v1350
        %v1367 = vmul.f32 %v1343, %v1347
        %v1368 = vmul.f32 %v1339, %v1348
        %v1369 = vmul.f32 %v1335, %v1349
        %v1370 = vmul.f32 %v1331, %v1350
        %v1371 = vpack.c.bf16 %v1356, %v1355
        %v1372 = vpack.c.bf16 %v1358, %v1357
        %v1373 = vpack.c.bf16 %v1360, %v1359
        %v1374 = vpack.c.bf16 %v1362, %v1361
        %v1375 = vpack.c.bf16 %v1364, %v1363
        %v1376 = vpack.c.bf16 %v1366, %v1365
        %v1377 = vpack.c.bf16 %v1368, %v1367
        %v1378 = vpack.c.bf16 %v1370, %v1369
        %1379 = vst [vmem:[#allocation2 + $0x80] sm:$0xff] %v1371
        %1380 = vst [vmem:[#allocation2 + $0x88] sm:$0xff] %v1372
        %1381 = vst [vmem:[#allocation2 + $0x90] sm:$0xff] %v1373
        %1382 = vst [vmem:[#allocation2 + $0x98] sm:$0xff] %v1374
        %1383 = vst [vmem:[#allocation2 + $0xa0] sm:$0xff] %v1375
        %1384 = vst [vmem:[#allocation2 + $0xa8] sm:$0xff] %v1376
        %1385 = vst [vmem:[#allocation2 + $0xb0] sm:$0xff] %v1377
        %1386 = vst [vmem:[#allocation2 + $0xb8] sm:$0xff] %v1378
        %1387 = vrot.lane.b32.xlu0 %v1094, 1
        %v1388 = vpop.permute.xlu0 %1387
        %1389 = vrot.lane.b32.xlu0 %v1098, 1
        %v1390 = vpop.permute.xlu0 %1389
        %1391 = vrot.lane.b32.xlu0 %v1102, 1
        %v1392 = vpop.permute.xlu0 %1391
        %1393 = vrot.lane.b32.xlu0 %v1106, 1
        %v1394 = vpop.permute.xlu0 %1393
        %1395 = vrot.lane.b32.xlu0 %v1095, 1
        %v1396 = vpop.permute.xlu0 %1395
        %1397 = vrot.lane.b32.xlu0 %v1099, 1
        %v1398 = vpop.permute.xlu0 %1397
        %1399 = vrot.lane.b32.xlu0 %v1103, 1
        %v1400 = vpop.permute.xlu0 %1399
        %1401 = vrot.lane.b32.xlu0 %v1107, 1
        %v1402 = vpop.permute.xlu0 %1401
        %1403 = vrot.lane.b32.xlu0 %v1096, 1
        %v1404 = vpop.permute.xlu0 %1403
        %1405 = vrot.lane.b32.xlu0 %v1100, 1
        %v1406 = vpop.permute.xlu0 %1405
        %1407 = vrot.lane.b32.xlu0 %v1104, 1
        %v1408 = vpop.permute.xlu0 %1407
        %1409 = vrot.lane.b32.xlu0 %v1108, 1
        %v1410 = vpop.permute.xlu0 %1409
        %1411 = vrot.lane.b32.xlu0 %v1097, 1
        %v1412 = vpop.permute.xlu0 %1411
        %1413 = vrot.lane.b32.xlu0 %v1101, 1
        %v1414 = vpop.permute.xlu0 %1413
        %1415 = vrot.lane.b32.xlu0 %v1105, 1
        %v1416 = vpop.permute.xlu0 %1415
        %1417 = vrot.lane.b32.xlu0 %v1109, 1
        %v1418 = vpop.permute.xlu0 %1417
        %vm1419 = vcmp.lt.s32.totalorder %v1143, 1
        %v1420 = vsel %vm1419, %v1404, %v1412
        %v1421 = vsel %vm1419, %v1406, %v1414
        %v1422 = vsel %vm1419, %v1408, %v1416
        %v1423 = vsel %vm1419, %v1410, %v1418
        %v1424 = vsel %vm1419, %v1396, %v1404
        %v1425 = vsel %vm1419, %v1398, %v1406
        %v1426 = vsel %vm1419, %v1400, %v1408
        %v1427 = vsel %vm1419, %v1402, %v1410
        %v1428 = vsel %vm1419, %v1388, %v1396
        %v1429 = vsel %vm1419, %v1390, %v1398
        %v1430 = vsel %vm1419, %v1392, %v1400
        %v1431 = vsel %vm1419, %v1394, %v1402
        %v1432 = vsel %vm1419, %v1412, %v1388
        %v1433 = vsel %vm1419, %v1414, %v1390
        %v1434 = vsel %vm1419, %v1416, %v1392
        %v1435 = vsel %vm1419, %v1418, %v1394
        %s1436 = scalar_lea.vmem %s1, 3
        %v1437 = vld [vmem:[%s1436] ss:$8 sm:$0xf]
        %v1439 = vperm.slane %v1437, 0
        %v1440 = vperm.slane %v1437, 1
        %v1441 = vperm.slane %v1437, 2
        %v1442 = vperm.slane %v1437, 3
        %v1447 = vmul.f32 %v1432, %v1439
        %v1448 = vmul.f32 %v1428, %v1440
        %v1449 = vmul.f32 %v1424, %v1441
        %v1450 = vmul.f32 %v1420, %v1442
        %v1451 = vmul.f32 %v1433, %v1439
        %v1452 = vmul.f32 %v1429, %v1440
        %v1453 = vmul.f32 %v1425, %v1441
        %v1454 = vmul.f32 %v1421, %v1442
        %v1455 = vmul.f32 %v1434, %v1439
        %v1456 = vmul.f32 %v1430, %v1440
        %v1457 = vmul.f32 %v1426, %v1441
        %v1458 = vmul.f32 %v1422, %v1442
        %v1459 = vmul.f32 %v1435, %v1439
        %v1460 = vmul.f32 %v1431, %v1440
        %v1461 = vmul.f32 %v1427, %v1441
        %v1462 = vmul.f32 %v1423, %v1442
        %v1463 = vpack.c.bf16 %v1448, %v1447
        %v1464 = vpack.c.bf16 %v1450, %v1449
        %v1465 = vpack.c.bf16 %v1452, %v1451
        %v1466 = vpack.c.bf16 %v1454, %v1453
        %v1467 = vpack.c.bf16 %v1456, %v1455
        %v1468 = vpack.c.bf16 %v1458, %v1457
        %v1469 = vpack.c.bf16 %v1460, %v1459
        %v1470 = vpack.c.bf16 %v1462, %v1461
        %1471 = vst [vmem:[#allocation2 + $0xc0] sm:$0xff] %v1463
        %1472 = vst [vmem:[#allocation2 + $0xc8] sm:$0xff] %v1464
        %1473 = vst [vmem:[#allocation2 + $0xd0] sm:$0xff] %v1465
        %1474 = vst [vmem:[#allocation2 + $0xd8] sm:$0xff] %v1466
        %1475 = vst [vmem:[#allocation2 + $0xe0] sm:$0xff] %v1467
        %1476 = vst [vmem:[#allocation2 + $0xe8] sm:$0xff] %v1468
        %1477 = vst [vmem:[#allocation2 + $0xf0] sm:$0xff] %v1469
        %1478 = vst [vmem:[#allocation2 + $0xf8] sm:$0xff] %v1470
        %v1479 = vpack.c.bf16 %v1095, %v1094
        %v1480 = vpack.c.bf16 %v1097, %v1096
        %v1481 = vpack.c.bf16 %v1099, %v1098
        %v1482 = vpack.c.bf16 %v1101, %v1100
        %v1483 = vpack.c.bf16 %v1103, %v1102
        %v1484 = vpack.c.bf16 %v1105, %v1104
        %v1485 = vpack.c.bf16 %v1107, %v1106
        %v1486 = vpack.c.bf16 %v1109, %v1108
        %1487 = vst [vmem:[#allocation2 + $0x100] sm:$0xff] %v1479
        %1488 = vst [vmem:[#allocation2 + $0x108] sm:$0xff] %v1480
        %1489 = vst [vmem:[#allocation2 + $0x110] sm:$0xff] %v1481
        %1490 = vst [vmem:[#allocation2 + $0x118] sm:$0xff] %v1482
        %1491 = vst [vmem:[#allocation2 + $0x120] sm:$0xff] %v1483
        %1492 = vst [vmem:[#allocation2 + $0x128] sm:$0xff] %v1484
        %1493 = vst [vmem:[#allocation2 + $0x130] sm:$0xff] %v1485
        %1494 = vst [vmem:[#allocation2 + $0x138] sm:$0xff] %v1486
        %1495 = vrot.lane.b32.xlu0 %v1094, 127
        %v1496 = vpop.permute.xlu0 %1495
        %1497 = vrot.lane.b32.xlu0 %v1098, 127
        %v1498 = vpop.permute.xlu0 %1497
        %1499 = vrot.lane.b32.xlu0 %v1102, 127
        %v1500 = vpop.permute.xlu0 %1499
        %1501 = vrot.lane.b32.xlu0 %v1106, 127
        %v1502 = vpop.permute.xlu0 %1501
        %1503 = vrot.lane.b32.xlu0 %v1095, 127
        %v1504 = vpop.permute.xlu0 %1503
        %1505 = vrot.lane.b32.xlu0 %v1099, 127
        %v1506 = vpop.permute.xlu0 %1505
        %1507 = vrot.lane.b32.xlu0 %v1103, 127
        %v1508 = vpop.permute.xlu0 %1507
        %1509 = vrot.lane.b32.xlu0 %v1107, 127
        %v1510 = vpop.permute.xlu0 %1509
        %1511 = vrot.lane.b32.xlu0 %v1096, 127
        %v1512 = vpop.permute.xlu0 %1511
        %1513 = vrot.lane.b32.xlu0 %v1100, 127
        %v1514 = vpop.permute.xlu0 %1513
        %1515 = vrot.lane.b32.xlu0 %v1104, 127
        %v1516 = vpop.permute.xlu0 %1515
        %1517 = vrot.lane.b32.xlu0 %v1108, 127
        %v1518 = vpop.permute.xlu0 %1517
        %1519 = vrot.lane.b32.xlu0 %v1097, 127
        %v1520 = vpop.permute.xlu0 %1519
        %1521 = vrot.lane.b32.xlu0 %v1101, 127
        %v1522 = vpop.permute.xlu0 %1521
        %1523 = vrot.lane.b32.xlu0 %v1105, 127
        %v1524 = vpop.permute.xlu0 %1523
        %1525 = vrot.lane.b32.xlu0 %v1109, 127
        %v1526 = vpop.permute.xlu0 %1525
        %vm1527 = vcmp.lt.s32.totalorder %v1143, 127
        %v1528 = vsel %vm1527, %v1512, %v1520
        %v1529 = vsel %vm1527, %v1514, %v1522
        %v1530 = vsel %vm1527, %v1516, %v1524
        %v1531 = vsel %vm1527, %v1518, %v1526
        %v1532 = vsel %vm1527, %v1504, %v1512
        %v1533 = vsel %vm1527, %v1506, %v1514
        %v1534 = vsel %vm1527, %v1508, %v1516
        %v1535 = vsel %vm1527, %v1510, %v1518
        %v1536 = vsel %vm1527, %v1496, %v1504
        %v1537 = vsel %vm1527, %v1498, %v1506
        %v1538 = vsel %vm1527, %v1500, %v1508
        %v1539 = vsel %vm1527, %v1502, %v1510
        %v1540 = vsel %vm1527, %v1520, %v1496
        %v1541 = vsel %vm1527, %v1522, %v1498
        %v1542 = vsel %vm1527, %v1524, %v1500
        %v1543 = vsel %vm1527, %v1526, %v1502
        %s1544 = scalar_lea.vmem %s1, 5
        %v1545 = vld [vmem:[%s1544] ss:$8 sm:$0xf]
        %v1547 = vperm.slane %v1545, 0
        %v1548 = vperm.slane %v1545, 1
        %v1549 = vperm.slane %v1545, 2
        %v1550 = vperm.slane %v1545, 3
        %v1555 = vmul.f32 %v1536, %v1547
        %v1556 = vmul.f32 %v1532, %v1548
        %v1557 = vmul.f32 %v1528, %v1549
        %v1558 = vmul.f32 %v1540, %v1550
        %v1559 = vmul.f32 %v1537, %v1547
        %v1560 = vmul.f32 %v1533, %v1548
        %v1561 = vmul.f32 %v1529, %v1549
        %v1562 = vmul.f32 %v1541, %v1550
        %v1563 = vmul.f32 %v1538, %v1547
        %v1564 = vmul.f32 %v1534, %v1548
        %v1565 = vmul.f32 %v1530, %v1549
        %v1566 = vmul.f32 %v1542, %v1550
        %v1567 = vmul.f32 %v1539, %v1547
        %v1568 = vmul.f32 %v1535, %v1548
        %v1569 = vmul.f32 %v1531, %v1549
        %v1570 = vmul.f32 %v1543, %v1550
        %v1571 = vpack.c.bf16 %v1556, %v1555
        %v1572 = vpack.c.bf16 %v1558, %v1557
        %v1573 = vpack.c.bf16 %v1560, %v1559
        %v1574 = vpack.c.bf16 %v1562, %v1561
        %v1575 = vpack.c.bf16 %v1564, %v1563
        %v1576 = vpack.c.bf16 %v1566, %v1565
        %v1577 = vpack.c.bf16 %v1568, %v1567
        %v1578 = vpack.c.bf16 %v1570, %v1569
        %1579 = vst [vmem:[#allocation2 + $0x140] sm:$0xff] %v1571
        %1580 = vst [vmem:[#allocation2 + $0x148] sm:$0xff] %v1572
        %1581 = vst [vmem:[#allocation2 + $0x150] sm:$0xff] %v1573
        %1582 = vst [vmem:[#allocation2 + $0x158] sm:$0xff] %v1574
        %1583 = vst [vmem:[#allocation2 + $0x160] sm:$0xff] %v1575
        %1584 = vst [vmem:[#allocation2 + $0x168] sm:$0xff] %v1576
        %1585 = vst [vmem:[#allocation2 + $0x170] sm:$0xff] %v1577
        %1586 = vst [vmem:[#allocation2 + $0x178] sm:$0xff] %v1578
        %1587 = vrot.lane.b32.xlu0 %v1094, 113
        %v1588 = vpop.permute.xlu0 %1587
        %1589 = vrot.lane.b32.xlu0 %v1098, 113
        %v1590 = vpop.permute.xlu0 %1589
        %1591 = vrot.lane.b32.xlu0 %v1102, 113
        %v1592 = vpop.permute.xlu0 %1591
        %1593 = vrot.lane.b32.xlu0 %v1106, 113
        %v1594 = vpop.permute.xlu0 %1593
        %1595 = vrot.lane.b32.xlu0 %v1095, 113
        %v1596 = vpop.permute.xlu0 %1595
        %1597 = vrot.lane.b32.xlu0 %v1099, 113
        %v1598 = vpop.permute.xlu0 %1597
        %1599 = vrot.lane.b32.xlu0 %v1103, 113
        %v1600 = vpop.permute.xlu0 %1599
        %1601 = vrot.lane.b32.xlu0 %v1107, 113
        %v1602 = vpop.permute.xlu0 %1601
        %1603 = vrot.lane.b32.xlu0 %v1096, 113
        %v1604 = vpop.permute.xlu0 %1603
        %1605 = vrot.lane.b32.xlu0 %v1100, 113
        %v1606 = vpop.permute.xlu0 %1605
        %1607 = vrot.lane.b32.xlu0 %v1104, 113
        %v1608 = vpop.permute.xlu0 %1607
        %1609 = vrot.lane.b32.xlu0 %v1108, 113
        %v1610 = vpop.permute.xlu0 %1609
        %1611 = vrot.lane.b32.xlu0 %v1097, 113
        %v1612 = vpop.permute.xlu0 %1611
        %1613 = vrot.lane.b32.xlu0 %v1101, 113
        %v1614 = vpop.permute.xlu0 %1613
        %1615 = vrot.lane.b32.xlu0 %v1105, 113
        %v1616 = vpop.permute.xlu0 %1615
        %1617 = vrot.lane.b32.xlu0 %v1109, 113
        %v1618 = vpop.permute.xlu0 %1617
        %vm1619 = vcmp.lt.s32.totalorder %v1143, 113
        %v1620 = vsel %vm1619, %v1604, %v1612
        %v1621 = vsel %vm1619, %v1606, %v1614
        %v1622 = vsel %vm1619, %v1608, %v1616
        %v1623 = vsel %vm1619, %v1610, %v1618
        %v1624 = vsel %vm1619, %v1596, %v1604
        %v1625 = vsel %vm1619, %v1598, %v1606
        %v1626 = vsel %vm1619, %v1600, %v1608
        %v1627 = vsel %vm1619, %v1602, %v1610
        %v1628 = vsel %vm1619, %v1588, %v1596
        %v1629 = vsel %vm1619, %v1590, %v1598
        %v1630 = vsel %vm1619, %v1592, %v1600
        %v1631 = vsel %vm1619, %v1594, %v1602
        %v1632 = vsel %vm1619, %v1612, %v1588
        %v1633 = vsel %vm1619, %v1614, %v1590
        %v1634 = vsel %vm1619, %v1616, %v1592
        %v1635 = vsel %vm1619, %v1618, %v1594
        %s1636 = scalar_lea.vmem %s1, 6
        %v1637 = vld [vmem:[%s1636] ss:$8 sm:$0xf]
        %v1639 = vperm.slane %v1637, 0
        %v1640 = vperm.slane %v1637, 1
        %v1641 = vperm.slane %v1637, 2
        %v1642 = vperm.slane %v1637, 3
        %v1647 = vmul.f32 %v1628, %v1639
        %v1648 = vmul.f32 %v1624, %v1640
        %v1649 = vmul.f32 %v1620, %v1641
        %v1650 = vmul.f32 %v1632, %v1642
        %v1651 = vmul.f32 %v1629, %v1639
        %v1652 = vmul.f32 %v1625, %v1640
        %v1653 = vmul.f32 %v1621, %v1641
        %v1654 = vmul.f32 %v1633, %v1642
        %v1655 = vmul.f32 %v1630, %v1639
        %v1656 = vmul.f32 %v1626, %v1640
        %v1657 = vmul.f32 %v1622, %v1641
        %v1658 = vmul.f32 %v1634, %v1642
        %v1659 = vmul.f32 %v1631, %v1639
        %v1660 = vmul.f32 %v1627, %v1640
        %v1661 = vmul.f32 %v1623, %v1641
        %v1662 = vmul.f32 %v1635, %v1642
        %v1663 = vpack.c.bf16 %v1648, %v1647
        %v1664 = vpack.c.bf16 %v1650, %v1649
        %v1665 = vpack.c.bf16 %v1652, %v1651
        %v1666 = vpack.c.bf16 %v1654, %v1653
        %v1667 = vpack.c.bf16 %v1656, %v1655
        %v1668 = vpack.c.bf16 %v1658, %v1657
        %v1669 = vpack.c.bf16 %v1660, %v1659
        %v1670 = vpack.c.bf16 %v1662, %v1661
        %1671 = vst [vmem:[#allocation2 + $0x180] sm:$0xff] %v1663
        %1672 = vst [vmem:[#allocation2 + $0x188] sm:$0xff] %v1664
        %1673 = vst [vmem:[#allocation2 + $0x190] sm:$0xff] %v1665
        %1674 = vst [vmem:[#allocation2 + $0x198] sm:$0xff] %v1666
        %1675 = vst [vmem:[#allocation2 + $0x1a0] sm:$0xff] %v1667
        %1676 = vst [vmem:[#allocation2 + $0x1a8] sm:$0xff] %v1668
        %1677 = vst [vmem:[#allocation2 + $0x1b0] sm:$0xff] %v1669
        %1678 = vst [vmem:[#allocation2 + $0x1b8] sm:$0xff] %v1670
        %1679 = vrot.lane.b32.xlu0 %v1094, 112
        %v1680 = vpop.permute.xlu0 %1679
        %1681 = vrot.lane.b32.xlu0 %v1098, 112
        %v1682 = vpop.permute.xlu0 %1681
        %1683 = vrot.lane.b32.xlu0 %v1102, 112
        %v1684 = vpop.permute.xlu0 %1683
        %1685 = vrot.lane.b32.xlu0 %v1106, 112
        %v1686 = vpop.permute.xlu0 %1685
        %1687 = vrot.lane.b32.xlu0 %v1095, 112
        %v1688 = vpop.permute.xlu0 %1687
        %1689 = vrot.lane.b32.xlu0 %v1099, 112
        %v1690 = vpop.permute.xlu0 %1689
        %1691 = vrot.lane.b32.xlu0 %v1103, 112
        %v1692 = vpop.permute.xlu0 %1691
        %1693 = vrot.lane.b32.xlu0 %v1107, 112
        %v1694 = vpop.permute.xlu0 %1693
        %1695 = vrot.lane.b32.xlu0 %v1096, 112
        %v1696 = vpop.permute.xlu0 %1695
        %1697 = vrot.lane.b32.xlu0 %v1100, 112
        %v1698 = vpop.permute.xlu0 %1697
        %1699 = vrot.lane.b32.xlu0 %v1104, 112
        %v1700 = vpop.permute.xlu0 %1699
        %1701 = vrot.lane.b32.xlu0 %v1108, 112
        %v1702 = vpop.permute.xlu0 %1701
        %1703 = vrot.lane.b32.xlu0 %v1097, 112
        %v1704 = vpop.permute.xlu0 %1703
        %1705 = vrot.lane.b32.xlu0 %v1101, 112
        %v1706 = vpop.permute.xlu0 %1705
        %1707 = vrot.lane.b32.xlu0 %v1105, 112
        %v1708 = vpop.permute.xlu0 %1707
        %1709 = vrot.lane.b32.xlu0 %v1109, 112
        %v1710 = vpop.permute.xlu0 %1709
        %vm1711 = vcmp.lt.s32.totalorder %v1143, 112
        %v1712 = vsel %vm1711, %v1696, %v1704
        %v1713 = vsel %vm1711, %v1698, %v1706
        %v1714 = vsel %vm1711, %v1700, %v1708
        %v1715 = vsel %vm1711, %v1702, %v1710
        %v1716 = vsel %vm1711, %v1688, %v1696
        %v1717 = vsel %vm1711, %v1690, %v1698
        %v1718 = vsel %vm1711, %v1692, %v1700
        %v1719 = vsel %vm1711, %v1694, %v1702
        %v1720 = vsel %vm1711, %v1680, %v1688
        %v1721 = vsel %vm1711, %v1682, %v1690
        %v1722 = vsel %vm1711, %v1684, %v1692
        %v1723 = vsel %vm1711, %v1686, %v1694
        %v1724 = vsel %vm1711, %v1704, %v1680
        %v1725 = vsel %vm1711, %v1706, %v1682
        %v1726 = vsel %vm1711, %v1708, %v1684
        %v1727 = vsel %vm1711, %v1710, %v1686
        %s1728 = scalar_lea.vmem %s1, 7
        %v1729 = vld [vmem:[%s1728] ss:$8 sm:$0xf]
        %v1731 = vperm.slane %v1729, 0
        %v1732 = vperm.slane %v1729, 1
        %v1733 = vperm.slane %v1729, 2
        %v1734 = vperm.slane %v1729, 3
        %v1739 = vmul.f32 %v1720, %v1731
        %v1740 = vmul.f32 %v1716, %v1732
        %v1741 = vmul.f32 %v1712, %v1733
        %v1742 = vmul.f32 %v1724, %v1734
        %v1743 = vmul.f32 %v1721, %v1731
        %v1744 = vmul.f32 %v1717, %v1732
        %v1745 = vmul.f32 %v1713, %v1733
        %v1746 = vmul.f32 %v1725, %v1734
        %v1747 = vmul.f32 %v1722, %v1731
        %v1748 = vmul.f32 %v1718, %v1732
        %v1749 = vmul.f32 %v1714, %v1733
        %v1750 = vmul.f32 %v1726, %v1734
        %v1751 = vmul.f32 %v1723, %v1731
        %v1752 = vmul.f32 %v1719, %v1732
        %v1753 = vmul.f32 %v1715, %v1733
        %v1754 = vmul.f32 %v1727, %v1734
        %v1755 = vpack.c.bf16 %v1740, %v1739
        %v1756 = vpack.c.bf16 %v1742, %v1741
        %v1757 = vpack.c.bf16 %v1744, %v1743
        %v1758 = vpack.c.bf16 %v1746, %v1745
        %v1759 = vpack.c.bf16 %v1748, %v1747
        %v1760 = vpack.c.bf16 %v1750, %v1749
        %v1761 = vpack.c.bf16 %v1752, %v1751
        %v1762 = vpack.c.bf16 %v1754, %v1753
        %1763 = vst [vmem:[#allocation2 + $0x1c0] sm:$0xff] %v1755
        %1764 = vst [vmem:[#allocation2 + $0x1c8] sm:$0xff] %v1756
        %1765 = vst [vmem:[#allocation2 + $0x1d0] sm:$0xff] %v1757
        %1766 = vst [vmem:[#allocation2 + $0x1d8] sm:$0xff] %v1758
        %1767 = vst [vmem:[#allocation2 + $0x1e0] sm:$0xff] %v1759
        %1768 = vst [vmem:[#allocation2 + $0x1e8] sm:$0xff] %v1760
        %1769 = vst [vmem:[#allocation2 + $0x1f0] sm:$0xff] %v1761
        %1770 = vst [vmem:[#allocation2 + $0x1f8] sm:$0xff] %v1762
        %1771 = vrot.lane.b32.xlu0 %v1094, 111
        %v1772 = vpop.permute.xlu0 %1771
        %1773 = vrot.lane.b32.xlu0 %v1098, 111
        %v1774 = vpop.permute.xlu0 %1773
        %1775 = vrot.lane.b32.xlu0 %v1102, 111
        %v1776 = vpop.permute.xlu0 %1775
        %1777 = vrot.lane.b32.xlu0 %v1106, 111
        %v1778 = vpop.permute.xlu0 %1777
        %1779 = vrot.lane.b32.xlu0 %v1095, 111
        %v1780 = vpop.permute.xlu0 %1779
        %1781 = vrot.lane.b32.xlu0 %v1099, 111
        %v1782 = vpop.permute.xlu0 %1781
        %1783 = vrot.lane.b32.xlu0 %v1103, 111
        %v1784 = vpop.permute.xlu0 %1783
        %1785 = vrot.lane.b32.xlu0 %v1107, 111
        %v1786 = vpop.permute.xlu0 %1785
        %1787 = vrot.lane.b32.xlu0 %v1096, 111
        %v1788 = vpop.permute.xlu0 %1787
        %1789 = vrot.lane.b32.xlu0 %v1100, 111
        %v1790 = vpop.permute.xlu0 %1789
        %1791 = vrot.lane.b32.xlu0 %v1104, 111
        %v1792 = vpop.permute.xlu0 %1791
        %1793 = vrot.lane.b32.xlu0 %v1108, 111
        %v1794 = vpop.permute.xlu0 %1793
        %1795 = vrot.lane.b32.xlu0 %v1097, 111
        %v1796 = vpop.permute.xlu0 %1795
        %1797 = vrot.lane.b32.xlu0 %v1101, 111
        %v1798 = vpop.permute.xlu0 %1797
        %1799 = vrot.lane.b32.xlu0 %v1105, 111
        %v1800 = vpop.permute.xlu0 %1799
        %1801 = vrot.lane.b32.xlu0 %v1109, 111
        %v1802 = vpop.permute.xlu0 %1801
        %vm1803 = vcmp.lt.s32.totalorder %v1143, 111
        %v1804 = vsel %vm1803, %v1788, %v1796
        %v1805 = vsel %vm1803, %v1790, %v1798
        %v1806 = vsel %vm1803, %v1792, %v1800
        %v1807 = vsel %vm1803, %v1794, %v1802
        %v1808 = vsel %vm1803, %v1780, %v1788
        %v1809 = vsel %vm1803, %v1782, %v1790
        %v1810 = vsel %vm1803, %v1784, %v1792
        %v1811 = vsel %vm1803, %v1786, %v1794
        %v1812 = vsel %vm1803, %v1772, %v1780
        %v1813 = vsel %vm1803, %v1774, %v1782
        %v1814 = vsel %vm1803, %v1776, %v1784
        %v1815 = vsel %vm1803, %v1778, %v1786
        %v1816 = vsel %vm1803, %v1796, %v1772
        %v1817 = vsel %vm1803, %v1798, %v1774
        %v1818 = vsel %vm1803, %v1800, %v1776
        %v1819 = vsel %vm1803, %v1802, %v1778
        %s1820 = scalar_lea.vmem %s1, 32
        %v1821 = vld [vmem:[%s1820] ss:$8 sm:$0xf]
        %v1823 = vperm.slane %v1821, 0
        %v1824 = vperm.slane %v1821, 1
        %v1825 = vperm.slane %v1821, 2
        %v1826 = vperm.slane %v1821, 3
        %v1831 = vmul.f32 %v1812, %v1823
        %v1832 = vmul.f32 %v1808, %v1824
        %v1833 = vmul.f32 %v1804, %v1825
        %v1834 = vmul.f32 %v1816, %v1826
        %v1835 = vmul.f32 %v1813, %v1823
        %v1836 = vmul.f32 %v1809, %v1824
        %v1837 = vmul.f32 %v1805, %v1825
        %v1838 = vmul.f32 %v1817, %v1826
        %v1839 = vmul.f32 %v1814, %v1823
        %v1840 = vmul.f32 %v1810, %v1824
        %v1841 = vmul.f32 %v1806, %v1825
        %v1842 = vmul.f32 %v1818, %v1826
        %v1843 = vmul.f32 %v1815, %v1823
        %v1844 = vmul.f32 %v1811, %v1824
        %v1845 = vmul.f32 %v1807, %v1825
        %v1846 = vmul.f32 %v1819, %v1826
        %v1847 = vpack.c.bf16 %v1832, %v1831
        %v1848 = vpack.c.bf16 %v1834, %v1833
        %v1849 = vpack.c.bf16 %v1836, %v1835
        %v1850 = vpack.c.bf16 %v1838, %v1837
        %v1851 = vpack.c.bf16 %v1840, %v1839
        %v1852 = vpack.c.bf16 %v1842, %v1841
        %v1853 = vpack.c.bf16 %v1844, %v1843
        %v1854 = vpack.c.bf16 %v1846, %v1845
        %1855 = vst [vmem:[#allocation2 + $0x200] sm:$0xff] %v1847
        %1856 = vst [vmem:[#allocation2 + $0x208] sm:$0xff] %v1848
        %1857 = vst [vmem:[#allocation2 + $0x210] sm:$0xff] %v1849
        %1858 = vst [vmem:[#allocation2 + $0x218] sm:$0xff] %v1850
        %1859 = vst [vmem:[#allocation2 + $0x220] sm:$0xff] %v1851
        %1860 = vst [vmem:[#allocation2 + $0x228] sm:$0xff] %v1852
        %1861 = vst [vmem:[#allocation2 + $0x230] sm:$0xff] %v1853
        %1862 = vst [vmem:[#allocation2 + $0x238] sm:$0xff] %v1854
        %v1863 = vld [vmem:[%s3] sm:$0xff]
        %v1864 = vld [vmem:[%s3 + $0x8] sm:$0xf]
        %v1865 = vld [vmem:[%s3 + $0xc] sm:$0xff]
        %v1866 = vld [vmem:[%s3 + $0x14] sm:$0xf]
        %v1867 = vld [vmem:[%s3 + $0x18] sm:$0xff]
        %v1868 = vld [vmem:[%s3 + $0x20] sm:$0xf]
        %v1869 = vld [vmem:[%s3 + $0x24] sm:$0xff]
        %v1870 = vld [vmem:[%s3 + $0x2c] sm:$0xf]
        %v1871 = vld [vmem:[#allocation2] sm:$0xff]
        %v1872 = vld [vmem:[#allocation2 + $0x8] sm:$0xff]
        %v1873 = vld [vmem:[#allocation2 + $0x10] sm:$0xff]
        %v1874 = vld [vmem:[#allocation2 + $0x18] sm:$0xff]
        %v1875 = vld [vmem:[#allocation2 + $0x20] sm:$0xff]
        %v1876 = vld [vmem:[#allocation2 + $0x28] sm:$0xff]
        %v1877 = vld [vmem:[#allocation2 + $0x30] sm:$0xff]
        %v1878 = vld [vmem:[#allocation2 + $0x38] sm:$0xff]
        %v1879 = vld [vmem:[#allocation2 + $0x40] sm:$0xff]
        %v1880 = vld [vmem:[#allocation2 + $0x48] sm:$0xff]
        %v1881 = vld [vmem:[#allocation2 + $0x50] sm:$0xff]
        %v1882 = vld [vmem:[#allocation2 + $0x58] sm:$0xff]
        %v1883 = vld [vmem:[#allocation2 + $0x60] sm:$0xff]
        %v1884 = vld [vmem:[#allocation2 + $0x68] sm:$0xff]
        %v1885 = vld [vmem:[#allocation2 + $0x70] sm:$0xff]
        %v1886 = vld [vmem:[#allocation2 + $0x78] sm:$0xff]
        %v1887 = vld [vmem:[#allocation2 + $0x80] sm:$0xff]
        %v1888 = vld [vmem:[#allocation2 + $0x88] sm:$0xff]
        %v1889 = vld [vmem:[#allocation2 + $0x90] sm:$0xff]
        %v1890 = vld [vmem:[#allocation2 + $0x98] sm:$0xff]
        %v1891 = vld [vmem:[#allocation2 + $0xa0] sm:$0xff]
        %v1892 = vld [vmem:[#allocation2 + $0xa8] sm:$0xff]
        %v1893 = vld [vmem:[#allocation2 + $0xb0] sm:$0xff]
        %v1894 = vld [vmem:[#allocation2 + $0xb8] sm:$0xff]
        %v1895 = vld [vmem:[#allocation2 + $0xc0] sm:$0xff]
        %v1896 = vld [vmem:[#allocation2 + $0xc8] sm:$0xff]
        %v1897 = vld [vmem:[#allocation2 + $0xd0] sm:$0xff]
        %v1898 = vld [vmem:[#allocation2 + $0xd8] sm:$0xff]
        %v1899 = vld [vmem:[#allocation2 + $0xe0] sm:$0xff]
        %v1900 = vld [vmem:[#allocation2 + $0xe8] sm:$0xff]
        %v1901 = vld [vmem:[#allocation2 + $0xf0] sm:$0xff]
        %v1902 = vld [vmem:[#allocation2 + $0xf8] sm:$0xff]
        %v1903 = vld [vmem:[#allocation2 + $0x100] sm:$0xff]
        %v1904 = vld [vmem:[#allocation2 + $0x108] sm:$0xff]
        %v1905 = vld [vmem:[#allocation2 + $0x110] sm:$0xff]
        %v1906 = vld [vmem:[#allocation2 + $0x118] sm:$0xff]
        %v1907 = vld [vmem:[#allocation2 + $0x120] sm:$0xff]
        %v1908 = vld [vmem:[#allocation2 + $0x128] sm:$0xff]
        %v1909 = vld [vmem:[#allocation2 + $0x130] sm:$0xff]
        %v1910 = vld [vmem:[#allocation2 + $0x138] sm:$0xff]
        %v1911 = vld [vmem:[#allocation2 + $0x140] sm:$0xff]
        %v1912 = vld [vmem:[#allocation2 + $0x148] sm:$0xff]
        %v1913 = vld [vmem:[#allocation2 + $0x150] sm:$0xff]
        %v1914 = vld [vmem:[#allocation2 + $0x158] sm:$0xff]
        %v1915 = vld [vmem:[#allocation2 + $0x160] sm:$0xff]
        %v1916 = vld [vmem:[#allocation2 + $0x168] sm:$0xff]
        %v1917 = vld [vmem:[#allocation2 + $0x170] sm:$0xff]
        %v1918 = vld [vmem:[#allocation2 + $0x178] sm:$0xff]
        %v1919 = vld [vmem:[#allocation2 + $0x180] sm:$0xff]
        %v1920 = vld [vmem:[#allocation2 + $0x188] sm:$0xff]
        %v1921 = vld [vmem:[#allocation2 + $0x190] sm:$0xff]
        %v1922 = vld [vmem:[#allocation2 + $0x198] sm:$0xff]
        %v1923 = vld [vmem:[#allocation2 + $0x1a0] sm:$0xff]
        %v1924 = vld [vmem:[#allocation2 + $0x1a8] sm:$0xff]
        %v1925 = vld [vmem:[#allocation2 + $0x1b0] sm:$0xff]
        %v1926 = vld [vmem:[#allocation2 + $0x1b8] sm:$0xff]
        %v1927 = vld [vmem:[#allocation2 + $0x1c0] sm:$0xff]
        %v1928 = vld [vmem:[#allocation2 + $0x1c8] sm:$0xff]
        %v1929 = vld [vmem:[#allocation2 + $0x1d0] sm:$0xff]
        %v1930 = vld [vmem:[#allocation2 + $0x1d8] sm:$0xff]
        %v1931 = vld [vmem:[#allocation2 + $0x1e0] sm:$0xff]
        %v1932 = vld [vmem:[#allocation2 + $0x1e8] sm:$0xff]
        %v1933 = vld [vmem:[#allocation2 + $0x1f0] sm:$0xff]
        %v1934 = vld [vmem:[#allocation2 + $0x1f8] sm:$0xff]
        %v1935 = vld [vmem:[#allocation2 + $0x200] sm:$0xff]
        %v1936 = vld [vmem:[#allocation2 + $0x208] sm:$0xff]
        %v1937 = vld [vmem:[#allocation2 + $0x210] sm:$0xff]
        %v1938 = vld [vmem:[#allocation2 + $0x218] sm:$0xff]
        %v1939 = vld [vmem:[#allocation2 + $0x220] sm:$0xff]
        %v1940 = vld [vmem:[#allocation2 + $0x228] sm:$0xff]
        %v1941 = vld [vmem:[#allocation2 + $0x230] sm:$0xff]
        %v1942 = vld [vmem:[#allocation2 + $0x238] sm:$0xff]
        %1944 = vset.pattern.permute.xlu0 10
        %1945 = vperm.xlu0 %1944, %v431
        %v1946 = vpop.permute.xlu0 %1945
        %1949 = vset.pattern.permute.xlu0 10
        %1950 = vperm.xlu0 %1949, %v432
        %v1951 = vpop.permute.xlu0 %1950
        %1954 = vset.pattern.permute.xlu0 10
        %1955 = vperm.xlu0 %1954, %v433
        %v1956 = vpop.permute.xlu0 %1955
        %1959 = vset.pattern.permute.xlu0 10
        %1960 = vperm.xlu0 %1959, %v434
        %v1961 = vpop.permute.xlu0 %1960
        %v1971 = vunpack.c.l.b16 %v1863
        %v1972 = vunpack.c.h.b16 %v1863
        %v1973 = vunpack.c.l.b16 %v1864
        %v1974 = vunpack.c.l.b16 %v1865
        %v1975 = vunpack.c.h.b16 %v1865
        %v1976 = vunpack.c.l.b16 %v1866
        %v1977 = vunpack.c.l.b16 %v1867
        %v1978 = vunpack.c.h.b16 %v1867
        %v1979 = vunpack.c.l.b16 %v1868
        %v1980 = vunpack.c.l.b16 %v1869
        %v1981 = vunpack.c.h.b16 %v1869
        %v1982 = vunpack.c.l.b16 %v1870
        %v1983 = vpack.c.b16 %v1974, %v1971
        %v1984 = vpack.c.b16 %v1975, %v1972
        %v1985 = vpack.c.b16 %v1976, %v1973
        %v1986 = vpack.c.b16 %v1980, %v1977
        %v1987 = vpack.c.b16 %v1981, %v1978
        %v1988 = vpack.c.b16 %v1982, %v1979
        %v2065 = vunpack.c.l.b16 %v1871
        %v2066 = vunpack.c.h.b16 %v1871
        %v2067 = vunpack.c.l.b16 %v1872
        %v2068 = vunpack.c.h.b16 %v1872
        %v2069 = vunpack.c.l.b16 %v1873
        %v2070 = vunpack.c.h.b16 %v1873
        %v2071 = vunpack.c.l.b16 %v1874
        %v2072 = vunpack.c.h.b16 %v1874
        %v2073 = vunpack.c.l.b16 %v1875
        %v2074 = vunpack.c.h.b16 %v1875
        %v2075 = vunpack.c.l.b16 %v1876
        %v2076 = vunpack.c.h.b16 %v1876
        %v2077 = vunpack.c.l.b16 %v1877
        %v2078 = vunpack.c.h.b16 %v1877
        %v2079 = vunpack.c.l.b16 %v1878
        %v2080 = vunpack.c.h.b16 %v1878
        %v2081 = vunpack.c.l.b16 %v1879
        %v2082 = vunpack.c.h.b16 %v1879
        %v2083 = vunpack.c.l.b16 %v1880
        %v2084 = vunpack.c.h.b16 %v1880
        %v2085 = vunpack.c.l.b16 %v1881
        %v2086 = vunpack.c.h.b16 %v1881
        %v2087 = vunpack.c.l.b16 %v1882
        %v2088 = vunpack.c.h.b16 %v1882
        %v2089 = vunpack.c.l.b16 %v1883
        %v2090 = vunpack.c.h.b16 %v1883
        %v2091 = vunpack.c.l.b16 %v1884
        %v2092 = vunpack.c.h.b16 %v1884
        %v2093 = vunpack.c.l.b16 %v1885
        %v2094 = vunpack.c.h.b16 %v1885
        %v2095 = vunpack.c.l.b16 %v1886
        %v2096 = vunpack.c.h.b16 %v1886
        %v2097 = vunpack.c.l.b16 %v1887
        %v2098 = vunpack.c.h.b16 %v1887
        %v2099 = vunpack.c.l.b16 %v1888
        %v2100 = vunpack.c.h.b16 %v1888
        %v2101 = vunpack.c.l.b16 %v1889
        %v2102 = vunpack.c.h.b16 %v1889
        %v2103 = vunpack.c.l.b16 %v1890
        %v2104 = vunpack.c.h.b16 %v1890
        %v2105 = vunpack.c.l.b16 %v1891
        %v2106 = vunpack.c.h.b16 %v1891
        %v2107 = vunpack.c.l.b16 %v1892
        %v2108 = vunpack.c.h.b16 %v1892
        %v2109 = vunpack.c.l.b16 %v1893
        %v2110 = vunpack.c.h.b16 %v1893
        %v2111 = vunpack.c.l.b16 %v1894
        %v2112 = vunpack.c.h.b16 %v1894
        %v2113 = vunpack.c.l.b16 %v1895
        %v2114 = vunpack.c.h.b16 %v1895
        %v2115 = vunpack.c.l.b16 %v1896
        %v2116 = vunpack.c.h.b16 %v1896
        %v2117 = vunpack.c.l.b16 %v1897
        %v2118 = vunpack.c.h.b16 %v1897
        %v2119 = vunpack.c.l.b16 %v1898
        %v2120 = vunpack.c.h.b16 %v1898
        %v2121 = vunpack.c.l.b16 %v1899
        %v2122 = vunpack.c.h.b16 %v1899
        %v2123 = vunpack.c.l.b16 %v1900
        %v2124 = vunpack.c.h.b16 %v1900
        %v2125 = vunpack.c.l.b16 %v1901
        %v2126 = vunpack.c.h.b16 %v1901
        %v2127 = vunpack.c.l.b16 %v1902
        %v2128 = vunpack.c.h.b16 %v1902
        %v2129 = vunpack.c.l.b16 %v1903
        %v2130 = vunpack.c.h.b16 %v1903
        %v2131 = vunpack.c.l.b16 %v1904
        %v2132 = vunpack.c.h.b16 %v1904
        %v2133 = vunpack.c.l.b16 %v1905
        %v2134 = vunpack.c.h.b16 %v1905
        %v2135 = vunpack.c.l.b16 %v1906
        %v2136 = vunpack.c.h.b16 %v1906
        %v2137 = vunpack.c.l.b16 %v1907
        %v2138 = vunpack.c.h.b16 %v1907
        %v2139 = vunpack.c.l.b16 %v1908
        %v2140 = vunpack.c.h.b16 %v1908
        %v2141 = vunpack.c.l.b16 %v1909
        %v2142 = vunpack.c.h.b16 %v1909
        %v2143 = vunpack.c.l.b16 %v1910
        %v2144 = vunpack.c.h.b16 %v1910
        %v2145 = vunpack.c.l.b16 %v1911
        %v2146 = vunpack.c.h.b16 %v1911
        %v2147 = vunpack.c.l.b16 %v1912
        %v2148 = vunpack.c.h.b16 %v1912
        %v2149 = vunpack.c.l.b16 %v1913
        %v2150 = vunpack.c.h.b16 %v1913
        %v2151 = vunpack.c.l.b16 %v1914
        %v2152 = vunpack.c.h.b16 %v1914
        %v2153 = vunpack.c.l.b16 %v1915
        %v2154 = vunpack.c.h.b16 %v1915
        %v2155 = vunpack.c.l.b16 %v1916
        %v2156 = vunpack.c.h.b16 %v1916
        %v2157 = vunpack.c.l.b16 %v1917
        %v2158 = vunpack.c.h.b16 %v1917
        %v2159 = vunpack.c.l.b16 %v1918
        %v2160 = vunpack.c.h.b16 %v1918
        %v2161 = vunpack.c.l.b16 %v1919
        %v2162 = vunpack.c.h.b16 %v1919
        %v2163 = vunpack.c.l.b16 %v1920
        %v2164 = vunpack.c.h.b16 %v1920
        %v2165 = vunpack.c.l.b16 %v1921
        %v2166 = vunpack.c.h.b16 %v1921
        %v2167 = vunpack.c.l.b16 %v1922
        %v2168 = vunpack.c.h.b16 %v1922
        %v2169 = vunpack.c.l.b16 %v1923
        %v2170 = vunpack.c.h.b16 %v1923
        %v2171 = vunpack.c.l.b16 %v1924
        %v2172 = vunpack.c.h.b16 %v1924
        %v2173 = vunpack.c.l.b16 %v1925
        %v2174 = vunpack.c.h.b16 %v1925
        %v2175 = vunpack.c.l.b16 %v1926
        %v2176 = vunpack.c.h.b16 %v1926
        %v2177 = vunpack.c.l.b16 %v1927
        %v2178 = vunpack.c.h.b16 %v1927
        %v2179 = vunpack.c.l.b16 %v1928
        %v2180 = vunpack.c.h.b16 %v1928
        %v2181 = vunpack.c.l.b16 %v1929
        %v2182 = vunpack.c.h.b16 %v1929
        %v2183 = vunpack.c.l.b16 %v1930
        %v2184 = vunpack.c.h.b16 %v1930
        %v2185 = vunpack.c.l.b16 %v1931
        %v2186 = vunpack.c.h.b16 %v1931
        %v2187 = vunpack.c.l.b16 %v1932
        %v2188 = vunpack.c.h.b16 %v1932
        %v2189 = vunpack.c.l.b16 %v1933
        %v2190 = vunpack.c.h.b16 %v1933
        %v2191 = vunpack.c.l.b16 %v1934
        %v2192 = vunpack.c.h.b16 %v1934
        %v2193 = vunpack.c.l.b16 %v1935
        %v2194 = vunpack.c.h.b16 %v1935
        %v2195 = vunpack.c.l.b16 %v1936
        %v2196 = vunpack.c.h.b16 %v1936
        %v2197 = vunpack.c.l.b16 %v1937
        %v2198 = vunpack.c.h.b16 %v1937
        %v2199 = vunpack.c.l.b16 %v1938
        %v2200 = vunpack.c.h.b16 %v1938
        %v2201 = vunpack.c.l.b16 %v1939
        %v2202 = vunpack.c.h.b16 %v1939
        %v2203 = vunpack.c.l.b16 %v1940
        %v2204 = vunpack.c.h.b16 %v1940
        %v2205 = vunpack.c.l.b16 %v1941
        %v2206 = vunpack.c.h.b16 %v1941
        %v2207 = vunpack.c.l.b16 %v1942
        %v2208 = vunpack.c.h.b16 %v1942
        %v2209 = vpack.c.b16 %v2069, %v2065
        %v2210 = vpack.c.b16 %v2070, %v2066
        %v2211 = vpack.c.b16 %v2071, %v2067
        %v2212 = vpack.c.b16 %v2072, %v2068
        %v2213 = vpack.c.b16 %v2077, %v2073
        %v2214 = vpack.c.b16 %v2078, %v2074
        %v2215 = vpack.c.b16 %v2079, %v2075
        %v2216 = vpack.c.b16 %v2080, %v2076
        %v2217 = vpack.c.b16 %v2085, %v2081
        %v2218 = vpack.c.b16 %v2086, %v2082
        %v2219 = vpack.c.b16 %v2087, %v2083
        %v2220 = vpack.c.b16 %v2088, %v2084
        %v2221 = vpack.c.b16 %v2093, %v2089
        %v2222 = vpack.c.b16 %v2094, %v2090
        %v2223 = vpack.c.b16 %v2095, %v2091
        %v2224 = vpack.c.b16 %v2096, %v2092
        %v2225 = vpack.c.b16 %v2101, %v2097
        %v2226 = vpack.c.b16 %v2102, %v2098
        %v2227 = vpack.c.b16 %v2103, %v2099
        %v2228 = vpack.c.b16 %v2104, %v2100
        %v2229 = vpack.c.b16 %v2109, %v2105
        %v2230 = vpack.c.b16 %v2110, %v2106
        %v2231 = vpack.c.b16 %v2111, %v2107
        %v2232 = vpack.c.b16 %v2112, %v2108
        %v2233 = vpack.c.b16 %v2117, %v2113
        %v2234 = vpack.c.b16 %v2118, %v2114
        %v2235 = vpack.c.b16 %v2119, %v2115
        %v2236 = vpack.c.b16 %v2120, %v2116
        %v2237 = vpack.c.b16 %v2125, %v2121
        %v2238 = vpack.c.b16 %v2126, %v2122
        %v2239 = vpack.c.b16 %v2127, %v2123
        %v2240 = vpack.c.b16 %v2128, %v2124
        %v2241 = vpack.c.b16 %v2133, %v2129
        %v2242 = vpack.c.b16 %v2134, %v2130
        %v2243 = vpack.c.b16 %v2135, %v2131
        %v2244 = vpack.c.b16 %v2136, %v2132
        %v2245 = vpack.c.b16 %v2141, %v2137
        %v2246 = vpack.c.b16 %v2142, %v2138
        %v2247 = vpack.c.b16 %v2143, %v2139
        %v2248 = vpack.c.b16 %v2144, %v2140
        %v2249 = vpack.c.b16 %v2149, %v2145
        %v2250 = vpack.c.b16 %v2150, %v2146
        %v2251 = vpack.c.b16 %v2151, %v2147
        %v2252 = vpack.c.b16 %v2152, %v2148
        %v2253 = vpack.c.b16 %v2157, %v2153
        %v2254 = vpack.c.b16 %v2158, %v2154
        %v2255 = vpack.c.b16 %v2159, %v2155
        %v2256 = vpack.c.b16 %v2160, %v2156
        %v2257 = vpack.c.b16 %v2165, %v2161
        %v2258 = vpack.c.b16 %v2166, %v2162
        %v2259 = vpack.c.b16 %v2167, %v2163
        %v2260 = vpack.c.b16 %v2168, %v2164
        %v2261 = vpack.c.b16 %v2173, %v2169
        %v2262 = vpack.c.b16 %v2174, %v2170
        %v2263 = vpack.c.b16 %v2175, %v2171
        %v2264 = vpack.c.b16 %v2176, %v2172
        %v2265 = vpack.c.b16 %v2181, %v2177
        %v2266 = vpack.c.b16 %v2182, %v2178
        %v2267 = vpack.c.b16 %v2183, %v2179
        %v2268 = vpack.c.b16 %v2184, %v2180
        %v2269 = vpack.c.b16 %v2189, %v2185
        %v2270 = vpack.c.b16 %v2190, %v2186
        %v2271 = vpack.c.b16 %v2191, %v2187
        %v2272 = vpack.c.b16 %v2192, %v2188
        %v2273 = vpack.c.b16 %v2197, %v2193
        %v2274 = vpack.c.b16 %v2198, %v2194
        %v2275 = vpack.c.b16 %v2199, %v2195
        %v2276 = vpack.c.b16 %v2200, %v2196
        %v2277 = vpack.c.b16 %v2205, %v2201
        %v2278 = vpack.c.b16 %v2206, %v2202
        %v2279 = vpack.c.b16 %v2207, %v2203
        %v2280 = vpack.c.b16 %v2208, %v2204
        %v2354 = vsel %vm449, %v1985, 0
        %v2357 = vsel %vm449, %v1988, 0
        %2359 = vmatpush.bf16.msra.mxu0 %v2237
        %2360 = vmatpush.bf16.msra.mxu0 %v2233
        %2361 = vmatpush.bf16.msra.mxu0 %v2229
        %2362 = vmatpush.bf16.msra.mxu0 %v2225
        %2363 = vmatpush.bf16.msra.mxu0 %v2221
        %2364 = vmatpush.bf16.msra.mxu0 %v2217
        %2365 = vmatpush.bf16.msra.mxu0 %v2213
        %2366 = vmatpush.bf16.msra.mxu0 %v2209
        %2367 = vmatmul.bf16.gmra.mxu0 %v1983
        %v2368 = vpop.f32.mrf.mxu0
        %v2369 = vadd.f32 %v1946, %v2368
        %v2370 = vpop.f32.mrf.mxu0
        %v2371 = vadd.f32 %v1951, %v2370
        %2372 = vmatmul.bf16.gmra.mxu0 %v1986
        %v2373 = vpop.f32.mrf.mxu0
        %v2374 = vadd.f32 %v1956, %v2373
        %v2375 = vpop.f32.mrf.mxu0
        %v2376 = vadd.f32 %v1961, %v2375
        %2377 = vdwg.mxu0
        %2378 = vmatpush.bf16.msra.mxu0 %v2269
        %2379 = vmatpush.bf16.msra.mxu0 %v2265
        %2380 = vmatpush.bf16.msra.mxu0 %v2261
        %2381 = vmatpush.bf16.msra.mxu0 %v2257
        %2382 = vmatpush.bf16.msra.mxu0 %v2253
        %2383 = vmatpush.bf16.msra.mxu0 %v2249
        %2384 = vmatpush.bf16.msra.mxu0 %v2245
        %2385 = vmatpush.bf16.msra.mxu0 %v2241
        %2386 = vmatmul.bf16.gmra.mxu0 %v1984
        %v2387 = vpop.f32.mrf.mxu0
        %v2388 = vadd.f32 %v2369, %v2387
        %v2389 = vpop.f32.mrf.mxu0
        %v2390 = vadd.f32 %v2371, %v2389
        %2391 = vmatmul.bf16.gmra.mxu0 %v1987
        %v2392 = vpop.f32.mrf.mxu0
        %v2393 = vadd.f32 %v2374, %v2392
        %v2394 = vpop.f32.mrf.mxu0
        %v2395 = vadd.f32 %v2376, %v2394
        %2396 = vdwg.mxu0
        %2397 = vmatpush.bf16.msra.mxu0 0
        %2398 = vmatpush.bf16.msra.mxu0 0
        %2399 = vmatpush.bf16.msra.mxu0 0
        %2400 = vmatpush.bf16.msra.mxu0 0
        %2401 = vmatpush.bf16.msra.mxu0 0
        %2402 = vmatpush.bf16.msra.mxu0 0
        %2403 = vmatpush.bf16.msra.mxu0 %v2277
        %2404 = vmatpush.bf16.msra.mxu0 %v2273
        %2405 = vmatmul.bf16.gmra.mxu0 %v2354
        %v2406 = vpop.f32.mrf.mxu0
        %v2407 = vadd.f32 %v2388, %v2406
        %v2408 = vpop.f32.mrf.mxu0
        %v2409 = vadd.f32 %v2390, %v2408
        %2410 = vmatmul.bf16.gmra.mxu0 %v2357
        %v2411 = vpop.f32.mrf.mxu0
        %v2412 = vadd.f32 %v2393, %v2411
        %v2413 = vpop.f32.mrf.mxu0
        %v2414 = vadd.f32 %v2395, %v2413
        %2415 = vdwg.mxu0
        %2416 = vmatpush.bf16.msra.mxu0 %v2238
        %2417 = vmatpush.bf16.msra.mxu0 %v2234
        %2418 = vmatpush.bf16.msra.mxu0 %v2230
        %2419 = vmatpush.bf16.msra.mxu0 %v2226
        %2420 = vmatpush.bf16.msra.mxu0 %v2222
        %2421 = vmatpush.bf16.msra.mxu0 %v2218
        %2422 = vmatpush.bf16.msra.mxu0 %v2214
        %2423 = vmatpush.bf16.msra.mxu0 %v2210
        %2424 = vmatmul.bf16.gmra.mxu0 %v1983
        %v2425 = vpop.f32.mrf.mxu0
        %v2426 = vadd.f32 %v1946, %v2425
        %v2427 = vpop.f32.mrf.mxu0
        %v2428 = vadd.f32 %v1951, %v2427
        %2429 = vmatmul.bf16.gmra.mxu0 %v1986
        %v2430 = vpop.f32.mrf.mxu0
        %v2431 = vadd.f32 %v1956, %v2430
        %v2432 = vpop.f32.mrf.mxu0
        %v2433 = vadd.f32 %v1961, %v2432
        %2434 = vdwg.mxu0
        %2435 = vmatpush.bf16.msra.mxu0 %v2270
        %2436 = vmatpush.bf16.msra.mxu0 %v2266
        %2437 = vmatpush.bf16.msra.mxu0 %v2262
        %2438 = vmatpush.bf16.msra.mxu0 %v2258
        %2439 = vmatpush.bf16.msra.mxu0 %v2254
        %2440 = vmatpush.bf16.msra.mxu0 %v2250
        %2441 = vmatpush.bf16.msra.mxu0 %v2246
        %2442 = vmatpush.bf16.msra.mxu0 %v2242
        %2443 = vmatmul.bf16.gmra.mxu0 %v1984
        %v2444 = vpop.f32.mrf.mxu0
        %v2445 = vadd.f32 %v2426, %v2444
        %v2446 = vpop.f32.mrf.mxu0
        %v2447 = vadd.f32 %v2428, %v2446
        %2448 = vmatmul.bf16.gmra.mxu0 %v1987
        %v2449 = vpop.f32.mrf.mxu0
        %v2450 = vadd.f32 %v2431, %v2449
        %v2451 = vpop.f32.mrf.mxu0
        %v2452 = vadd.f32 %v2433, %v2451
        %2453 = vdwg.mxu0
        %2454 = vmatpush.bf16.msra.mxu0 0
        %2455 = vmatpush.bf16.msra.mxu0 0
        %2456 = vmatpush.bf16.msra.mxu0 0
        %2457 = vmatpush.bf16.msra.mxu0 0
        %2458 = vmatpush.bf16.msra.mxu0 0
        %2459 = vmatpush.bf16.msra.mxu0 0
        %2460 = vmatpush.bf16.msra.mxu0 %v2278
        %2461 = vmatpush.bf16.msra.mxu0 %v2274
        %2462 = vmatmul.bf16.gmra.mxu0 %v2354
        %v2463 = vpop.f32.mrf.mxu0
        %v2464 = vadd.f32 %v2445, %v2463
        %v2465 = vpop.f32.mrf.mxu0
        %v2466 = vadd.f32 %v2447, %v2465
        %2467 = vmatmul.bf16.gmra.mxu0 %v2357
        %v2468 = vpop.f32.mrf.mxu0
        %v2469 = vadd.f32 %v2450, %v2468
        %v2470 = vpop.f32.mrf.mxu0
        %v2471 = vadd.f32 %v2452, %v2470
        %2472 = vdwg.mxu0
        %2473 = vmatpush.bf16.msra.mxu0 %v2239
        %2474 = vmatpush.bf16.msra.mxu0 %v2235
        %2475 = vmatpush.bf16.msra.mxu0 %v2231
        %2476 = vmatpush.bf16.msra.mxu0 %v2227
        %2477 = vmatpush.bf16.msra.mxu0 %v2223
        %2478 = vmatpush.bf16.msra.mxu0 %v2219
        %2479 = vmatpush.bf16.msra.mxu0 %v2215
        %2480 = vmatpush.bf16.msra.mxu0 %v2211
        %2481 = vmatmul.bf16.gmra.mxu0 %v1983
        %v2482 = vpop.f32.mrf.mxu0
        %v2483 = vadd.f32 %v1946, %v2482
        %v2484 = vpop.f32.mrf.mxu0
        %v2485 = vadd.f32 %v1951, %v2484
        %2486 = vmatmul.bf16.gmra.mxu0 %v1986
        %v2487 = vpop.f32.mrf.mxu0
        %v2488 = vadd.f32 %v1956, %v2487
        %v2489 = vpop.f32.mrf.mxu0
        %v2490 = vadd.f32 %v1961, %v2489
        %2491 = vdwg.mxu0
        %2492 = vmatpush.bf16.msra.mxu0 %v2271
        %2493 = vmatpush.bf16.msra.mxu0 %v2267
        %2494 = vmatpush.bf16.msra.mxu0 %v2263
        %2495 = vmatpush.bf16.msra.mxu0 %v2259
        %2496 = vmatpush.bf16.msra.mxu0 %v2255
        %2497 = vmatpush.bf16.msra.mxu0 %v2251
        %2498 = vmatpush.bf16.msra.mxu0 %v2247
        %2499 = vmatpush.bf16.msra.mxu0 %v2243
        %2500 = vmatmul.bf16.gmra.mxu0 %v1984
        %v2501 = vpop.f32.mrf.mxu0
        %v2502 = vadd.f32 %v2483, %v2501
        %v2503 = vpop.f32.mrf.mxu0
        %v2504 = vadd.f32 %v2485, %v2503
        %2505 = vmatmul.bf16.gmra.mxu0 %v1987
        %v2506 = vpop.f32.mrf.mxu0
        %v2507 = vadd.f32 %v2488, %v2506
        %v2508 = vpop.f32.mrf.mxu0
        %v2509 = vadd.f32 %v2490, %v2508
        %2510 = vdwg.mxu0
        %2511 = vmatpush.bf16.msra.mxu0 0
        %2512 = vmatpush.bf16.msra.mxu0 0
        %2513 = vmatpush.bf16.msra.mxu0 0
        %2514 = vmatpush.bf16.msra.mxu0 0
        %2515 = vmatpush.bf16.msra.mxu0 0
        %2516 = vmatpush.bf16.msra.mxu0 0
        %2517 = vmatpush.bf16.msra.mxu0 %v2279
        %2518 = vmatpush.bf16.msra.mxu0 %v2275
        %2519 = vmatmul.bf16.gmra.mxu0 %v2354
        %v2520 = vpop.f32.mrf.mxu0
        %v2521 = vadd.f32 %v2502, %v2520
        %v2522 = vpop.f32.mrf.mxu0
        %v2523 = vadd.f32 %v2504, %v2522
        %2524 = vmatmul.bf16.gmra.mxu0 %v2357
        %v2525 = vpop.f32.mrf.mxu0
        %v2526 = vadd.f32 %v2507, %v2525
        %v2527 = vpop.f32.mrf.mxu0
        %v2528 = vadd.f32 %v2509, %v2527
        %2529 = vdwg.mxu0
        %2530 = vmatpush.bf16.msra.mxu0 %v2240
        %2531 = vmatpush.bf16.msra.mxu0 %v2236
        %2532 = vmatpush.bf16.msra.mxu0 %v2232
        %2533 = vmatpush.bf16.msra.mxu0 %v2228
        %2534 = vmatpush.bf16.msra.mxu0 %v2224
        %2535 = vmatpush.bf16.msra.mxu0 %v2220
        %2536 = vmatpush.bf16.msra.mxu0 %v2216
        %2537 = vmatpush.bf16.msra.mxu0 %v2212
        %2538 = vmatmul.bf16.gmra.mxu0 %v1983
        %v2539 = vpop.f32.mrf.mxu0
        %v2540 = vadd.f32 %v1946, %v2539
        %v2541 = vpop.f32.mrf.mxu0
        %v2542 = vadd.f32 %v1951, %v2541
        %2543 = vmatmul.bf16.gmra.mxu0 %v1986
        %v2544 = vpop.f32.mrf.mxu0
        %v2545 = vadd.f32 %v1956, %v2544
        %v2546 = vpop.f32.mrf.mxu0
        %v2547 = vadd.f32 %v1961, %v2546
        %2548 = vdwg.mxu0
        %2549 = vmatpush.bf16.msra.mxu0 %v2272
        %2550 = vmatpush.bf16.msra.mxu0 %v2268
        %2551 = vmatpush.bf16.msra.mxu0 %v2264
        %2552 = vmatpush.bf16.msra.mxu0 %v2260
        %2553 = vmatpush.bf16.msra.mxu0 %v2256
        %2554 = vmatpush.bf16.msra.mxu0 %v2252
        %2555 = vmatpush.bf16.msra.mxu0 %v2248
        %2556 = vmatpush.bf16.msra.mxu0 %v2244
        %2557 = vmatmul.bf16.gmra.mxu0 %v1984
        %v2558 = vpop.f32.mrf.mxu0
        %v2559 = vadd.f32 %v2540, %v2558
        %v2560 = vpop.f32.mrf.mxu0
        %v2561 = vadd.f32 %v2542, %v2560
        %2562 = vmatmul.bf16.gmra.mxu0 %v1987
        %v2563 = vpop.f32.mrf.mxu0
        %v2564 = vadd.f32 %v2545, %v2563
        %v2565 = vpop.f32.mrf.mxu0
        %v2566 = vadd.f32 %v2547, %v2565
        %2567 = vdwg.mxu0
        %2568 = vmatpush.bf16.msra.mxu0 0
        %2569 = vmatpush.bf16.msra.mxu0 0
        %2570 = vmatpush.bf16.msra.mxu0 0
        %2571 = vmatpush.bf16.msra.mxu0 0
        %2572 = vmatpush.bf16.msra.mxu0 0
        %2573 = vmatpush.bf16.msra.mxu0 0
        %2574 = vmatpush.bf16.msra.mxu0 %v2280
        %2575 = vmatpush.bf16.msra.mxu0 %v2276
        %2576 = vmatmul.bf16.gmra.mxu0 %v2354
        %v2577 = vpop.f32.mrf.mxu0
        %v2578 = vadd.f32 %v2559, %v2577
        %v2579 = vpop.f32.mrf.mxu0
        %v2580 = vadd.f32 %v2561, %v2579
        %2581 = vmatmul.bf16.gmra.mxu0 %v2357
        %v2582 = vpop.f32.mrf.mxu0
        %v2583 = vadd.f32 %v2564, %v2582
        %v2584 = vpop.f32.mrf.mxu0
        %v2585 = vadd.f32 %v2566, %v2584
        %2586 = vdwg.mxu0
        %2587 = vset.pattern.permute.xlu0 4
        %2588 = vperm.xlu0 %2587, %v431
        %v2589 = vpop.permute.xlu0 %2588
        %2591 = vset.pattern.permute.xlu0 4
        %2592 = vperm.xlu0 %2591, %v432
        %v2593 = vpop.permute.xlu0 %2592
        %2595 = vset.pattern.permute.xlu0 4
        %2596 = vperm.xlu0 %2595, %v433
        %v2597 = vpop.permute.xlu0 %2596
        %2599 = vset.pattern.permute.xlu0 4
        %2600 = vperm.xlu0 %2599, %v434
        %v2601 = vpop.permute.xlu0 %2600
        %v2603 = vmul.f32 %v2407, %v2589
        %v2604 = vmul.f32 %v2464, %v2589
        %v2605 = vmul.f32 %v2521, %v2589
        %v2606 = vmul.f32 %v2578, %v2589
        %v2607 = vmul.f32 %v2409, %v2593
        %v2608 = vmul.f32 %v2466, %v2593
        %v2609 = vmul.f32 %v2523, %v2593
        %v2610 = vmul.f32 %v2580, %v2593
        %v2611 = vmul.f32 %v2412, %v2597
        %v2612 = vmul.f32 %v2469, %v2597
        %v2613 = vmul.f32 %v2526, %v2597
        %v2614 = vmul.f32 %v2583, %v2597
        %v2615 = vmul.f32 %v2414, %v2601
        %v2616 = vmul.f32 %v2471, %v2601
        %v2617 = vmul.f32 %v2528, %v2601
        %v2618 = vmul.f32 %v2585, %v2601
        %2619 = vrot.lane.b32.xlu0 %v2407, 17
        %v2620 = vpop.permute.xlu0 %2619
        %2621 = vrot.lane.b32.xlu0 %v2409, 17
        %v2622 = vpop.permute.xlu0 %2621
        %2623 = vrot.lane.b32.xlu0 %v2412, 17
        %v2624 = vpop.permute.xlu0 %2623
        %2625 = vrot.lane.b32.xlu0 %v2414, 17
        %v2626 = vpop.permute.xlu0 %2625
        %2627 = vrot.lane.b32.xlu0 %v2464, 17
        %v2628 = vpop.permute.xlu0 %2627
        %2629 = vrot.lane.b32.xlu0 %v2466, 17
        %v2630 = vpop.permute.xlu0 %2629
        %2631 = vrot.lane.b32.xlu0 %v2469, 17
        %v2632 = vpop.permute.xlu0 %2631
        %2633 = vrot.lane.b32.xlu0 %v2471, 17
        %v2634 = vpop.permute.xlu0 %2633
        %2635 = vrot.lane.b32.xlu0 %v2521, 17
        %v2636 = vpop.permute.xlu0 %2635
        %2637 = vrot.lane.b32.xlu0 %v2523, 17
        %v2638 = vpop.permute.xlu0 %2637
        %2639 = vrot.lane.b32.xlu0 %v2526, 17
        %v2640 = vpop.permute.xlu0 %2639
        %2641 = vrot.lane.b32.xlu0 %v2528, 17
        %v2642 = vpop.permute.xlu0 %2641
        %2643 = vrot.lane.b32.xlu0 %v2578, 17
        %v2644 = vpop.permute.xlu0 %2643
        %2645 = vrot.lane.b32.xlu0 %v2580, 17
        %v2646 = vpop.permute.xlu0 %2645
        %2647 = vrot.lane.b32.xlu0 %v2583, 17
        %v2648 = vpop.permute.xlu0 %2647
        %2649 = vrot.lane.b32.xlu0 %v2585, 17
        %v2650 = vpop.permute.xlu0 %2649
        %v2651 = vsel %vm1144, %v2636, %v2644
        %v2652 = vsel %vm1144, %v2638, %v2646
        %v2653 = vsel %vm1144, %v2640, %v2648
        %v2654 = vsel %vm1144, %v2642, %v2650
        %v2655 = vsel %vm1144, %v2628, %v2636
        %v2656 = vsel %vm1144, %v2630, %v2638
        %v2657 = vsel %vm1144, %v2632, %v2640
        %v2658 = vsel %vm1144, %v2634, %v2642
        %v2659 = vsel %vm1144, %v2620, %v2628
        %v2660 = vsel %vm1144, %v2622, %v2630
        %v2661 = vsel %vm1144, %v2624, %v2632
        %v2662 = vsel %vm1144, %v2626, %v2634
        %v2663 = vsel %vm1144, %v2644, %v2620
        %v2664 = vsel %vm1144, %v2646, %v2622
        %v2665 = vsel %vm1144, %v2648, %v2624
        %v2666 = vsel %vm1144, %v2650, %v2626
        %v2667 = vld [vmem:[%s1] ss:$8 sm:$0xf]
        %v2669 = vperm.slane %v2667, 0
        %v2670 = vperm.slane %v2667, 1
        %v2671 = vperm.slane %v2667, 2
        %v2672 = vperm.slane %v2667, 3
        %v2677 = vmul.f32 %v2663, %v2669
        %v2678 = vmul.f32 %v2659, %v2670
        %v2679 = vmul.f32 %v2655, %v2671
        %v2680 = vmul.f32 %v2651, %v2672
        %v2681 = vmul.f32 %v2664, %v2669
        %v2682 = vmul.f32 %v2660, %v2670
        %v2683 = vmul.f32 %v2656, %v2671
        %v2684 = vmul.f32 %v2652, %v2672
        %v2685 = vmul.f32 %v2665, %v2669
        %v2686 = vmul.f32 %v2661, %v2670
        %v2687 = vmul.f32 %v2657, %v2671
        %v2688 = vmul.f32 %v2653, %v2672
        %v2689 = vmul.f32 %v2666, %v2669
        %v2690 = vmul.f32 %v2662, %v2670
        %v2691 = vmul.f32 %v2658, %v2671
        %v2692 = vmul.f32 %v2654, %v2672
        %2693 = vset.pattern.permute.xlu0 0
        %2694 = vperm.xlu0 %2693, %v431
        %v2695 = vpop.permute.xlu0 %2694
        %2697 = vset.pattern.permute.xlu0 0
        %2698 = vperm.xlu0 %2697, %v432
        %v2699 = vpop.permute.xlu0 %2698
        %2701 = vset.pattern.permute.xlu0 0
        %2702 = vperm.xlu0 %2701, %v433
        %v2703 = vpop.permute.xlu0 %2702
        %2705 = vset.pattern.permute.xlu0 0
        %2706 = vperm.xlu0 %2705, %v434
        %v2707 = vpop.permute.xlu0 %2706
        %v2709 = vmul.f32 %v2677, %v2695
        %v2710 = vmul.f32 %v2678, %v2695
        %v2711 = vmul.f32 %v2679, %v2695
        %v2712 = vmul.f32 %v2680, %v2695
        %v2713 = vmul.f32 %v2681, %v2699
        %v2714 = vmul.f32 %v2682, %v2699
        %v2715 = vmul.f32 %v2683, %v2699
        %v2716 = vmul.f32 %v2684, %v2699
        %v2717 = vmul.f32 %v2685, %v2703
        %v2718 = vmul.f32 %v2686, %v2703
        %v2719 = vmul.f32 %v2687, %v2703
        %v2720 = vmul.f32 %v2688, %v2703
        %v2721 = vmul.f32 %v2689, %v2707
        %v2722 = vmul.f32 %v2690, %v2707
        %v2723 = vmul.f32 %v2691, %v2707
        %v2724 = vmul.f32 %v2692, %v2707
        %v2725 = vadd.f32 %v2603, %v2709
        %v2726 = vadd.f32 %v2604, %v2710
        %v2727 = vadd.f32 %v2605, %v2711
        %v2728 = vadd.f32 %v2606, %v2712
        %v2729 = vadd.f32 %v2607, %v2713
        %v2730 = vadd.f32 %v2608, %v2714
        %v2731 = vadd.f32 %v2609, %v2715
        %v2732 = vadd.f32 %v2610, %v2716
        %v2733 = vadd.f32 %v2611, %v2717
        %v2734 = vadd.f32 %v2612, %v2718
        %v2735 = vadd.f32 %v2613, %v2719
        %v2736 = vadd.f32 %v2614, %v2720
        %v2737 = vadd.f32 %v2615, %v2721
        %v2738 = vadd.f32 %v2616, %v2722
        %v2739 = vadd.f32 %v2617, %v2723
        %v2740 = vadd.f32 %v2618, %v2724
        %2741 = vrot.lane.b32.xlu0 %v2407, 16
        %v2742 = vpop.permute.xlu0 %2741
        %2743 = vrot.lane.b32.xlu0 %v2409, 16
        %v2744 = vpop.permute.xlu0 %2743
        %2745 = vrot.lane.b32.xlu0 %v2412, 16
        %v2746 = vpop.permute.xlu0 %2745
        %2747 = vrot.lane.b32.xlu0 %v2414, 16
        %v2748 = vpop.permute.xlu0 %2747
        %2749 = vrot.lane.b32.xlu0 %v2464, 16
        %v2750 = vpop.permute.xlu0 %2749
        %2751 = vrot.lane.b32.xlu0 %v2466, 16
        %v2752 = vpop.permute.xlu0 %2751
        %2753 = vrot.lane.b32.xlu0 %v2469, 16
        %v2754 = vpop.permute.xlu0 %2753
        %2755 = vrot.lane.b32.xlu0 %v2471, 16
        %v2756 = vpop.permute.xlu0 %2755
        %2757 = vrot.lane.b32.xlu0 %v2521, 16
        %v2758 = vpop.permute.xlu0 %2757
        %2759 = vrot.lane.b32.xlu0 %v2523, 16
        %v2760 = vpop.permute.xlu0 %2759
        %2761 = vrot.lane.b32.xlu0 %v2526, 16
        %v2762 = vpop.permute.xlu0 %2761
        %2763 = vrot.lane.b32.xlu0 %v2528, 16
        %v2764 = vpop.permute.xlu0 %2763
        %2765 = vrot.lane.b32.xlu0 %v2578, 16
        %v2766 = vpop.permute.xlu0 %2765
        %2767 = vrot.lane.b32.xlu0 %v2580, 16
        %v2768 = vpop.permute.xlu0 %2767
        %2769 = vrot.lane.b32.xlu0 %v2583, 16
        %v2770 = vpop.permute.xlu0 %2769
        %2771 = vrot.lane.b32.xlu0 %v2585, 16
        %v2772 = vpop.permute.xlu0 %2771
        %v2773 = vsel %vm1235, %v2758, %v2766
        %v2774 = vsel %vm1235, %v2760, %v2768
        %v2775 = vsel %vm1235, %v2762, %v2770
        %v2776 = vsel %vm1235, %v2764, %v2772
        %v2777 = vsel %vm1235, %v2750, %v2758
        %v2778 = vsel %vm1235, %v2752, %v2760
        %v2779 = vsel %vm1235, %v2754, %v2762
        %v2780 = vsel %vm1235, %v2756, %v2764
        %v2781 = vsel %vm1235, %v2742, %v2750
        %v2782 = vsel %vm1235, %v2744, %v2752
        %v2783 = vsel %vm1235, %v2746, %v2754
        %v2784 = vsel %vm1235, %v2748, %v2756
        %v2785 = vsel %vm1235, %v2766, %v2742
        %v2786 = vsel %vm1235, %v2768, %v2744
        %v2787 = vsel %vm1235, %v2770, %v2746
        %v2788 = vsel %vm1235, %v2772, %v2748
        %v2789 = vld [vmem:[%s1252] ss:$8 sm:$0xf]
        %v2791 = vperm.slane %v2789, 0
        %v2792 = vperm.slane %v2789, 1
        %v2793 = vperm.slane %v2789, 2
        %v2794 = vperm.slane %v2789, 3
        %v2799 = vmul.f32 %v2785, %v2791
        %v2800 = vmul.f32 %v2781, %v2792
        %v2801 = vmul.f32 %v2777, %v2793
        %v2802 = vmul.f32 %v2773, %v2794
        %v2803 = vmul.f32 %v2786, %v2791
        %v2804 = vmul.f32 %v2782, %v2792
        %v2805 = vmul.f32 %v2778, %v2793
        %v2806 = vmul.f32 %v2774, %v2794
        %v2807 = vmul.f32 %v2787, %v2791
        %v2808 = vmul.f32 %v2783, %v2792
        %v2809 = vmul.f32 %v2779, %v2793
        %v2810 = vmul.f32 %v2775, %v2794
        %v2811 = vmul.f32 %v2788, %v2791
        %v2812 = vmul.f32 %v2784, %v2792
        %v2813 = vmul.f32 %v2780, %v2793
        %v2814 = vmul.f32 %v2776, %v2794
        %2815 = vset.pattern.permute.xlu0 1
        %2816 = vperm.xlu0 %2815, %v431
        %v2817 = vpop.permute.xlu0 %2816
        %2819 = vset.pattern.permute.xlu0 1
        %2820 = vperm.xlu0 %2819, %v432
        %v2821 = vpop.permute.xlu0 %2820
        %2823 = vset.pattern.permute.xlu0 1
        %2824 = vperm.xlu0 %2823, %v433
        %v2825 = vpop.permute.xlu0 %2824
        %2827 = vset.pattern.permute.xlu0 1
        %2828 = vperm.xlu0 %2827, %v434
        %v2829 = vpop.permute.xlu0 %2828
        %v2831 = vmul.f32 %v2799, %v2817
        %v2832 = vmul.f32 %v2800, %v2817
        %v2833 = vmul.f32 %v2801, %v2817
        %v2834 = vmul.f32 %v2802, %v2817
        %v2835 = vmul.f32 %v2803, %v2821
        %v2836 = vmul.f32 %v2804, %v2821
        %v2837 = vmul.f32 %v2805, %v2821
        %v2838 = vmul.f32 %v2806, %v2821
        %v2839 = vmul.f32 %v2807, %v2825
        %v2840 = vmul.f32 %v2808, %v2825
        %v2841 = vmul.f32 %v2809, %v2825
        %v2842 = vmul.f32 %v2810, %v2825
        %v2843 = vmul.f32 %v2811, %v2829
        %v2844 = vmul.f32 %v2812, %v2829
        %v2845 = vmul.f32 %v2813, %v2829
        %v2846 = vmul.f32 %v2814, %v2829
        %v2847 = vadd.f32 %v2725, %v2831
        %v2848 = vadd.f32 %v2726, %v2832
        %v2849 = vadd.f32 %v2727, %v2833
        %v2850 = vadd.f32 %v2728, %v2834
        %v2851 = vadd.f32 %v2729, %v2835
        %v2852 = vadd.f32 %v2730, %v2836
        %v2853 = vadd.f32 %v2731, %v2837
        %v2854 = vadd.f32 %v2732, %v2838
        %v2855 = vadd.f32 %v2733, %v2839
        %v2856 = vadd.f32 %v2734, %v2840
        %v2857 = vadd.f32 %v2735, %v2841
        %v2858 = vadd.f32 %v2736, %v2842
        %v2859 = vadd.f32 %v2737, %v2843
        %v2860 = vadd.f32 %v2738, %v2844
        %v2861 = vadd.f32 %v2739, %v2845
        %v2862 = vadd.f32 %v2740, %v2846
        %2863 = vrot.lane.b32.xlu0 %v2407, 15
        %v2864 = vpop.permute.xlu0 %2863
        %2865 = vrot.lane.b32.xlu0 %v2409, 15
        %v2866 = vpop.permute.xlu0 %2865
        %2867 = vrot.lane.b32.xlu0 %v2412, 15
        %v2868 = vpop.permute.xlu0 %2867
        %2869 = vrot.lane.b32.xlu0 %v2414, 15
        %v2870 = vpop.permute.xlu0 %2869
        %2871 = vrot.lane.b32.xlu0 %v2464, 15
        %v2872 = vpop.permute.xlu0 %2871
        %2873 = vrot.lane.b32.xlu0 %v2466, 15
        %v2874 = vpop.permute.xlu0 %2873
        %2875 = vrot.lane.b32.xlu0 %v2469, 15
        %v2876 = vpop.permute.xlu0 %2875
        %2877 = vrot.lane.b32.xlu0 %v2471, 15
        %v2878 = vpop.permute.xlu0 %2877
        %2879 = vrot.lane.b32.xlu0 %v2521, 15
        %v2880 = vpop.permute.xlu0 %2879
        %2881 = vrot.lane.b32.xlu0 %v2523, 15
        %v2882 = vpop.permute.xlu0 %2881
        %2883 = vrot.lane.b32.xlu0 %v2526, 15
        %v2884 = vpop.permute.xlu0 %2883
        %2885 = vrot.lane.b32.xlu0 %v2528, 15
        %v2886 = vpop.permute.xlu0 %2885
        %2887 = vrot.lane.b32.xlu0 %v2578, 15
        %v2888 = vpop.permute.xlu0 %2887
        %2889 = vrot.lane.b32.xlu0 %v2580, 15
        %v2890 = vpop.permute.xlu0 %2889
        %2891 = vrot.lane.b32.xlu0 %v2583, 15
        %v2892 = vpop.permute.xlu0 %2891
        %2893 = vrot.lane.b32.xlu0 %v2585, 15
        %v2894 = vpop.permute.xlu0 %2893
        %v2895 = vsel %vm1327, %v2880, %v2888
        %v2896 = vsel %vm1327, %v2882, %v2890
        %v2897 = vsel %vm1327, %v2884, %v2892
        %v2898 = vsel %vm1327, %v2886, %v2894
        %v2899 = vsel %vm1327, %v2872, %v2880
        %v2900 = vsel %vm1327, %v2874, %v2882
        %v2901 = vsel %vm1327, %v2876, %v2884
        %v2902 = vsel %vm1327, %v2878, %v2886
        %v2903 = vsel %vm1327, %v2864, %v2872
        %v2904 = vsel %vm1327, %v2866, %v2874
        %v2905 = vsel %vm1327, %v2868, %v2876
        %v2906 = vsel %vm1327, %v2870, %v2878
        %v2907 = vsel %vm1327, %v2888, %v2864
        %v2908 = vsel %vm1327, %v2890, %v2866
        %v2909 = vsel %vm1327, %v2892, %v2868
        %v2910 = vsel %vm1327, %v2894, %v2870
        %v2911 = vld [vmem:[%s1344] ss:$8 sm:$0xf]
        %v2913 = vperm.slane %v2911, 0
        %v2914 = vperm.slane %v2911, 1
        %v2915 = vperm.slane %v2911, 2
        %v2916 = vperm.slane %v2911, 3
        %v2921 = vmul.f32 %v2907, %v2913
        %v2922 = vmul.f32 %v2903, %v2914
        %v2923 = vmul.f32 %v2899, %v2915
        %v2924 = vmul.f32 %v2895, %v2916
        %v2925 = vmul.f32 %v2908, %v2913
        %v2926 = vmul.f32 %v2904, %v2914
        %v2927 = vmul.f32 %v2900, %v2915
        %v2928 = vmul.f32 %v2896, %v2916
        %v2929 = vmul.f32 %v2909, %v2913
        %v2930 = vmul.f32 %v2905, %v2914
        %v2931 = vmul.f32 %v2901, %v2915
        %v2932 = vmul.f32 %v2897, %v2916
        %v2933 = vmul.f32 %v2910, %v2913
        %v2934 = vmul.f32 %v2906, %v2914
        %v2935 = vmul.f32 %v2902, %v2915
        %v2936 = vmul.f32 %v2898, %v2916
        %2937 = vset.pattern.permute.xlu0 2
        %2938 = vperm.xlu0 %2937, %v431
        %v2939 = vpop.permute.xlu0 %2938
        %2941 = vset.pattern.permute.xlu0 2
        %2942 = vperm.xlu0 %2941, %v432
        %v2943 = vpop.permute.xlu0 %2942
        %2945 = vset.pattern.permute.xlu0 2
        %2946 = vperm.xlu0 %2945, %v433
        %v2947 = vpop.permute.xlu0 %2946
        %2949 = vset.pattern.permute.xlu0 2
        %2950 = vperm.xlu0 %2949, %v434
        %v2951 = vpop.permute.xlu0 %2950
        %v2953 = vmul.f32 %v2921, %v2939
        %v2954 = vmul.f32 %v2922, %v2939
        %v2955 = vmul.f32 %v2923, %v2939
        %v2956 = vmul.f32 %v2924, %v2939
        %v2957 = vmul.f32 %v2925, %v2943
        %v2958 = vmul.f32 %v2926, %v2943
        %v2959 = vmul.f32 %v2927, %v2943
        %v2960 = vmul.f32 %v2928, %v2943
        %v2961 = vmul.f32 %v2929, %v2947
        %v2962 = vmul.f32 %v2930, %v2947
        %v2963 = vmul.f32 %v2931, %v2947
        %v2964 = vmul.f32 %v2932, %v2947
        %v2965 = vmul.f32 %v2933, %v2951
        %v2966 = vmul.f32 %v2934, %v2951
        %v2967 = vmul.f32 %v2935, %v2951
        %v2968 = vmul.f32 %v2936, %v2951
        %v2969 = vadd.f32 %v2847, %v2953
        %v2970 = vadd.f32 %v2848, %v2954
        %v2971 = vadd.f32 %v2849, %v2955
        %v2972 = vadd.f32 %v2850, %v2956
        %v2973 = vadd.f32 %v2851, %v2957
        %v2974 = vadd.f32 %v2852, %v2958
        %v2975 = vadd.f32 %v2853, %v2959
        %v2976 = vadd.f32 %v2854, %v2960
        %v2977 = vadd.f32 %v2855, %v2961
        %v2978 = vadd.f32 %v2856, %v2962
        %v2979 = vadd.f32 %v2857, %v2963
        %v2980 = vadd.f32 %v2858, %v2964
        %v2981 = vadd.f32 %v2859, %v2965
        %v2982 = vadd.f32 %v2860, %v2966
        %v2983 = vadd.f32 %v2861, %v2967
        %v2984 = vadd.f32 %v2862, %v2968
        %2985 = vrot.lane.b32.xlu0 %v2407, 1
        %v2986 = vpop.permute.xlu0 %2985
        %2987 = vrot.lane.b32.xlu0 %v2409, 1
        %v2988 = vpop.permute.xlu0 %2987
        %2989 = vrot.lane.b32.xlu0 %v2412, 1
        %v2990 = vpop.permute.xlu0 %2989
        %2991 = vrot.lane.b32.xlu0 %v2414, 1
        %v2992 = vpop.permute.xlu0 %2991
        %2993 = vrot.lane.b32.xlu0 %v2464, 1
        %v2994 = vpop.permute.xlu0 %2993
        %2995 = vrot.lane.b32.xlu0 %v2466, 1
        %v2996 = vpop.permute.xlu0 %2995
        %2997 = vrot.lane.b32.xlu0 %v2469, 1
        %v2998 = vpop.permute.xlu0 %2997
        %2999 = vrot.lane.b32.xlu0 %v2471, 1
        %v3000 = vpop.permute.xlu0 %2999
        %3001 = vrot.lane.b32.xlu0 %v2521, 1
        %v3002 = vpop.permute.xlu0 %3001
        %3003 = vrot.lane.b32.xlu0 %v2523, 1
        %v3004 = vpop.permute.xlu0 %3003
        %3005 = vrot.lane.b32.xlu0 %v2526, 1
        %v3006 = vpop.permute.xlu0 %3005
        %3007 = vrot.lane.b32.xlu0 %v2528, 1
        %v3008 = vpop.permute.xlu0 %3007
        %3009 = vrot.lane.b32.xlu0 %v2578, 1
        %v3010 = vpop.permute.xlu0 %3009
        %3011 = vrot.lane.b32.xlu0 %v2580, 1
        %v3012 = vpop.permute.xlu0 %3011
        %3013 = vrot.lane.b32.xlu0 %v2583, 1
        %v3014 = vpop.permute.xlu0 %3013
        %3015 = vrot.lane.b32.xlu0 %v2585, 1
        %v3016 = vpop.permute.xlu0 %3015
        %v3017 = vsel %vm1419, %v3002, %v3010
        %v3018 = vsel %vm1419, %v3004, %v3012
        %v3019 = vsel %vm1419, %v3006, %v3014
        %v3020 = vsel %vm1419, %v3008, %v3016
        %v3021 = vsel %vm1419, %v2994, %v3002
        %v3022 = vsel %vm1419, %v2996, %v3004
        %v3023 = vsel %vm1419, %v2998, %v3006
        %v3024 = vsel %vm1419, %v3000, %v3008
        %v3025 = vsel %vm1419, %v2986, %v2994
        %v3026 = vsel %vm1419, %v2988, %v2996
        %v3027 = vsel %vm1419, %v2990, %v2998
        %v3028 = vsel %vm1419, %v2992, %v3000
        %v3029 = vsel %vm1419, %v3010, %v2986
        %v3030 = vsel %vm1419, %v3012, %v2988
        %v3031 = vsel %vm1419, %v3014, %v2990
        %v3032 = vsel %vm1419, %v3016, %v2992
        %v3033 = vld [vmem:[%s1436] ss:$8 sm:$0xf]
        %v3035 = vperm.slane %v3033, 0
        %v3036 = vperm.slane %v3033, 1
        %v3037 = vperm.slane %v3033, 2
        %v3038 = vperm.slane %v3033, 3
        %v3043 = vmul.f32 %v3029, %v3035
        %v3044 = vmul.f32 %v3025, %v3036
        %v3045 = vmul.f32 %v3021, %v3037
        %v3046 = vmul.f32 %v3017, %v3038
        %v3047 = vmul.f32 %v3030, %v3035
        %v3048 = vmul.f32 %v3026, %v3036
        %v3049 = vmul.f32 %v3022, %v3037
        %v3050 = vmul.f32 %v3018, %v3038
        %v3051 = vmul.f32 %v3031, %v3035
        %v3052 = vmul.f32 %v3027, %v3036
        %v3053 = vmul.f32 %v3023, %v3037
        %v3054 = vmul.f32 %v3019, %v3038
        %v3055 = vmul.f32 %v3032, %v3035
        %v3056 = vmul.f32 %v3028, %v3036
        %v3057 = vmul.f32 %v3024, %v3037
        %v3058 = vmul.f32 %v3020, %v3038
        %3059 = vset.pattern.permute.xlu0 3
        %3060 = vperm.xlu0 %3059, %v431
        %v3061 = vpop.permute.xlu0 %3060
        %3063 = vset.pattern.permute.xlu0 3
        %3064 = vperm.xlu0 %3063, %v432
        %v3065 = vpop.permute.xlu0 %3064
        %3067 = vset.pattern.permute.xlu0 3
        %3068 = vperm.xlu0 %3067, %v433
        %v3069 = vpop.permute.xlu0 %3068
        %3071 = vset.pattern.permute.xlu0 3
        %3072 = vperm.xlu0 %3071, %v434
        %v3073 = vpop.permute.xlu0 %3072
        %v3075 = vmul.f32 %v3043, %v3061
        %v3076 = vmul.f32 %v3044, %v3061
        %v3077 = vmul.f32 %v3045, %v3061
        %v3078 = vmul.f32 %v3046, %v3061
        %v3079 = vmul.f32 %v3047, %v3065
        %v3080 = vmul.f32 %v3048, %v3065
        %v3081 = vmul.f32 %v3049, %v3065
        %v3082 = vmul.f32 %v3050, %v3065
        %v3083 = vmul.f32 %v3051, %v3069
        %v3084 = vmul.f32 %v3052, %v3069
        %v3085 = vmul.f32 %v3053, %v3069
        %v3086 = vmul.f32 %v3054, %v3069
        %v3087 = vmul.f32 %v3055, %v3073
        %v3088 = vmul.f32 %v3056, %v3073
        %v3089 = vmul.f32 %v3057, %v3073
        %v3090 = vmul.f32 %v3058, %v3073
        %v3091 = vadd.f32 %v2969, %v3075
        %v3092 = vadd.f32 %v2970, %v3076
        %v3093 = vadd.f32 %v2971, %v3077
        %v3094 = vadd.f32 %v2972, %v3078
        %v3095 = vadd.f32 %v2973, %v3079
        %v3096 = vadd.f32 %v2974, %v3080
        %v3097 = vadd.f32 %v2975, %v3081
        %v3098 = vadd.f32 %v2976, %v3082
        %v3099 = vadd.f32 %v2977, %v3083
        %v3100 = vadd.f32 %v2978, %v3084
        %v3101 = vadd.f32 %v2979, %v3085
        %v3102 = vadd.f32 %v2980, %v3086
        %v3103 = vadd.f32 %v2981, %v3087
        %v3104 = vadd.f32 %v2982, %v3088
        %v3105 = vadd.f32 %v2983, %v3089
        %v3106 = vadd.f32 %v2984, %v3090
        %3107 = vrot.lane.b32.xlu0 %v2407, 127
        %v3108 = vpop.permute.xlu0 %3107
        %3109 = vrot.lane.b32.xlu0 %v2409, 127
        %v3110 = vpop.permute.xlu0 %3109
        %3111 = vrot.lane.b32.xlu0 %v2412, 127
        %v3112 = vpop.permute.xlu0 %3111
        %3113 = vrot.lane.b32.xlu0 %v2414, 127
        %v3114 = vpop.permute.xlu0 %3113
        %3115 = vrot.lane.b32.xlu0 %v2464, 127
        %v3116 = vpop.permute.xlu0 %3115
        %3117 = vrot.lane.b32.xlu0 %v2466, 127
        %v3118 = vpop.permute.xlu0 %3117
        %3119 = vrot.lane.b32.xlu0 %v2469, 127
        %v3120 = vpop.permute.xlu0 %3119
        %3121 = vrot.lane.b32.xlu0 %v2471, 127
        %v3122 = vpop.permute.xlu0 %3121
        %3123 = vrot.lane.b32.xlu0 %v2521, 127
        %v3124 = vpop.permute.xlu0 %3123
        %3125 = vrot.lane.b32.xlu0 %v2523, 127
        %v3126 = vpop.permute.xlu0 %3125
        %3127 = vrot.lane.b32.xlu0 %v2526, 127
        %v3128 = vpop.permute.xlu0 %3127
        %3129 = vrot.lane.b32.xlu0 %v2528, 127
        %v3130 = vpop.permute.xlu0 %3129
        %3131 = vrot.lane.b32.xlu0 %v2578, 127
        %v3132 = vpop.permute.xlu0 %3131
        %3133 = vrot.lane.b32.xlu0 %v2580, 127
        %v3134 = vpop.permute.xlu0 %3133
        %3135 = vrot.lane.b32.xlu0 %v2583, 127
        %v3136 = vpop.permute.xlu0 %3135
        %3137 = vrot.lane.b32.xlu0 %v2585, 127
        %v3138 = vpop.permute.xlu0 %3137
        %v3139 = vsel %vm1527, %v3124, %v3132
        %v3140 = vsel %vm1527, %v3126, %v3134
        %v3141 = vsel %vm1527, %v3128, %v3136
        %v3142 = vsel %vm1527, %v3130, %v3138
        %v3143 = vsel %vm1527, %v3116, %v3124
        %v3144 = vsel %vm1527, %v3118, %v3126
        %v3145 = vsel %vm1527, %v3120, %v3128
        %v3146 = vsel %vm1527, %v3122, %v3130
        %v3147 = vsel %vm1527, %v3108, %v3116
        %v3148 = vsel %vm1527, %v3110, %v3118
        %v3149 = vsel %vm1527, %v3112, %v3120
        %v3150 = vsel %vm1527, %v3114, %v3122
        %v3151 = vsel %vm1527, %v3132, %v3108
        %v3152 = vsel %vm1527, %v3134, %v3110
        %v3153 = vsel %vm1527, %v3136, %v3112
        %v3154 = vsel %vm1527, %v3138, %v3114
        %v3155 = vld [vmem:[%s1544] ss:$8 sm:$0xf]
        %v3157 = vperm.slane %v3155, 0
        %v3158 = vperm.slane %v3155, 1
        %v3159 = vperm.slane %v3155, 2
        %v3160 = vperm.slane %v3155, 3
        %v3165 = vmul.f32 %v3147, %v3157
        %v3166 = vmul.f32 %v3143, %v3158
        %v3167 = vmul.f32 %v3139, %v3159
        %v3168 = vmul.f32 %v3151, %v3160
        %v3169 = vmul.f32 %v3148, %v3157
        %v3170 = vmul.f32 %v3144, %v3158
        %v3171 = vmul.f32 %v3140, %v3159
        %v3172 = vmul.f32 %v3152, %v3160
        %v3173 = vmul.f32 %v3149, %v3157
        %v3174 = vmul.f32 %v3145, %v3158
        %v3175 = vmul.f32 %v3141, %v3159
        %v3176 = vmul.f32 %v3153, %v3160
        %v3177 = vmul.f32 %v3150, %v3157
        %v3178 = vmul.f32 %v3146, %v3158
        %v3179 = vmul.f32 %v3142, %v3159
        %v3180 = vmul.f32 %v3154, %v3160
        %3181 = vset.pattern.permute.xlu0 5
        %3182 = vperm.xlu0 %3181, %v431
        %v3183 = vpop.permute.xlu0 %3182
        %3185 = vset.pattern.permute.xlu0 5
        %3186 = vperm.xlu0 %3185, %v432
        %v3187 = vpop.permute.xlu0 %3186
        %3189 = vset.pattern.permute.xlu0 5
        %3190 = vperm.xlu0 %3189, %v433
        %v3191 = vpop.permute.xlu0 %3190
        %3193 = vset.pattern.permute.xlu0 5
        %3194 = vperm.xlu0 %3193, %v434
        %v3195 = vpop.permute.xlu0 %3194
        %v3197 = vmul.f32 %v3165, %v3183
        %v3198 = vmul.f32 %v3166, %v3183
        %v3199 = vmul.f32 %v3167, %v3183
        %v3200 = vmul.f32 %v3168, %v3183
        %v3201 = vmul.f32 %v3169, %v3187
        %v3202 = vmul.f32 %v3170, %v3187
        %v3203 = vmul.f32 %v3171, %v3187
        %v3204 = vmul.f32 %v3172, %v3187
        %v3205 = vmul.f32 %v3173, %v3191
        %v3206 = vmul.f32 %v3174, %v3191
        %v3207 = vmul.f32 %v3175, %v3191
        %v3208 = vmul.f32 %v3176, %v3191
        %v3209 = vmul.f32 %v3177, %v3195
        %v3210 = vmul.f32 %v3178, %v3195
        %v3211 = vmul.f32 %v3179, %v3195
        %v3212 = vmul.f32 %v3180, %v3195
        %v3213 = vadd.f32 %v3091, %v3197
        %v3214 = vadd.f32 %v3092, %v3198
        %v3215 = vadd.f32 %v3093, %v3199
        %v3216 = vadd.f32 %v3094, %v3200
        %v3217 = vadd.f32 %v3095, %v3201
        %v3218 = vadd.f32 %v3096, %v3202
        %v3219 = vadd.f32 %v3097, %v3203
        %v3220 = vadd.f32 %v3098, %v3204
        %v3221 = vadd.f32 %v3099, %v3205
        %v3222 = vadd.f32 %v3100, %v3206
        %v3223 = vadd.f32 %v3101, %v3207
        %v3224 = vadd.f32 %v3102, %v3208
        %v3225 = vadd.f32 %v3103, %v3209
        %v3226 = vadd.f32 %v3104, %v3210
        %v3227 = vadd.f32 %v3105, %v3211
        %v3228 = vadd.f32 %v3106, %v3212
        %3229 = vrot.lane.b32.xlu0 %v2407, 113
        %v3230 = vpop.permute.xlu0 %3229
        %3231 = vrot.lane.b32.xlu0 %v2409, 113
        %v3232 = vpop.permute.xlu0 %3231
        %3233 = vrot.lane.b32.xlu0 %v2412, 113
        %v3234 = vpop.permute.xlu0 %3233
        %3235 = vrot.lane.b32.xlu0 %v2414, 113
        %v3236 = vpop.permute.xlu0 %3235
        %3237 = vrot.lane.b32.xlu0 %v2464, 113
        %v3238 = vpop.permute.xlu0 %3237
        %3239 = vrot.lane.b32.xlu0 %v2466, 113
        %v3240 = vpop.permute.xlu0 %3239
        %3241 = vrot.lane.b32.xlu0 %v2469, 113
        %v3242 = vpop.permute.xlu0 %3241
        %3243 = vrot.lane.b32.xlu0 %v2471, 113
        %v3244 = vpop.permute.xlu0 %3243
        %3245 = vrot.lane.b32.xlu0 %v2521, 113
        %v3246 = vpop.permute.xlu0 %3245
        %3247 = vrot.lane.b32.xlu0 %v2523, 113
        %v3248 = vpop.permute.xlu0 %3247
        %3249 = vrot.lane.b32.xlu0 %v2526, 113
        %v3250 = vpop.permute.xlu0 %3249
        %3251 = vrot.lane.b32.xlu0 %v2528, 113
        %v3252 = vpop.permute.xlu0 %3251
        %3253 = vrot.lane.b32.xlu0 %v2578, 113
        %v3254 = vpop.permute.xlu0 %3253
        %3255 = vrot.lane.b32.xlu0 %v2580, 113
        %v3256 = vpop.permute.xlu0 %3255
        %3257 = vrot.lane.b32.xlu0 %v2583, 113
        %v3258 = vpop.permute.xlu0 %3257
        %3259 = vrot.lane.b32.xlu0 %v2585, 113
        %v3260 = vpop.permute.xlu0 %3259
        %v3261 = vsel %vm1619, %v3246, %v3254
        %v3262 = vsel %vm1619, %v3248, %v3256
        %v3263 = vsel %vm1619, %v3250, %v3258
        %v3264 = vsel %vm1619, %v3252, %v3260
        %v3265 = vsel %vm1619, %v3238, %v3246
        %v3266 = vsel %vm1619, %v3240, %v3248
        %v3267 = vsel %vm1619, %v3242, %v3250
        %v3268 = vsel %vm1619, %v3244, %v3252
        %v3269 = vsel %vm1619, %v3230, %v3238
        %v3270 = vsel %vm1619, %v3232, %v3240
        %v3271 = vsel %vm1619, %v3234, %v3242
        %v3272 = vsel %vm1619, %v3236, %v3244
        %v3273 = vsel %vm1619, %v3254, %v3230
        %v3274 = vsel %vm1619, %v3256, %v3232
        %v3275 = vsel %vm1619, %v3258, %v3234
        %v3276 = vsel %vm1619, %v3260, %v3236
        %v3277 = vld [vmem:[%s1636] ss:$8 sm:$0xf]
        %v3279 = vperm.slane %v3277, 0
        %v3280 = vperm.slane %v3277, 1
        %v3281 = vperm.slane %v3277, 2
        %v3282 = vperm.slane %v3277, 3
        %v3287 = vmul.f32 %v3269, %v3279
        %v3288 = vmul.f32 %v3265, %v3280
        %v3289 = vmul.f32 %v3261, %v3281
        %v3290 = vmul.f32 %v3273, %v3282
        %v3291 = vmul.f32 %v3270, %v3279
        %v3292 = vmul.f32 %v3266, %v3280
        %v3293 = vmul.f32 %v3262, %v3281
        %v3294 = vmul.f32 %v3274, %v3282
        %v3295 = vmul.f32 %v3271, %v3279
        %v3296 = vmul.f32 %v3267, %v3280
        %v3297 = vmul.f32 %v3263, %v3281
        %v3298 = vmul.f32 %v3275, %v3282
        %v3299 = vmul.f32 %v3272, %v3279
        %v3300 = vmul.f32 %v3268, %v3280
        %v3301 = vmul.f32 %v3264, %v3281
        %v3302 = vmul.f32 %v3276, %v3282
        %3303 = vset.pattern.permute.xlu0 6
        %3304 = vperm.xlu0 %3303, %v431
        %v3305 = vpop.permute.xlu0 %3304
        %3307 = vset.pattern.permute.xlu0 6
        %3308 = vperm.xlu0 %3307, %v432
        %v3309 = vpop.permute.xlu0 %3308
        %3311 = vset.pattern.permute.xlu0 6
        %3312 = vperm.xlu0 %3311, %v433
        %v3313 = vpop.permute.xlu0 %3312
        %3315 = vset.pattern.permute.xlu0 6
        %3316 = vperm.xlu0 %3315, %v434
        %v3317 = vpop.permute.xlu0 %3316
        %v3319 = vmul.f32 %v3287, %v3305
        %v3320 = vmul.f32 %v3288, %v3305
        %v3321 = vmul.f32 %v3289, %v3305
        %v3322 = vmul.f32 %v3290, %v3305
        %v3323 = vmul.f32 %v3291, %v3309
        %v3324 = vmul.f32 %v3292, %v3309
        %v3325 = vmul.f32 %v3293, %v3309
        %v3326 = vmul.f32 %v3294, %v3309
        %v3327 = vmul.f32 %v3295, %v3313
        %v3328 = vmul.f32 %v3296, %v3313
        %v3329 = vmul.f32 %v3297, %v3313
        %v3330 = vmul.f32 %v3298, %v3313
        %v3331 = vmul.f32 %v3299, %v3317
        %v3332 = vmul.f32 %v3300, %v3317
        %v3333 = vmul.f32 %v3301, %v3317
        %v3334 = vmul.f32 %v3302, %v3317
        %v3335 = vadd.f32 %v3213, %v3319
        %v3336 = vadd.f32 %v3214, %v3320
        %v3337 = vadd.f32 %v3215, %v3321
        %v3338 = vadd.f32 %v3216, %v3322
        %v3339 = vadd.f32 %v3217, %v3323
        %v3340 = vadd.f32 %v3218, %v3324
        %v3341 = vadd.f32 %v3219, %v3325
        %v3342 = vadd.f32 %v3220, %v3326
        %v3343 = vadd.f32 %v3221, %v3327
        %v3344 = vadd.f32 %v3222, %v3328
        %v3345 = vadd.f32 %v3223, %v3329
        %v3346 = vadd.f32 %v3224, %v3330
        %v3347 = vadd.f32 %v3225, %v3331
        %v3348 = vadd.f32 %v3226, %v3332
        %v3349 = vadd.f32 %v3227, %v3333
        %v3350 = vadd.f32 %v3228, %v3334
        %3351 = vrot.lane.b32.xlu0 %v2407, 112
        %v3352 = vpop.permute.xlu0 %3351
        %3353 = vrot.lane.b32.xlu0 %v2409, 112
        %v3354 = vpop.permute.xlu0 %3353
        %3355 = vrot.lane.b32.xlu0 %v2412, 112
        %v3356 = vpop.permute.xlu0 %3355
        %3357 = vrot.lane.b32.xlu0 %v2414, 112
        %v3358 = vpop.permute.xlu0 %3357
        %3359 = vrot.lane.b32.xlu0 %v2464, 112
        %v3360 = vpop.permute.xlu0 %3359
        %3361 = vrot.lane.b32.xlu0 %v2466, 112
        %v3362 = vpop.permute.xlu0 %3361
        %3363 = vrot.lane.b32.xlu0 %v2469, 112
        %v3364 = vpop.permute.xlu0 %3363
        %3365 = vrot.lane.b32.xlu0 %v2471, 112
        %v3366 = vpop.permute.xlu0 %3365
        %3367 = vrot.lane.b32.xlu0 %v2521, 112
        %v3368 = vpop.permute.xlu0 %3367
        %3369 = vrot.lane.b32.xlu0 %v2523, 112
        %v3370 = vpop.permute.xlu0 %3369
        %3371 = vrot.lane.b32.xlu0 %v2526, 112
        %v3372 = vpop.permute.xlu0 %3371
        %3373 = vrot.lane.b32.xlu0 %v2528, 112
        %v3374 = vpop.permute.xlu0 %3373
        %3375 = vrot.lane.b32.xlu0 %v2578, 112
        %v3376 = vpop.permute.xlu0 %3375
        %3377 = vrot.lane.b32.xlu0 %v2580, 112
        %v3378 = vpop.permute.xlu0 %3377
        %3379 = vrot.lane.b32.xlu0 %v2583, 112
        %v3380 = vpop.permute.xlu0 %3379
        %3381 = vrot.lane.b32.xlu0 %v2585, 112
        %v3382 = vpop.permute.xlu0 %3381
        %v3383 = vsel %vm1711, %v3368, %v3376
        %v3384 = vsel %vm1711, %v3370, %v3378
        %v3385 = vsel %vm1711, %v3372, %v3380
        %v3386 = vsel %vm1711, %v3374, %v3382
        %v3387 = vsel %vm1711, %v3360, %v3368
        %v3388 = vsel %vm1711, %v3362, %v3370
        %v3389 = vsel %vm1711, %v3364, %v3372
        %v3390 = vsel %vm1711, %v3366, %v3374
        %v3391 = vsel %vm1711, %v3352, %v3360
        %v3392 = vsel %vm1711, %v3354, %v3362
        %v3393 = vsel %vm1711, %v3356, %v3364
        %v3394 = vsel %vm1711, %v3358, %v3366
        %v3395 = vsel %vm1711, %v3376, %v3352
        %v3396 = vsel %vm1711, %v3378, %v3354
        %v3397 = vsel %vm1711, %v3380, %v3356
        %v3398 = vsel %vm1711, %v3382, %v3358
        %v3399 = vld [vmem:[%s1728] ss:$8 sm:$0xf]
        %v3401 = vperm.slane %v3399, 0
        %v3402 = vperm.slane %v3399, 1
        %v3403 = vperm.slane %v3399, 2
        %v3404 = vperm.slane %v3399, 3
        %v3409 = vmul.f32 %v3391, %v3401
        %v3410 = vmul.f32 %v3387, %v3402
        %v3411 = vmul.f32 %v3383, %v3403
        %v3412 = vmul.f32 %v3395, %v3404
        %v3413 = vmul.f32 %v3392, %v3401
        %v3414 = vmul.f32 %v3388, %v3402
        %v3415 = vmul.f32 %v3384, %v3403
        %v3416 = vmul.f32 %v3396, %v3404
        %v3417 = vmul.f32 %v3393, %v3401
        %v3418 = vmul.f32 %v3389, %v3402
        %v3419 = vmul.f32 %v3385, %v3403
        %v3420 = vmul.f32 %v3397, %v3404
        %v3421 = vmul.f32 %v3394, %v3401
        %v3422 = vmul.f32 %v3390, %v3402
        %v3423 = vmul.f32 %v3386, %v3403
        %v3424 = vmul.f32 %v3398, %v3404
        %3425 = vset.pattern.permute.xlu0 7
        %3426 = vperm.xlu0 %3425, %v431
        %v3427 = vpop.permute.xlu0 %3426
        %3429 = vset.pattern.permute.xlu0 7
        %3430 = vperm.xlu0 %3429, %v432
        %v3431 = vpop.permute.xlu0 %3430
        %3433 = vset.pattern.permute.xlu0 7
        %3434 = vperm.xlu0 %3433, %v433
        %v3435 = vpop.permute.xlu0 %3434
        %3437 = vset.pattern.permute.xlu0 7
        %3438 = vperm.xlu0 %3437, %v434
        %v3439 = vpop.permute.xlu0 %3438
        %v3441 = vmul.f32 %v3409, %v3427
        %v3442 = vmul.f32 %v3410, %v3427
        %v3443 = vmul.f32 %v3411, %v3427
        %v3444 = vmul.f32 %v3412, %v3427
        %v3445 = vmul.f32 %v3413, %v3431
        %v3446 = vmul.f32 %v3414, %v3431
        %v3447 = vmul.f32 %v3415, %v3431
        %v3448 = vmul.f32 %v3416, %v3431
        %v3449 = vmul.f32 %v3417, %v3435
        %v3450 = vmul.f32 %v3418, %v3435
        %v3451 = vmul.f32 %v3419, %v3435
        %v3452 = vmul.f32 %v3420, %v3435
        %v3453 = vmul.f32 %v3421, %v3439
        %v3454 = vmul.f32 %v3422, %v3439
        %v3455 = vmul.f32 %v3423, %v3439
        %v3456 = vmul.f32 %v3424, %v3439
        %v3457 = vadd.f32 %v3335, %v3441
        %v3458 = vadd.f32 %v3336, %v3442
        %v3459 = vadd.f32 %v3337, %v3443
        %v3460 = vadd.f32 %v3338, %v3444
        %v3461 = vadd.f32 %v3339, %v3445
        %v3462 = vadd.f32 %v3340, %v3446
        %v3463 = vadd.f32 %v3341, %v3447
        %v3464 = vadd.f32 %v3342, %v3448
        %v3465 = vadd.f32 %v3343, %v3449
        %v3466 = vadd.f32 %v3344, %v3450
        %v3467 = vadd.f32 %v3345, %v3451
        %v3468 = vadd.f32 %v3346, %v3452
        %v3469 = vadd.f32 %v3347, %v3453
        %v3470 = vadd.f32 %v3348, %v3454
        %v3471 = vadd.f32 %v3349, %v3455
        %v3472 = vadd.f32 %v3350, %v3456
        %3473 = vrot.lane.b32.xlu0 %v2407, 111
        %v3474 = vpop.permute.xlu0 %3473
        %3475 = vrot.lane.b32.xlu0 %v2409, 111
        %v3476 = vpop.permute.xlu0 %3475
        %3477 = vrot.lane.b32.xlu0 %v2412, 111
        %v3478 = vpop.permute.xlu0 %3477
        %3479 = vrot.lane.b32.xlu0 %v2414, 111
        %v3480 = vpop.permute.xlu0 %3479
        %3481 = vrot.lane.b32.xlu0 %v2464, 111
        %v3482 = vpop.permute.xlu0 %3481
        %3483 = vrot.lane.b32.xlu0 %v2466, 111
        %v3484 = vpop.permute.xlu0 %3483
        %3485 = vrot.lane.b32.xlu0 %v2469, 111
        %v3486 = vpop.permute.xlu0 %3485
        %3487 = vrot.lane.b32.xlu0 %v2471, 111
        %v3488 = vpop.permute.xlu0 %3487
        %3489 = vrot.lane.b32.xlu0 %v2521, 111
        %v3490 = vpop.permute.xlu0 %3489
        %3491 = vrot.lane.b32.xlu0 %v2523, 111
        %v3492 = vpop.permute.xlu0 %3491
        %3493 = vrot.lane.b32.xlu0 %v2526, 111
        %v3494 = vpop.permute.xlu0 %3493
        %3495 = vrot.lane.b32.xlu0 %v2528, 111
        %v3496 = vpop.permute.xlu0 %3495
        %3497 = vrot.lane.b32.xlu0 %v2578, 111
        %v3498 = vpop.permute.xlu0 %3497
        %3499 = vrot.lane.b32.xlu0 %v2580, 111
        %v3500 = vpop.permute.xlu0 %3499
        %3501 = vrot.lane.b32.xlu0 %v2583, 111
        %v3502 = vpop.permute.xlu0 %3501
        %3503 = vrot.lane.b32.xlu0 %v2585, 111
        %v3504 = vpop.permute.xlu0 %3503
        %v3505 = vsel %vm1803, %v3490, %v3498
        %v3506 = vsel %vm1803, %v3492, %v3500
        %v3507 = vsel %vm1803, %v3494, %v3502
        %v3508 = vsel %vm1803, %v3496, %v3504
        %v3509 = vsel %vm1803, %v3482, %v3490
        %v3510 = vsel %vm1803, %v3484, %v3492
        %v3511 = vsel %vm1803, %v3486, %v3494
        %v3512 = vsel %vm1803, %v3488, %v3496
        %v3513 = vsel %vm1803, %v3474, %v3482
        %v3514 = vsel %vm1803, %v3476, %v3484
        %v3515 = vsel %vm1803, %v3478, %v3486
        %v3516 = vsel %vm1803, %v3480, %v3488
        %v3517 = vsel %vm1803, %v3498, %v3474
        %v3518 = vsel %vm1803, %v3500, %v3476
        %v3519 = vsel %vm1803, %v3502, %v3478
        %v3520 = vsel %vm1803, %v3504, %v3480
        %v3521 = vld [vmem:[%s1820] ss:$8 sm:$0xf]
        %v3523 = vperm.slane %v3521, 0
        %v3524 = vperm.slane %v3521, 1
        %v3525 = vperm.slane %v3521, 2
        %v3526 = vperm.slane %v3521, 3
        %v3531 = vmul.f32 %v3513, %v3523
        %v3532 = vmul.f32 %v3509, %v3524
        %v3533 = vmul.f32 %v3505, %v3525
        %v3534 = vmul.f32 %v3517, %v3526
        %v3535 = vmul.f32 %v3514, %v3523
        %v3536 = vmul.f32 %v3510, %v3524
        %v3537 = vmul.f32 %v3506, %v3525
        %v3538 = vmul.f32 %v3518, %v3526
        %v3539 = vmul.f32 %v3515, %v3523
        %v3540 = vmul.f32 %v3511, %v3524
        %v3541 = vmul.f32 %v3507, %v3525
        %v3542 = vmul.f32 %v3519, %v3526
        %v3543 = vmul.f32 %v3516, %v3523
        %v3544 = vmul.f32 %v3512, %v3524
        %v3545 = vmul.f32 %v3508, %v3525
        %v3546 = vmul.f32 %v3520, %v3526
        %3547 = vset.pattern.permute.xlu0 8
        %3548 = vperm.xlu0 %3547, %v431
        %v3549 = vpop.permute.xlu0 %3548
        %3551 = vset.pattern.permute.xlu0 8
        %3552 = vperm.xlu0 %3551, %v432
        %v3553 = vpop.permute.xlu0 %3552
        %3555 = vset.pattern.permute.xlu0 8
        %3556 = vperm.xlu0 %3555, %v433
        %v3557 = vpop.permute.xlu0 %3556
        %3559 = vset.pattern.permute.xlu0 8
        %3560 = vperm.xlu0 %3559, %v434
        %v3561 = vpop.permute.xlu0 %3560
        %v3563 = vmul.f32 %v3531, %v3549
        %v3564 = vmul.f32 %v3532, %v3549
        %v3565 = vmul.f32 %v3533, %v3549
        %v3566 = vmul.f32 %v3534, %v3549
        %v3567 = vmul.f32 %v3535, %v3553
        %v3568 = vmul.f32 %v3536, %v3553
        %v3569 = vmul.f32 %v3537, %v3553
        %v3570 = vmul.f32 %v3538, %v3553
        %v3571 = vmul.f32 %v3539, %v3557
        %v3572 = vmul.f32 %v3540, %v3557
        %v3573 = vmul.f32 %v3541, %v3557
        %v3574 = vmul.f32 %v3542, %v3557
        %v3575 = vmul.f32 %v3543, %v3561
        %v3576 = vmul.f32 %v3544, %v3561
        %v3577 = vmul.f32 %v3545, %v3561
        %v3578 = vmul.f32 %v3546, %v3561
        %v3579 = vadd.f32 %v3457, %v3563
        %v3580 = vadd.f32 %v3458, %v3564
        %v3581 = vadd.f32 %v3459, %v3565
        %v3582 = vadd.f32 %v3460, %v3566
        %v3583 = vadd.f32 %v3461, %v3567
        %v3584 = vadd.f32 %v3462, %v3568
        %v3585 = vadd.f32 %v3463, %v3569
        %v3586 = vadd.f32 %v3464, %v3570
        %v3587 = vadd.f32 %v3465, %v3571
        %v3588 = vadd.f32 %v3466, %v3572
        %v3589 = vadd.f32 %v3467, %v3573
        %v3590 = vadd.f32 %v3468, %v3574
        %v3591 = vadd.f32 %v3469, %v3575
        %v3592 = vadd.f32 %v3470, %v3576
        %v3593 = vadd.f32 %v3471, %v3577
        %v3594 = vadd.f32 %v3472, %v3578
        %3595 = vset.pattern.permute.xlu0 9
        %3596 = vperm.xlu0 %3595, %v431
        %v3597 = vpop.permute.xlu0 %3596
        %3599 = vset.pattern.permute.xlu0 9
        %3600 = vperm.xlu0 %3599, %v432
        %v3601 = vpop.permute.xlu0 %3600
        %3603 = vset.pattern.permute.xlu0 9
        %3604 = vperm.xlu0 %3603, %v433
        %v3605 = vpop.permute.xlu0 %3604
        %3607 = vset.pattern.permute.xlu0 9
        %3608 = vperm.xlu0 %3607, %v434
        %v3609 = vpop.permute.xlu0 %3608
        %v3611 = vadd.f32 %v3579, %v3597
        %v3612 = vadd.f32 %v3580, %v3597
        %v3613 = vadd.f32 %v3581, %v3597
        %v3614 = vadd.f32 %v3582, %v3597
        %v3615 = vadd.f32 %v3583, %v3601
        %v3616 = vadd.f32 %v3584, %v3601
        %v3617 = vadd.f32 %v3585, %v3601
        %v3618 = vadd.f32 %v3586, %v3601
        %v3619 = vadd.f32 %v3587, %v3605
        %v3620 = vadd.f32 %v3588, %v3605
        %v3621 = vadd.f32 %v3589, %v3605
        %v3622 = vadd.f32 %v3590, %v3605
        %v3623 = vadd.f32 %v3591, %v3609
        %v3624 = vadd.f32 %v3592, %v3609
        %v3625 = vadd.f32 %v3593, %v3609
        %v3626 = vadd.f32 %v3594, %v3609
        %v3627 = vmax.f32 %v3611, 0.0
        %v3628 = vmax.f32 %v3612, 0.0
        %v3629 = vmax.f32 %v3613, 0.0
        %v3630 = vmax.f32 %v3614, 0.0
        %v3631 = vmax.f32 %v3615, 0.0
        %v3632 = vmax.f32 %v3616, 0.0
        %v3633 = vmax.f32 %v3617, 0.0
        %v3634 = vmax.f32 %v3618, 0.0
        %v3635 = vmax.f32 %v3619, 0.0
        %v3636 = vmax.f32 %v3620, 0.0
        %v3637 = vmax.f32 %v3621, 0.0
        %v3638 = vmax.f32 %v3622, 0.0
        %v3639 = vmax.f32 %v3623, 0.0
        %v3640 = vmax.f32 %v3624, 0.0
        %v3641 = vmax.f32 %v3625, 0.0
        %v3642 = vmax.f32 %v3626, 0.0
        %3643 = vrot.lane.b32.xlu0 %v3627, 17
        %v3644 = vpop.permute.xlu0 %3643
        %3645 = vrot.lane.b32.xlu0 %v3631, 17
        %v3646 = vpop.permute.xlu0 %3645
        %3647 = vrot.lane.b32.xlu0 %v3635, 17
        %v3648 = vpop.permute.xlu0 %3647
        %3649 = vrot.lane.b32.xlu0 %v3639, 17
        %v3650 = vpop.permute.xlu0 %3649
        %3651 = vrot.lane.b32.xlu0 %v3628, 17
        %v3652 = vpop.permute.xlu0 %3651
        %3653 = vrot.lane.b32.xlu0 %v3632, 17
        %v3654 = vpop.permute.xlu0 %3653
        %3655 = vrot.lane.b32.xlu0 %v3636, 17
        %v3656 = vpop.permute.xlu0 %3655
        %3657 = vrot.lane.b32.xlu0 %v3640, 17
        %v3658 = vpop.permute.xlu0 %3657
        %3659 = vrot.lane.b32.xlu0 %v3629, 17
        %v3660 = vpop.permute.xlu0 %3659
        %3661 = vrot.lane.b32.xlu0 %v3633, 17
        %v3662 = vpop.permute.xlu0 %3661
        %3663 = vrot.lane.b32.xlu0 %v3637, 17
        %v3664 = vpop.permute.xlu0 %3663
        %3665 = vrot.lane.b32.xlu0 %v3641, 17
        %v3666 = vpop.permute.xlu0 %3665
        %3667 = vrot.lane.b32.xlu0 %v3630, 17
        %v3668 = vpop.permute.xlu0 %3667
        %3669 = vrot.lane.b32.xlu0 %v3634, 17
        %v3670 = vpop.permute.xlu0 %3669
        %3671 = vrot.lane.b32.xlu0 %v3638, 17
        %v3672 = vpop.permute.xlu0 %3671
        %3673 = vrot.lane.b32.xlu0 %v3642, 17
        %v3674 = vpop.permute.xlu0 %3673
        %v3675 = vsel %vm1144, %v3660, %v3668
        %v3676 = vsel %vm1144, %v3662, %v3670
        %v3677 = vsel %vm1144, %v3664, %v3672
        %v3678 = vsel %vm1144, %v3666, %v3674
        %v3679 = vsel %vm1144, %v3652, %v3660
        %v3680 = vsel %vm1144, %v3654, %v3662
        %v3681 = vsel %vm1144, %v3656, %v3664
        %v3682 = vsel %vm1144, %v3658, %v3666
        %v3683 = vsel %vm1144, %v3644, %v3652
        %v3684 = vsel %vm1144, %v3646, %v3654
        %v3685 = vsel %vm1144, %v3648, %v3656
        %v3686 = vsel %vm1144, %v3650, %v3658
        %v3687 = vsel %vm1144, %v3668, %v3644
        %v3688 = vsel %vm1144, %v3670, %v3646
        %v3689 = vsel %vm1144, %v3672, %v3648
        %v3690 = vsel %vm1144, %v3674, %v3650
        %v3691 = vmul.f32 %v3687, %v2669
        %v3692 = vmul.f32 %v3683, %v2670
        %v3693 = vmul.f32 %v3679, %v2671
        %v3694 = vmul.f32 %v3675, %v2672
        %v3695 = vmul.f32 %v3688, %v2669
        %v3696 = vmul.f32 %v3684, %v2670
        %v3697 = vmul.f32 %v3680, %v2671
        %v3698 = vmul.f32 %v3676, %v2672
        %v3699 = vmul.f32 %v3689, %v2669
        %v3700 = vmul.f32 %v3685, %v2670
        %v3701 = vmul.f32 %v3681, %v2671
        %v3702 = vmul.f32 %v3677, %v2672
        %v3703 = vmul.f32 %v3690, %v2669
        %v3704 = vmul.f32 %v3686, %v2670
        %v3705 = vmul.f32 %v3682, %v2671
        %v3706 = vmul.f32 %v3678, %v2672
        %v3707 = vpack.c.bf16 %v3692, %v3691
        %v3708 = vpack.c.bf16 %v3694, %v3693
        %v3709 = vpack.c.bf16 %v3696, %v3695
        %v3710 = vpack.c.bf16 %v3698, %v3697
        %v3711 = vpack.c.bf16 %v3700, %v3699
        %v3712 = vpack.c.bf16 %v3702, %v3701
        %v3713 = vpack.c.bf16 %v3704, %v3703
        %v3714 = vpack.c.bf16 %v3706, %v3705
        %3715 = vst [vmem:[#allocation2] sm:$0xff] %v3707
        %3716 = vst [vmem:[#allocation2 + $0x8] sm:$0xff] %v3708
        %3717 = vst [vmem:[#allocation2 + $0x10] sm:$0xff] %v3709
        %3718 = vst [vmem:[#allocation2 + $0x18] sm:$0xff] %v3710
        %3719 = vst [vmem:[#allocation2 + $0x20] sm:$0xff] %v3711
        %3720 = vst [vmem:[#allocation2 + $0x28] sm:$0xff] %v3712
        %3721 = vst [vmem:[#allocation2 + $0x30] sm:$0xff] %v3713
        %3722 = vst [vmem:[#allocation2 + $0x38] sm:$0xff] %v3714
        %3723 = vrot.lane.b32.xlu0 %v3627, 16
        %v3724 = vpop.permute.xlu0 %3723
        %3725 = vrot.lane.b32.xlu0 %v3631, 16
        %v3726 = vpop.permute.xlu0 %3725
        %3727 = vrot.lane.b32.xlu0 %v3635, 16
        %v3728 = vpop.permute.xlu0 %3727
        %3729 = vrot.lane.b32.xlu0 %v3639, 16
        %v3730 = vpop.permute.xlu0 %3729
        %3731 = vrot.lane.b32.xlu0 %v3628, 16
        %v3732 = vpop.permute.xlu0 %3731
        %3733 = vrot.lane.b32.xlu0 %v3632, 16
        %v3734 = vpop.permute.xlu0 %3733
        %3735 = vrot.lane.b32.xlu0 %v3636, 16
        %v3736 = vpop.permute.xlu0 %3735
        %3737 = vrot.lane.b32.xlu0 %v3640, 16
        %v3738 = vpop.permute.xlu0 %3737
        %3739 = vrot.lane.b32.xlu0 %v3629, 16
        %v3740 = vpop.permute.xlu0 %3739
        %3741 = vrot.lane.b32.xlu0 %v3633, 16
        %v3742 = vpop.permute.xlu0 %3741
        %3743 = vrot.lane.b32.xlu0 %v3637, 16
        %v3744 = vpop.permute.xlu0 %3743
        %3745 = vrot.lane.b32.xlu0 %v3641, 16
        %v3746 = vpop.permute.xlu0 %3745
        %3747 = vrot.lane.b32.xlu0 %v3630, 16
        %v3748 = vpop.permute.xlu0 %3747
        %3749 = vrot.lane.b32.xlu0 %v3634, 16
        %v3750 = vpop.permute.xlu0 %3749
        %3751 = vrot.lane.b32.xlu0 %v3638, 16
        %v3752 = vpop.permute.xlu0 %3751
        %3753 = vrot.lane.b32.xlu0 %v3642, 16
        %v3754 = vpop.permute.xlu0 %3753
        %v3755 = vsel %vm1235, %v3740, %v3748
        %v3756 = vsel %vm1235, %v3742, %v3750
        %v3757 = vsel %vm1235, %v3744, %v3752
        %v3758 = vsel %vm1235, %v3746, %v3754
        %v3759 = vsel %vm1235, %v3732, %v3740
        %v3760 = vsel %vm1235, %v3734, %v3742
        %v3761 = vsel %vm1235, %v3736, %v3744
        %v3762 = vsel %vm1235, %v3738, %v3746
        %v3763 = vsel %vm1235, %v3724, %v3732
        %v3764 = vsel %vm1235, %v3726, %v3734
        %v3765 = vsel %vm1235, %v3728, %v3736
        %v3766 = vsel %vm1235, %v3730, %v3738
        %v3767 = vsel %vm1235, %v3748, %v3724
        %v3768 = vsel %vm1235, %v3750, %v3726
        %v3769 = vsel %vm1235, %v3752, %v3728
        %v3770 = vsel %vm1235, %v3754, %v3730
        %v3771 = vld [vmem:[%s1252] ss:$8 sm:$0xf]
        %v3773 = vperm.slane %v3771, 0
        %v3774 = vperm.slane %v3771, 1
        %v3775 = vperm.slane %v3771, 2
        %v3776 = vperm.slane %v3771, 3
        %v3781 = vmul.f32 %v3767, %v3773
        %v3782 = vmul.f32 %v3763, %v3774
        %v3783 = vmul.f32 %v3759, %v3775
        %v3784 = vmul.f32 %v3755, %v3776
        %v3785 = vmul.f32 %v3768, %v3773
        %v3786 = vmul.f32 %v3764, %v3774
        %v3787 = vmul.f32 %v3760, %v3775
        %v3788 = vmul.f32 %v3756, %v3776
        %v3789 = vmul.f32 %v3769, %v3773
        %v3790 = vmul.f32 %v3765, %v3774
        %v3791 = vmul.f32 %v3761, %v3775
        %v3792 = vmul.f32 %v3757, %v3776
        %v3793 = vmul.f32 %v3770, %v3773
        %v3794 = vmul.f32 %v3766, %v3774
        %v3795 = vmul.f32 %v3762, %v3775
        %v3796 = vmul.f32 %v3758, %v3776
        %v3797 = vpack.c.bf16 %v3782, %v3781
        %v3798 = vpack.c.bf16 %v3784, %v3783
        %v3799 = vpack.c.bf16 %v3786, %v3785
        %v3800 = vpack.c.bf16 %v3788, %v3787
        %v3801 = vpack.c.bf16 %v3790, %v3789
        %v3802 = vpack.c.bf16 %v3792, %v3791
        %v3803 = vpack.c.bf16 %v3794, %v3793
        %v3804 = vpack.c.bf16 %v3796, %v3795
        %3805 = vst [vmem:[#allocation2 + $0x40] sm:$0xff] %v3797
        %3806 = vst [vmem:[#allocation2 + $0x48] sm:$0xff] %v3798
        %3807 = vst [vmem:[#allocation2 + $0x50] sm:$0xff] %v3799
        %3808 = vst [vmem:[#allocation2 + $0x58] sm:$0xff] %v3800
        %3809 = vst [vmem:[#allocation2 + $0x60] sm:$0xff] %v3801
        %3810 = vst [vmem:[#allocation2 + $0x68] sm:$0xff] %v3802
        %3811 = vst [vmem:[#allocation2 + $0x70] sm:$0xff] %v3803
        %3812 = vst [vmem:[#allocation2 + $0x78] sm:$0xff] %v3804
        %3813 = vrot.lane.b32.xlu0 %v3627, 15
        %v3814 = vpop.permute.xlu0 %3813
        %3815 = vrot.lane.b32.xlu0 %v3631, 15
        %v3816 = vpop.permute.xlu0 %3815
        %3817 = vrot.lane.b32.xlu0 %v3635, 15
        %v3818 = vpop.permute.xlu0 %3817
        %3819 = vrot.lane.b32.xlu0 %v3639, 15
        %v3820 = vpop.permute.xlu0 %3819
        %3821 = vrot.lane.b32.xlu0 %v3628, 15
        %v3822 = vpop.permute.xlu0 %3821
        %3823 = vrot.lane.b32.xlu0 %v3632, 15
        %v3824 = vpop.permute.xlu0 %3823
        %3825 = vrot.lane.b32.xlu0 %v3636, 15
        %v3826 = vpop.permute.xlu0 %3825
        %3827 = vrot.lane.b32.xlu0 %v3640, 15
        %v3828 = vpop.permute.xlu0 %3827
        %3829 = vrot.lane.b32.xlu0 %v3629, 15
        %v3830 = vpop.permute.xlu0 %3829
        %3831 = vrot.lane.b32.xlu0 %v3633, 15
        %v3832 = vpop.permute.xlu0 %3831
        %3833 = vrot.lane.b32.xlu0 %v3637, 15
        %v3834 = vpop.permute.xlu0 %3833
        %3835 = vrot.lane.b32.xlu0 %v3641, 15
        %v3836 = vpop.permute.xlu0 %3835
        %3837 = vrot.lane.b32.xlu0 %v3630, 15
        %v3838 = vpop.permute.xlu0 %3837
        %3839 = vrot.lane.b32.xlu0 %v3634, 15
        %v3840 = vpop.permute.xlu0 %3839
        %3841 = vrot.lane.b32.xlu0 %v3638, 15
        %v3842 = vpop.permute.xlu0 %3841
        %3843 = vrot.lane.b32.xlu0 %v3642, 15
        %v3844 = vpop.permute.xlu0 %3843
        %v3845 = vsel %vm1327, %v3830, %v3838
        %v3846 = vsel %vm1327, %v3832, %v3840
        %v3847 = vsel %vm1327, %v3834, %v3842
        %v3848 = vsel %vm1327, %v3836, %v3844
        %v3849 = vsel %vm1327, %v3822, %v3830
        %v3850 = vsel %vm1327, %v3824, %v3832
        %v3851 = vsel %vm1327, %v3826, %v3834
        %v3852 = vsel %vm1327, %v3828, %v3836
        %v3853 = vsel %vm1327, %v3814, %v3822
        %v3854 = vsel %vm1327, %v3816, %v3824
        %v3855 = vsel %vm1327, %v3818, %v3826
        %v3856 = vsel %vm1327, %v3820, %v3828
        %v3857 = vsel %vm1327, %v3838, %v3814
        %v3858 = vsel %vm1327, %v3840, %v3816
        %v3859 = vsel %vm1327, %v3842, %v3818
        %v3860 = vsel %vm1327, %v3844, %v3820
        %v3861 = vld [vmem:[%s1344] ss:$8 sm:$0xf]
        %v3863 = vperm.slane %v3861, 0
        %v3864 = vperm.slane %v3861, 1
        %v3865 = vperm.slane %v3861, 2
        %v3866 = vperm.slane %v3861, 3
        %v3871 = vmul.f32 %v3857, %v3863
        %v3872 = vmul.f32 %v3853, %v3864
        %v3873 = vmul.f32 %v3849, %v3865
        %v3874 = vmul.f32 %v3845, %v3866
        %v3875 = vmul.f32 %v3858, %v3863
        %v3876 = vmul.f32 %v3854, %v3864
        %v3877 = vmul.f32 %v3850, %v3865
        %v3878 = vmul.f32 %v3846, %v3866
        %v3879 = vmul.f32 %v3859, %v3863
        %v3880 = vmul.f32 %v3855, %v3864
        %v3881 = vmul.f32 %v3851, %v3865
        %v3882 = vmul.f32 %v3847, %v3866
        %v3883 = vmul.f32 %v3860, %v3863
        %v3884 = vmul.f32 %v3856, %v3864
        %v3885 = vmul.f32 %v3852, %v3865
        %v3886 = vmul.f32 %v3848, %v3866
        %v3887 = vpack.c.bf16 %v3872, %v3871
        %v3888 = vpack.c.bf16 %v3874, %v3873
        %v3889 = vpack.c.bf16 %v3876, %v3875
        %v3890 = vpack.c.bf16 %v3878, %v3877
        %v3891 = vpack.c.bf16 %v3880, %v3879
        %v3892 = vpack.c.bf16 %v3882, %v3881
        %v3893 = vpack.c.bf16 %v3884, %v3883
        %v3894 = vpack.c.bf16 %v3886, %v3885
        %3895 = vst [vmem:[#allocation2 + $0x80] sm:$0xff] %v3887
        %3896 = vst [vmem:[#allocation2 + $0x88] sm:$0xff] %v3888
        %3897 = vst [vmem:[#allocation2 + $0x90] sm:$0xff] %v3889
        %3898 = vst [vmem:[#allocation2 + $0x98] sm:$0xff] %v3890
        %3899 = vst [vmem:[#allocation2 + $0xa0] sm:$0xff] %v3891
        %3900 = vst [vmem:[#allocation2 + $0xa8] sm:$0xff] %v3892
        %3901 = vst [vmem:[#allocation2 + $0xb0] sm:$0xff] %v3893
        %3902 = vst [vmem:[#allocation2 + $0xb8] sm:$0xff] %v3894
        %3903 = vrot.lane.b32.xlu0 %v3627, 1
        %v3904 = vpop.permute.xlu0 %3903
        %3905 = vrot.lane.b32.xlu0 %v3631, 1
        %v3906 = vpop.permute.xlu0 %3905
        %3907 = vrot.lane.b32.xlu0 %v3635, 1
        %v3908 = vpop.permute.xlu0 %3907
        %3909 = vrot.lane.b32.xlu0 %v3639, 1
        %v3910 = vpop.permute.xlu0 %3909
        %3911 = vrot.lane.b32.xlu0 %v3628, 1
        %v3912 = vpop.permute.xlu0 %3911
        %3913 = vrot.lane.b32.xlu0 %v3632, 1
        %v3914 = vpop.permute.xlu0 %3913
        %3915 = vrot.lane.b32.xlu0 %v3636, 1
        %v3916 = vpop.permute.xlu0 %3915
        %3917 = vrot.lane.b32.xlu0 %v3640, 1
        %v3918 = vpop.permute.xlu0 %3917
        %3919 = vrot.lane.b32.xlu0 %v3629, 1
        %v3920 = vpop.permute.xlu0 %3919
        %3921 = vrot.lane.b32.xlu0 %v3633, 1
        %v3922 = vpop.permute.xlu0 %3921
        %3923 = vrot.lane.b32.xlu0 %v3637, 1
        %v3924 = vpop.permute.xlu0 %3923
        %3925 = vrot.lane.b32.xlu0 %v3641, 1
        %v3926 = vpop.permute.xlu0 %3925
        %3927 = vrot.lane.b32.xlu0 %v3630, 1
        %v3928 = vpop.permute.xlu0 %3927
        %3929 = vrot.lane.b32.xlu0 %v3634, 1
        %v3930 = vpop.permute.xlu0 %3929
        %3931 = vrot.lane.b32.xlu0 %v3638, 1
        %v3932 = vpop.permute.xlu0 %3931
        %3933 = vrot.lane.b32.xlu0 %v3642, 1
        %v3934 = vpop.permute.xlu0 %3933
        %v3935 = vsel %vm1419, %v3920, %v3928
        %v3936 = vsel %vm1419, %v3922, %v3930
        %v3937 = vsel %vm1419, %v3924, %v3932
        %v3938 = vsel %vm1419, %v3926, %v3934
        %v3939 = vsel %vm1419, %v3912, %v3920
        %v3940 = vsel %vm1419, %v3914, %v3922
        %v3941 = vsel %vm1419, %v3916, %v3924
        %v3942 = vsel %vm1419, %v3918, %v3926
        %v3943 = vsel %vm1419, %v3904, %v3912
        %v3944 = vsel %vm1419, %v3906, %v3914
        %v3945 = vsel %vm1419, %v3908, %v3916
        %v3946 = vsel %vm1419, %v3910, %v3918
        %v3947 = vsel %vm1419, %v3928, %v3904
        %v3948 = vsel %vm1419, %v3930, %v3906
        %v3949 = vsel %vm1419, %v3932, %v3908
        %v3950 = vsel %vm1419, %v3934, %v3910
        %v3951 = vld [vmem:[%s1436] ss:$8 sm:$0xf]
        %v3953 = vperm.slane %v3951, 0
        %v3954 = vperm.slane %v3951, 1
        %v3955 = vperm.slane %v3951, 2
        %v3956 = vperm.slane %v3951, 3
        %v3961 = vmul.f32 %v3947, %v3953
        %v3962 = vmul.f32 %v3943, %v3954
        %v3963 = vmul.f32 %v3939, %v3955
        %v3964 = vmul.f32 %v3935, %v3956
        %v3965 = vmul.f32 %v3948, %v3953
        %v3966 = vmul.f32 %v3944, %v3954
        %v3967 = vmul.f32 %v3940, %v3955
        %v3968 = vmul.f32 %v3936, %v3956
        %v3969 = vmul.f32 %v3949, %v3953
        %v3970 = vmul.f32 %v3945, %v3954
        %v3971 = vmul.f32 %v3941, %v3955
        %v3972 = vmul.f32 %v3937, %v3956
        %v3973 = vmul.f32 %v3950, %v3953
        %v3974 = vmul.f32 %v3946, %v3954
        %v3975 = vmul.f32 %v3942, %v3955
        %v3976 = vmul.f32 %v3938, %v3956
        %v3977 = vpack.c.bf16 %v3962, %v3961
        %v3978 = vpack.c.bf16 %v3964, %v3963
        %v3979 = vpack.c.bf16 %v3966, %v3965
        %v3980 = vpack.c.bf16 %v3968, %v3967
        %v3981 = vpack.c.bf16 %v3970, %v3969
        %v3982 = vpack.c.bf16 %v3972, %v3971
        %v3983 = vpack.c.bf16 %v3974, %v3973
        %v3984 = vpack.c.bf16 %v3976, %v3975
        %3985 = vst [vmem:[#allocation2 + $0xc0] sm:$0xff] %v3977
        %3986 = vst [vmem:[#allocation2 + $0xc8] sm:$0xff] %v3978
        %3987 = vst [vmem:[#allocation2 + $0xd0] sm:$0xff] %v3979
        %3988 = vst [vmem:[#allocation2 + $0xd8] sm:$0xff] %v3980
        %3989 = vst [vmem:[#allocation2 + $0xe0] sm:$0xff] %v3981
        %3990 = vst [vmem:[#allocation2 + $0xe8] sm:$0xff] %v3982
        %3991 = vst [vmem:[#allocation2 + $0xf0] sm:$0xff] %v3983
        %3992 = vst [vmem:[#allocation2 + $0xf8] sm:$0xff] %v3984
        %v3993 = vpack.c.bf16 %v3628, %v3627
        %v3994 = vpack.c.bf16 %v3630, %v3629
        %v3995 = vpack.c.bf16 %v3632, %v3631
        %v3996 = vpack.c.bf16 %v3634, %v3633
        %v3997 = vpack.c.bf16 %v3636, %v3635
        %v3998 = vpack.c.bf16 %v3638, %v3637
        %v3999 = vpack.c.bf16 %v3640, %v3639
        %v4000 = vpack.c.bf16 %v3642, %v3641
        %4001 = vst [vmem:[#allocation2 + $0x100] sm:$0xff] %v3993
        %4002 = vst [vmem:[#allocation2 + $0x108] sm:$0xff] %v3994
        %4003 = vst [vmem:[#allocation2 + $0x110] sm:$0xff] %v3995
        %4004 = vst [vmem:[#allocation2 + $0x118] sm:$0xff] %v3996
        %4005 = vst [vmem:[#allocation2 + $0x120] sm:$0xff] %v3997
        %4006 = vst [vmem:[#allocation2 + $0x128] sm:$0xff] %v3998
        %4007 = vst [vmem:[#allocation2 + $0x130] sm:$0xff] %v3999
        %4008 = vst [vmem:[#allocation2 + $0x138] sm:$0xff] %v4000
        %4009 = vrot.lane.b32.xlu0 %v3627, 127
        %v4010 = vpop.permute.xlu0 %4009
        %4011 = vrot.lane.b32.xlu0 %v3631, 127
        %v4012 = vpop.permute.xlu0 %4011
        %4013 = vrot.lane.b32.xlu0 %v3635, 127
        %v4014 = vpop.permute.xlu0 %4013
        %4015 = vrot.lane.b32.xlu0 %v3639, 127
        %v4016 = vpop.permute.xlu0 %4015
        %4017 = vrot.lane.b32.xlu0 %v3628, 127
        %v4018 = vpop.permute.xlu0 %4017
        %4019 = vrot.lane.b32.xlu0 %v3632, 127
        %v4020 = vpop.permute.xlu0 %4019
        %4021 = vrot.lane.b32.xlu0 %v3636, 127
        %v4022 = vpop.permute.xlu0 %4021
        %4023 = vrot.lane.b32.xlu0 %v3640, 127
        %v4024 = vpop.permute.xlu0 %4023
        %4025 = vrot.lane.b32.xlu0 %v3629, 127
        %v4026 = vpop.permute.xlu0 %4025
        %4027 = vrot.lane.b32.xlu0 %v3633, 127
        %v4028 = vpop.permute.xlu0 %4027
        %4029 = vrot.lane.b32.xlu0 %v3637, 127
        %v4030 = vpop.permute.xlu0 %4029
        %4031 = vrot.lane.b32.xlu0 %v3641, 127
        %v4032 = vpop.permute.xlu0 %4031
        %4033 = vrot.lane.b32.xlu0 %v3630, 127
        %v4034 = vpop.permute.xlu0 %4033
        %4035 = vrot.lane.b32.xlu0 %v3634, 127
        %v4036 = vpop.permute.xlu0 %4035
        %4037 = vrot.lane.b32.xlu0 %v3638, 127
        %v4038 = vpop.permute.xlu0 %4037
        %4039 = vrot.lane.b32.xlu0 %v3642, 127
        %v4040 = vpop.permute.xlu0 %4039
        %v4041 = vsel %vm1527, %v4026, %v4034
        %v4042 = vsel %vm1527, %v4028, %v4036
        %v4043 = vsel %vm1527, %v4030, %v4038
        %v4044 = vsel %vm1527, %v4032, %v4040
        %v4045 = vsel %vm1527, %v4018, %v4026
        %v4046 = vsel %vm1527, %v4020, %v4028
        %v4047 = vsel %vm1527, %v4022, %v4030
        %v4048 = vsel %vm1527, %v4024, %v4032
        %v4049 = vsel %vm1527, %v4010, %v4018
        %v4050 = vsel %vm1527, %v4012, %v4020
        %v4051 = vsel %vm1527, %v4014, %v4022
        %v4052 = vsel %vm1527, %v4016, %v4024
        %v4053 = vsel %vm1527, %v4034, %v4010
        %v4054 = vsel %vm1527, %v4036, %v4012
        %v4055 = vsel %vm1527, %v4038, %v4014
        %v4056 = vsel %vm1527, %v4040, %v4016
        %v4057 = vld [vmem:[%s1544] ss:$8 sm:$0xf]
        %v4059 = vperm.slane %v4057, 0
        %v4060 = vperm.slane %v4057, 1
        %v4061 = vperm.slane %v4057, 2
        %v4062 = vperm.slane %v4057, 3
        %v4067 = vmul.f32 %v4049, %v4059
        %v4068 = vmul.f32 %v4045, %v4060
        %v4069 = vmul.f32 %v4041, %v4061
        %v4070 = vmul.f32 %v4053, %v4062
        %v4071 = vmul.f32 %v4050, %v4059
        %v4072 = vmul.f32 %v4046, %v4060
        %v4073 = vmul.f32 %v4042, %v4061
        %v4074 = vmul.f32 %v4054, %v4062
        %v4075 = vmul.f32 %v4051, %v4059
        %v4076 = vmul.f32 %v4047, %v4060
        %v4077 = vmul.f32 %v4043, %v4061
        %v4078 = vmul.f32 %v4055, %v4062
        %v4079 = vmul.f32 %v4052, %v4059
        %v4080 = vmul.f32 %v4048, %v4060
        %v4081 = vmul.f32 %v4044, %v4061
        %v4082 = vmul.f32 %v4056, %v4062
        %v4083 = vpack.c.bf16 %v4068, %v4067
        %v4084 = vpack.c.bf16 %v4070, %v4069
        %v4085 = vpack.c.bf16 %v4072, %v4071
        %v4086 = vpack.c.bf16 %v4074, %v4073
        %v4087 = vpack.c.bf16 %v4076, %v4075
        %v4088 = vpack.c.bf16 %v4078, %v4077
        %v4089 = vpack.c.bf16 %v4080, %v4079
        %v4090 = vpack.c.bf16 %v4082, %v4081
        %4091 = vst [vmem:[#allocation2 + $0x140] sm:$0xff] %v4083
        %4092 = vst [vmem:[#allocation2 + $0x148] sm:$0xff] %v4084
        %4093 = vst [vmem:[#allocation2 + $0x150] sm:$0xff] %v4085
        %4094 = vst [vmem:[#allocation2 + $0x158] sm:$0xff] %v4086
        %4095 = vst [vmem:[#allocation2 + $0x160] sm:$0xff] %v4087
        %4096 = vst [vmem:[#allocation2 + $0x168] sm:$0xff] %v4088
        %4097 = vst [vmem:[#allocation2 + $0x170] sm:$0xff] %v4089
        %4098 = vst [vmem:[#allocation2 + $0x178] sm:$0xff] %v4090
        %4099 = vrot.lane.b32.xlu0 %v3627, 113
        %v4100 = vpop.permute.xlu0 %4099
        %4101 = vrot.lane.b32.xlu0 %v3631, 113
        %v4102 = vpop.permute.xlu0 %4101
        %4103 = vrot.lane.b32.xlu0 %v3635, 113
        %v4104 = vpop.permute.xlu0 %4103
        %4105 = vrot.lane.b32.xlu0 %v3639, 113
        %v4106 = vpop.permute.xlu0 %4105
        %4107 = vrot.lane.b32.xlu0 %v3628, 113
        %v4108 = vpop.permute.xlu0 %4107
        %4109 = vrot.lane.b32.xlu0 %v3632, 113
        %v4110 = vpop.permute.xlu0 %4109
        %4111 = vrot.lane.b32.xlu0 %v3636, 113
        %v4112 = vpop.permute.xlu0 %4111
        %4113 = vrot.lane.b32.xlu0 %v3640, 113
        %v4114 = vpop.permute.xlu0 %4113
        %4115 = vrot.lane.b32.xlu0 %v3629, 113
        %v4116 = vpop.permute.xlu0 %4115
        %4117 = vrot.lane.b32.xlu0 %v3633, 113
        %v4118 = vpop.permute.xlu0 %4117
        %4119 = vrot.lane.b32.xlu0 %v3637, 113
        %v4120 = vpop.permute.xlu0 %4119
        %4121 = vrot.lane.b32.xlu0 %v3641, 113
        %v4122 = vpop.permute.xlu0 %4121
        %4123 = vrot.lane.b32.xlu0 %v3630, 113
        %v4124 = vpop.permute.xlu0 %4123
        %4125 = vrot.lane.b32.xlu0 %v3634, 113
        %v4126 = vpop.permute.xlu0 %4125
        %4127 = vrot.lane.b32.xlu0 %v3638, 113
        %v4128 = vpop.permute.xlu0 %4127
        %4129 = vrot.lane.b32.xlu0 %v3642, 113
        %v4130 = vpop.permute.xlu0 %4129
        %v4131 = vsel %vm1619, %v4116, %v4124
        %v4132 = vsel %vm1619, %v4118, %v4126
        %v4133 = vsel %vm1619, %v4120, %v4128
        %v4134 = vsel %vm1619, %v4122, %v4130
        %v4135 = vsel %vm1619, %v4108, %v4116
        %v4136 = vsel %vm1619, %v4110, %v4118
        %v4137 = vsel %vm1619, %v4112, %v4120
        %v4138 = vsel %vm1619, %v4114, %v4122
        %v4139 = vsel %vm1619, %v4100, %v4108
        %v4140 = vsel %vm1619, %v4102, %v4110
        %v4141 = vsel %vm1619, %v4104, %v4112
        %v4142 = vsel %vm1619, %v4106, %v4114
        %v4143 = vsel %vm1619, %v4124, %v4100
        %v4144 = vsel %vm1619, %v4126, %v4102
        %v4145 = vsel %vm1619, %v4128, %v4104
        %v4146 = vsel %vm1619, %v4130, %v4106
        %v4147 = vld [vmem:[%s1636] ss:$8 sm:$0xf]
        %v4149 = vperm.slane %v4147, 0
        %v4150 = vperm.slane %v4147, 1
        %v4151 = vperm.slane %v4147, 2
        %v4152 = vperm.slane %v4147, 3
        %v4157 = vmul.f32 %v4139, %v4149
        %v4158 = vmul.f32 %v4135, %v4150
        %v4159 = vmul.f32 %v4131, %v4151
        %v4160 = vmul.f32 %v4143, %v4152
        %v4161 = vmul.f32 %v4140, %v4149
        %v4162 = vmul.f32 %v4136, %v4150
        %v4163 = vmul.f32 %v4132, %v4151
        %v4164 = vmul.f32 %v4144, %v4152
        %v4165 = vmul.f32 %v4141, %v4149
        %v4166 = vmul.f32 %v4137, %v4150
        %v4167 = vmul.f32 %v4133, %v4151
        %v4168 = vmul.f32 %v4145, %v4152
        %v4169 = vmul.f32 %v4142, %v4149
        %v4170 = vmul.f32 %v4138, %v4150
        %v4171 = vmul.f32 %v4134, %v4151
        %v4172 = vmul.f32 %v4146, %v4152
        %v4173 = vpack.c.bf16 %v4158, %v4157
        %v4174 = vpack.c.bf16 %v4160, %v4159
        %v4175 = vpack.c.bf16 %v4162, %v4161
        %v4176 = vpack.c.bf16 %v4164, %v4163
        %v4177 = vpack.c.bf16 %v4166, %v4165
        %v4178 = vpack.c.bf16 %v4168, %v4167
        %v4179 = vpack.c.bf16 %v4170, %v4169
        %v4180 = vpack.c.bf16 %v4172, %v4171
        %4181 = vst [vmem:[#allocation2 + $0x180] sm:$0xff] %v4173
        %4182 = vst [vmem:[#allocation2 + $0x188] sm:$0xff] %v4174
        %4183 = vst [vmem:[#allocation2 + $0x190] sm:$0xff] %v4175
        %4184 = vst [vmem:[#allocation2 + $0x198] sm:$0xff] %v4176
        %4185 = vst [vmem:[#allocation2 + $0x1a0] sm:$0xff] %v4177
        %4186 = vst [vmem:[#allocation2 + $0x1a8] sm:$0xff] %v4178
        %4187 = vst [vmem:[#allocation2 + $0x1b0] sm:$0xff] %v4179
        %4188 = vst [vmem:[#allocation2 + $0x1b8] sm:$0xff] %v4180
        %4189 = vrot.lane.b32.xlu0 %v3627, 112
        %v4190 = vpop.permute.xlu0 %4189
        %4191 = vrot.lane.b32.xlu0 %v3631, 112
        %v4192 = vpop.permute.xlu0 %4191
        %4193 = vrot.lane.b32.xlu0 %v3635, 112
        %v4194 = vpop.permute.xlu0 %4193
        %4195 = vrot.lane.b32.xlu0 %v3639, 112
        %v4196 = vpop.permute.xlu0 %4195
        %4197 = vrot.lane.b32.xlu0 %v3628, 112
        %v4198 = vpop.permute.xlu0 %4197
        %4199 = vrot.lane.b32.xlu0 %v3632, 112
        %v4200 = vpop.permute.xlu0 %4199
        %4201 = vrot.lane.b32.xlu0 %v3636, 112
        %v4202 = vpop.permute.xlu0 %4201
        %4203 = vrot.lane.b32.xlu0 %v3640, 112
        %v4204 = vpop.permute.xlu0 %4203
        %4205 = vrot.lane.b32.xlu0 %v3629, 112
        %v4206 = vpop.permute.xlu0 %4205
        %4207 = vrot.lane.b32.xlu0 %v3633, 112
        %v4208 = vpop.permute.xlu0 %4207
        %4209 = vrot.lane.b32.xlu0 %v3637, 112
        %v4210 = vpop.permute.xlu0 %4209
        %4211 = vrot.lane.b32.xlu0 %v3641, 112
        %v4212 = vpop.permute.xlu0 %4211
        %4213 = vrot.lane.b32.xlu0 %v3630, 112
        %v4214 = vpop.permute.xlu0 %4213
        %4215 = vrot.lane.b32.xlu0 %v3634, 112
        %v4216 = vpop.permute.xlu0 %4215
        %4217 = vrot.lane.b32.xlu0 %v3638, 112
        %v4218 = vpop.permute.xlu0 %4217
        %4219 = vrot.lane.b32.xlu0 %v3642, 112
        %v4220 = vpop.permute.xlu0 %4219
        %v4221 = vsel %vm1711, %v4206, %v4214
        %v4222 = vsel %vm1711, %v4208, %v4216
        %v4223 = vsel %vm1711, %v4210, %v4218
        %v4224 = vsel %vm1711, %v4212, %v4220
        %v4225 = vsel %vm1711, %v4198, %v4206
        %v4226 = vsel %vm1711, %v4200, %v4208
        %v4227 = vsel %vm1711, %v4202, %v4210
        %v4228 = vsel %vm1711, %v4204, %v4212
        %v4229 = vsel %vm1711, %v4190, %v4198
        %v4230 = vsel %vm1711, %v4192, %v4200
        %v4231 = vsel %vm1711, %v4194, %v4202
        %v4232 = vsel %vm1711, %v4196, %v4204
        %v4233 = vsel %vm1711, %v4214, %v4190
        %v4234 = vsel %vm1711, %v4216, %v4192
        %v4235 = vsel %vm1711, %v4218, %v4194
        %v4236 = vsel %vm1711, %v4220, %v4196
        %v4237 = vld [vmem:[%s1728] ss:$8 sm:$0xf]
        %v4239 = vperm.slane %v4237, 0
        %v4240 = vperm.slane %v4237, 1
        %v4241 = vperm.slane %v4237, 2
        %v4242 = vperm.slane %v4237, 3
        %v4247 = vmul.f32 %v4229, %v4239
        %v4248 = vmul.f32 %v4225, %v4240
        %v4249 = vmul.f32 %v4221, %v4241
        %v4250 = vmul.f32 %v4233, %v4242
        %v4251 = vmul.f32 %v4230, %v4239
        %v4252 = vmul.f32 %v4226, %v4240
        %v4253 = vmul.f32 %v4222, %v4241
        %v4254 = vmul.f32 %v4234, %v4242
        %v4255 = vmul.f32 %v4231, %v4239
        %v4256 = vmul.f32 %v4227, %v4240
        %v4257 = vmul.f32 %v4223, %v4241
        %v4258 = vmul.f32 %v4235, %v4242
        %v4259 = vmul.f32 %v4232, %v4239
        %v4260 = vmul.f32 %v4228, %v4240
        %v4261 = vmul.f32 %v4224, %v4241
        %v4262 = vmul.f32 %v4236, %v4242
        %v4263 = vpack.c.bf16 %v4248, %v4247
        %v4264 = vpack.c.bf16 %v4250, %v4249
        %v4265 = vpack.c.bf16 %v4252, %v4251
        %v4266 = vpack.c.bf16 %v4254, %v4253
        %v4267 = vpack.c.bf16 %v4256, %v4255
        %v4268 = vpack.c.bf16 %v4258, %v4257
        %v4269 = vpack.c.bf16 %v4260, %v4259
        %v4270 = vpack.c.bf16 %v4262, %v4261
        %4271 = vst [vmem:[#allocation2 + $0x1c0] sm:$0xff] %v4263
        %4272 = vst [vmem:[#allocation2 + $0x1c8] sm:$0xff] %v4264
        %4273 = vst [vmem:[#allocation2 + $0x1d0] sm:$0xff] %v4265
        %4274 = vst [vmem:[#allocation2 + $0x1d8] sm:$0xff] %v4266
        %4275 = vst [vmem:[#allocation2 + $0x1e0] sm:$0xff] %v4267
        %4276 = vst [vmem:[#allocation2 + $0x1e8] sm:$0xff] %v4268
        %4277 = vst [vmem:[#allocation2 + $0x1f0] sm:$0xff] %v4269
        %4278 = vst [vmem:[#allocation2 + $0x1f8] sm:$0xff] %v4270
        %4279 = vrot.lane.b32.xlu0 %v3627, 111
        %v4280 = vpop.permute.xlu0 %4279
        %4281 = vrot.lane.b32.xlu0 %v3631, 111
        %v4282 = vpop.permute.xlu0 %4281
        %4283 = vrot.lane.b32.xlu0 %v3635, 111
        %v4284 = vpop.permute.xlu0 %4283
        %4285 = vrot.lane.b32.xlu0 %v3639, 111
        %v4286 = vpop.permute.xlu0 %4285
        %4287 = vrot.lane.b32.xlu0 %v3628, 111
        %v4288 = vpop.permute.xlu0 %4287
        %4289 = vrot.lane.b32.xlu0 %v3632, 111
        %v4290 = vpop.permute.xlu0 %4289
        %4291 = vrot.lane.b32.xlu0 %v3636, 111
        %v4292 = vpop.permute.xlu0 %4291
        %4293 = vrot.lane.b32.xlu0 %v3640, 111
        %v4294 = vpop.permute.xlu0 %4293
        %4295 = vrot.lane.b32.xlu0 %v3629, 111
        %v4296 = vpop.permute.xlu0 %4295
        %4297 = vrot.lane.b32.xlu0 %v3633, 111
        %v4298 = vpop.permute.xlu0 %4297
        %4299 = vrot.lane.b32.xlu0 %v3637, 111
        %v4300 = vpop.permute.xlu0 %4299
        %4301 = vrot.lane.b32.xlu0 %v3641, 111
        %v4302 = vpop.permute.xlu0 %4301
        %4303 = vrot.lane.b32.xlu0 %v3630, 111
        %v4304 = vpop.permute.xlu0 %4303
        %4305 = vrot.lane.b32.xlu0 %v3634, 111
        %v4306 = vpop.permute.xlu0 %4305
        %4307 = vrot.lane.b32.xlu0 %v3638, 111
        %v4308 = vpop.permute.xlu0 %4307
        %4309 = vrot.lane.b32.xlu0 %v3642, 111
        %v4310 = vpop.permute.xlu0 %4309
        %v4311 = vsel %vm1803, %v4296, %v4304
        %v4312 = vsel %vm1803, %v4298, %v4306
        %v4313 = vsel %vm1803, %v4300, %v4308
        %v4314 = vsel %vm1803, %v4302, %v4310
        %v4315 = vsel %vm1803, %v4288, %v4296
        %v4316 = vsel %vm1803, %v4290, %v4298
        %v4317 = vsel %vm1803, %v4292, %v4300
        %v4318 = vsel %vm1803, %v4294, %v4302
        %v4319 = vsel %vm1803, %v4280, %v4288
        %v4320 = vsel %vm1803, %v4282, %v4290
        %v4321 = vsel %vm1803, %v4284, %v4292
        %v4322 = vsel %vm1803, %v4286, %v4294
        %v4323 = vsel %vm1803, %v4304, %v4280
        %v4324 = vsel %vm1803, %v4306, %v4282
        %v4325 = vsel %vm1803, %v4308, %v4284
        %v4326 = vsel %vm1803, %v4310, %v4286
        %v4327 = vld [vmem:[%s1820] ss:$8 sm:$0xf]
        %v4329 = vperm.slane %v4327, 0
        %v4330 = vperm.slane %v4327, 1
        %v4331 = vperm.slane %v4327, 2
        %v4332 = vperm.slane %v4327, 3
        %v4337 = vmul.f32 %v4319, %v4329
        %v4338 = vmul.f32 %v4315, %v4330
        %v4339 = vmul.f32 %v4311, %v4331
        %v4340 = vmul.f32 %v4323, %v4332
        %v4341 = vmul.f32 %v4320, %v4329
        %v4342 = vmul.f32 %v4316, %v4330
        %v4343 = vmul.f32 %v4312, %v4331
        %v4344 = vmul.f32 %v4324, %v4332
        %v4345 = vmul.f32 %v4321, %v4329
        %v4346 = vmul.f32 %v4317, %v4330
        %v4347 = vmul.f32 %v4313, %v4331
        %v4348 = vmul.f32 %v4325, %v4332
        %v4349 = vmul.f32 %v4322, %v4329
        %v4350 = vmul.f32 %v4318, %v4330
        %v4351 = vmul.f32 %v4314, %v4331
        %v4352 = vmul.f32 %v4326, %v4332
        %v4353 = vpack.c.bf16 %v4338, %v4337
        %v4354 = vpack.c.bf16 %v4340, %v4339
        %v4355 = vpack.c.bf16 %v4342, %v4341
        %v4356 = vpack.c.bf16 %v4344, %v4343
        %v4357 = vpack.c.bf16 %v4346, %v4345
        %v4358 = vpack.c.bf16 %v4348, %v4347
        %v4359 = vpack.c.bf16 %v4350, %v4349
        %v4360 = vpack.c.bf16 %v4352, %v4351
        %4361 = vst [vmem:[#allocation2 + $0x200] sm:$0xff] %v4353
        %4362 = vst [vmem:[#allocation2 + $0x208] sm:$0xff] %v4354
        %4363 = vst [vmem:[#allocation2 + $0x210] sm:$0xff] %v4355
        %4364 = vst [vmem:[#allocation2 + $0x218] sm:$0xff] %v4356
        %4365 = vst [vmem:[#allocation2 + $0x220] sm:$0xff] %v4357
        %4366 = vst [vmem:[#allocation2 + $0x228] sm:$0xff] %v4358
        %4367 = vst [vmem:[#allocation2 + $0x230] sm:$0xff] %v4359
        %4368 = vst [vmem:[#allocation2 + $0x238] sm:$0xff] %v4360
        %v4369 = vld [vmem:[#allocation8] sm:$0xff]
        %v4370 = vld [vmem:[#allocation8 + $0x8] sm:$0xf]
        %v4371 = vld [vmem:[#allocation8 + $0xc] sm:$0xff]
        %v4372 = vld [vmem:[#allocation8 + $0x14] sm:$0xf]
        %v4373 = vld [vmem:[#allocation8 + $0x18] sm:$0xff]
        %v4374 = vld [vmem:[#allocation8 + $0x20] sm:$0xf]
        %v4375 = vld [vmem:[#allocation8 + $0x24] sm:$0xff]
        %v4376 = vld [vmem:[#allocation8 + $0x2c] sm:$0xf]
        %v4377 = vld [vmem:[#allocation2] sm:$0xff]
        %v4378 = vld [vmem:[#allocation2 + $0x8] sm:$0xff]
        %v4379 = vld [vmem:[#allocation2 + $0x10] sm:$0xff]
        %v4380 = vld [vmem:[#allocation2 + $0x18] sm:$0xff]
        %v4381 = vld [vmem:[#allocation2 + $0x20] sm:$0xff]
        %v4382 = vld [vmem:[#allocation2 + $0x28] sm:$0xff]
        %v4383 = vld [vmem:[#allocation2 + $0x30] sm:$0xff]
        %v4384 = vld [vmem:[#allocation2 + $0x38] sm:$0xff]
        %v4385 = vld [vmem:[#allocation2 + $0x40] sm:$0xff]
        %v4386 = vld [vmem:[#allocation2 + $0x48] sm:$0xff]
        %v4387 = vld [vmem:[#allocation2 + $0x50] sm:$0xff]
        %v4388 = vld [vmem:[#allocation2 + $0x58] sm:$0xff]
        %v4389 = vld [vmem:[#allocation2 + $0x60] sm:$0xff]
        %v4390 = vld [vmem:[#allocation2 + $0x68] sm:$0xff]
        %v4391 = vld [vmem:[#allocation2 + $0x70] sm:$0xff]
        %v4392 = vld [vmem:[#allocation2 + $0x78] sm:$0xff]
        %v4393 = vld [vmem:[#allocation2 + $0x80] sm:$0xff]
        %v4394 = vld [vmem:[#allocation2 + $0x88] sm:$0xff]
        %v4395 = vld [vmem:[#allocation2 + $0x90] sm:$0xff]
        %v4396 = vld [vmem:[#allocation2 + $0x98] sm:$0xff]
        %v4397 = vld [vmem:[#allocation2 + $0xa0] sm:$0xff]
        %v4398 = vld [vmem:[#allocation2 + $0xa8] sm:$0xff]
        %v4399 = vld [vmem:[#allocation2 + $0xb0] sm:$0xff]
        %v4400 = vld [vmem:[#allocation2 + $0xb8] sm:$0xff]
        %v4401 = vld [vmem:[#allocation2 + $0xc0] sm:$0xff]
        %v4402 = vld [vmem:[#allocation2 + $0xc8] sm:$0xff]
        %v4403 = vld [vmem:[#allocation2 + $0xd0] sm:$0xff]
        %v4404 = vld [vmem:[#allocation2 + $0xd8] sm:$0xff]
        %v4405 = vld [vmem:[#allocation2 + $0xe0] sm:$0xff]
        %v4406 = vld [vmem:[#allocation2 + $0xe8] sm:$0xff]
        %v4407 = vld [vmem:[#allocation2 + $0xf0] sm:$0xff]
        %v4408 = vld [vmem:[#allocation2 + $0xf8] sm:$0xff]
        %v4409 = vld [vmem:[#allocation2 + $0x100] sm:$0xff]
        %v4410 = vld [vmem:[#allocation2 + $0x108] sm:$0xff]
        %v4411 = vld [vmem:[#allocation2 + $0x110] sm:$0xff]
        %v4412 = vld [vmem:[#allocation2 + $0x118] sm:$0xff]
        %v4413 = vld [vmem:[#allocation2 + $0x120] sm:$0xff]
        %v4414 = vld [vmem:[#allocation2 + $0x128] sm:$0xff]
        %v4415 = vld [vmem:[#allocation2 + $0x130] sm:$0xff]
        %v4416 = vld [vmem:[#allocation2 + $0x138] sm:$0xff]
        %v4417 = vld [vmem:[#allocation2 + $0x140] sm:$0xff]
        %v4418 = vld [vmem:[#allocation2 + $0x148] sm:$0xff]
        %v4419 = vld [vmem:[#allocation2 + $0x150] sm:$0xff]
        %v4420 = vld [vmem:[#allocation2 + $0x158] sm:$0xff]
        %v4421 = vld [vmem:[#allocation2 + $0x160] sm:$0xff]
        %v4422 = vld [vmem:[#allocation2 + $0x168] sm:$0xff]
        %v4423 = vld [vmem:[#allocation2 + $0x170] sm:$0xff]
        %v4424 = vld [vmem:[#allocation2 + $0x178] sm:$0xff]
        %v4425 = vld [vmem:[#allocation2 + $0x180] sm:$0xff]
        %v4426 = vld [vmem:[#allocation2 + $0x188] sm:$0xff]
        %v4427 = vld [vmem:[#allocation2 + $0x190] sm:$0xff]
        %v4428 = vld [vmem:[#allocation2 + $0x198] sm:$0xff]
        %v4429 = vld [vmem:[#allocation2 + $0x1a0] sm:$0xff]
        %v4430 = vld [vmem:[#allocation2 + $0x1a8] sm:$0xff]
        %v4431 = vld [vmem:[#allocation2 + $0x1b0] sm:$0xff]
        %v4432 = vld [vmem:[#allocation2 + $0x1b8] sm:$0xff]
        %v4433 = vld [vmem:[#allocation2 + $0x1c0] sm:$0xff]
        %v4434 = vld [vmem:[#allocation2 + $0x1c8] sm:$0xff]
        %v4435 = vld [vmem:[#allocation2 + $0x1d0] sm:$0xff]
        %v4436 = vld [vmem:[#allocation2 + $0x1d8] sm:$0xff]
        %v4437 = vld [vmem:[#allocation2 + $0x1e0] sm:$0xff]
        %v4438 = vld [vmem:[#allocation2 + $0x1e8] sm:$0xff]
        %v4439 = vld [vmem:[#allocation2 + $0x1f0] sm:$0xff]
        %v4440 = vld [vmem:[#allocation2 + $0x1f8] sm:$0xff]
        %v4441 = vld [vmem:[#allocation2 + $0x200] sm:$0xff]
        %v4442 = vld [vmem:[#allocation2 + $0x208] sm:$0xff]
        %v4443 = vld [vmem:[#allocation2 + $0x210] sm:$0xff]
        %v4444 = vld [vmem:[#allocation2 + $0x218] sm:$0xff]
        %v4445 = vld [vmem:[#allocation2 + $0x220] sm:$0xff]
        %v4446 = vld [vmem:[#allocation2 + $0x228] sm:$0xff]
        %v4447 = vld [vmem:[#allocation2 + $0x230] sm:$0xff]
        %v4448 = vld [vmem:[#allocation2 + $0x238] sm:$0xff]
        %4449 = vset.pattern.permute.xlu0 11
        %4450 = vperm.xlu0 %4449, %v431
        %v4451 = vpop.permute.xlu0 %4450
        %4453 = vset.pattern.permute.xlu0 11
        %4454 = vperm.xlu0 %4453, %v432
        %v4455 = vpop.permute.xlu0 %4454
        %4457 = vset.pattern.permute.xlu0 11
        %4458 = vperm.xlu0 %4457, %v433
        %v4459 = vpop.permute.xlu0 %4458
        %4461 = vset.pattern.permute.xlu0 11
        %4462 = vperm.xlu0 %4461, %v434
        %v4463 = vpop.permute.xlu0 %4462
        %v4473 = vunpack.c.l.b16 %v4369
        %v4474 = vunpack.c.h.b16 %v4369
        %v4475 = vunpack.c.l.b16 %v4370
        %v4476 = vunpack.c.l.b16 %v4371
        %v4477 = vunpack.c.h.b16 %v4371
        %v4478 = vunpack.c.l.b16 %v4372
        %v4479 = vunpack.c.l.b16 %v4373
        %v4480 = vunpack.c.h.b16 %v4373
        %v4481 = vunpack.c.l.b16 %v4374
        %v4482 = vunpack.c.l.b16 %v4375
        %v4483 = vunpack.c.h.b16 %v4375
        %v4484 = vunpack.c.l.b16 %v4376
        %v4485 = vpack.c.b16 %v4476, %v4473
        %v4486 = vpack.c.b16 %v4477, %v4474
        %v4487 = vpack.c.b16 %v4478, %v4475
        %v4488 = vpack.c.b16 %v4482, %v4479
        %v4489 = vpack.c.b16 %v4483, %v4480
        %v4490 = vpack.c.b16 %v4484, %v4481
        %v4567 = vunpack.c.l.b16 %v4377
        %v4568 = vunpack.c.h.b16 %v4377
        %v4569 = vunpack.c.l.b16 %v4378
        %v4570 = vunpack.c.h.b16 %v4378
        %v4571 = vunpack.c.l.b16 %v4379
        %v4572 = vunpack.c.h.b16 %v4379
        %v4573 = vunpack.c.l.b16 %v4380
        %v4574 = vunpack.c.h.b16 %v4380
        %v4575 = vunpack.c.l.b16 %v4381
        %v4576 = vunpack.c.h.b16 %v4381
        %v4577 = vunpack.c.l.b16 %v4382
        %v4578 = vunpack.c.h.b16 %v4382
        %v4579 = vunpack.c.l.b16 %v4383
        %v4580 = vunpack.c.h.b16 %v4383
        %v4581 = vunpack.c.l.b16 %v4384
        %v4582 = vunpack.c.h.b16 %v4384
        %v4583 = vunpack.c.l.b16 %v4385
        %v4584 = vunpack.c.h.b16 %v4385
        %v4585 = vunpack.c.l.b16 %v4386
        %v4586 = vunpack.c.h.b16 %v4386
        %v4587 = vunpack.c.l.b16 %v4387
        %v4588 = vunpack.c.h.b16 %v4387
        %v4589 = vunpack.c.l.b16 %v4388
        %v4590 = vunpack.c.h.b16 %v4388
        %v4591 = vunpack.c.l.b16 %v4389
        %v4592 = vunpack.c.h.b16 %v4389
        %v4593 = vunpack.c.l.b16 %v4390
        %v4594 = vunpack.c.h.b16 %v4390
        %v4595 = vunpack.c.l.b16 %v4391
        %v4596 = vunpack.c.h.b16 %v4391
        %v4597 = vunpack.c.l.b16 %v4392
        %v4598 = vunpack.c.h.b16 %v4392
        %v4599 = vunpack.c.l.b16 %v4393
        %v4600 = vunpack.c.h.b16 %v4393
        %v4601 = vunpack.c.l.b16 %v4394
        %v4602 = vunpack.c.h.b16 %v4394
        %v4603 = vunpack.c.l.b16 %v4395
        %v4604 = vunpack.c.h.b16 %v4395
        %v4605 = vunpack.c.l.b16 %v4396
        %v4606 = vunpack.c.h.b16 %v4396
        %v4607 = vunpack.c.l.b16 %v4397
        %v4608 = vunpack.c.h.b16 %v4397
        %v4609 = vunpack.c.l.b16 %v4398
        %v4610 = vunpack.c.h.b16 %v4398
        %v4611 = vunpack.c.l.b16 %v4399
        %v4612 = vunpack.c.h.b16 %v4399
        %v4613 = vunpack.c.l.b16 %v4400
        %v4614 = vunpack.c.h.b16 %v4400
        %v4615 = vunpack.c.l.b16 %v4401
        %v4616 = vunpack.c.h.b16 %v4401
        %v4617 = vunpack.c.l.b16 %v4402
        %v4618 = vunpack.c.h.b16 %v4402
        %v4619 = vunpack.c.l.b16 %v4403
        %v4620 = vunpack.c.h.b16 %v4403
        %v4621 = vunpack.c.l.b16 %v4404
        %v4622 = vunpack.c.h.b16 %v4404
        %v4623 = vunpack.c.l.b16 %v4405
        %v4624 = vunpack.c.h.b16 %v4405
        %v4625 = vunpack.c.l.b16 %v4406
        %v4626 = vunpack.c.h.b16 %v4406
        %v4627 = vunpack.c.l.b16 %v4407
        %v4628 = vunpack.c.h.b16 %v4407
        %v4629 = vunpack.c.l.b16 %v4408
        %v4630 = vunpack.c.h.b16 %v4408
        %v4631 = vunpack.c.l.b16 %v4409
        %v4632 = vunpack.c.h.b16 %v4409
        %v4633 = vunpack.c.l.b16 %v4410
        %v4634 = vunpack.c.h.b16 %v4410
        %v4635 = vunpack.c.l.b16 %v4411
        %v4636 = vunpack.c.h.b16 %v4411
        %v4637 = vunpack.c.l.b16 %v4412
        %v4638 = vunpack.c.h.b16 %v4412
        %v4639 = vunpack.c.l.b16 %v4413
        %v4640 = vunpack.c.h.b16 %v4413
        %v4641 = vunpack.c.l.b16 %v4414
        %v4642 = vunpack.c.h.b16 %v4414
        %v4643 = vunpack.c.l.b16 %v4415
        %v4644 = vunpack.c.h.b16 %v4415
        %v4645 = vunpack.c.l.b16 %v4416
        %v4646 = vunpack.c.h.b16 %v4416
        %v4647 = vunpack.c.l.b16 %v4417
        %v4648 = vunpack.c.h.b16 %v4417
        %v4649 = vunpack.c.l.b16 %v4418
        %v4650 = vunpack.c.h.b16 %v4418
        %v4651 = vunpack.c.l.b16 %v4419
        %v4652 = vunpack.c.h.b16 %v4419
        %v4653 = vunpack.c.l.b16 %v4420
        %v4654 = vunpack.c.h.b16 %v4420
        %v4655 = vunpack.c.l.b16 %v4421
        %v4656 = vunpack.c.h.b16 %v4421
        %v4657 = vunpack.c.l.b16 %v4422
        %v4658 = vunpack.c.h.b16 %v4422
        %v4659 = vunpack.c.l.b16 %v4423
        %v4660 = vunpack.c.h.b16 %v4423
        %v4661 = vunpack.c.l.b16 %v4424
        %v4662 = vunpack.c.h.b16 %v4424
        %v4663 = vunpack.c.l.b16 %v4425
        %v4664 = vunpack.c.h.b16 %v4425
        %v4665 = vunpack.c.l.b16 %v4426
        %v4666 = vunpack.c.h.b16 %v4426
        %v4667 = vunpack.c.l.b16 %v4427
        %v4668 = vunpack.c.h.b16 %v4427
        %v4669 = vunpack.c.l.b16 %v4428
        %v4670 = vunpack.c.h.b16 %v4428
        %v4671 = vunpack.c.l.b16 %v4429
        %v4672 = vunpack.c.h.b16 %v4429
        %v4673 = vunpack.c.l.b16 %v4430
        %v4674 = vunpack.c.h.b16 %v4430
        %v4675 = vunpack.c.l.b16 %v4431
        %v4676 = vunpack.c.h.b16 %v4431
        %v4677 = vunpack.c.l.b16 %v4432
        %v4678 = vunpack.c.h.b16 %v4432
        %v4679 = vunpack.c.l.b16 %v4433
        %v4680 = vunpack.c.h.b16 %v4433
        %v4681 = vunpack.c.l.b16 %v4434
        %v4682 = vunpack.c.h.b16 %v4434
        %v4683 = vunpack.c.l.b16 %v4435
        %v4684 = vunpack.c.h.b16 %v4435
        %v4685 = vunpack.c.l.b16 %v4436
        %v4686 = vunpack.c.h.b16 %v4436
        %v4687 = vunpack.c.l.b16 %v4437
        %v4688 = vunpack.c.h.b16 %v4437
        %v4689 = vunpack.c.l.b16 %v4438
        %v4690 = vunpack.c.h.b16 %v4438
        %v4691 = vunpack.c.l.b16 %v4439
        %v4692 = vunpack.c.h.b16 %v4439
        %v4693 = vunpack.c.l.b16 %v4440
        %v4694 = vunpack.c.h.b16 %v4440
        %v4695 = vunpack.c.l.b16 %v4441
        %v4696 = vunpack.c.h.b16 %v4441
        %v4697 = vunpack.c.l.b16 %v4442
        %v4698 = vunpack.c.h.b16 %v4442
        %v4699 = vunpack.c.l.b16 %v4443
        %v4700 = vunpack.c.h.b16 %v4443
        %v4701 = vunpack.c.l.b16 %v4444
        %v4702 = vunpack.c.h.b16 %v4444
        %v4703 = vunpack.c.l.b16 %v4445
        %v4704 = vunpack.c.h.b16 %v4445
        %v4705 = vunpack.c.l.b16 %v4446
        %v4706 = vunpack.c.h.b16 %v4446
        %v4707 = vunpack.c.l.b16 %v4447
        %v4708 = vunpack.c.h.b16 %v4447
        %v4709 = vunpack.c.l.b16 %v4448
        %v4710 = vunpack.c.h.b16 %v4448
        %v4711 = vpack.c.b16 %v4571, %v4567
        %v4712 = vpack.c.b16 %v4572, %v4568
        %v4713 = vpack.c.b16 %v4573, %v4569
        %v4714 = vpack.c.b16 %v4574, %v4570
        %v4715 = vpack.c.b16 %v4579, %v4575
        %v4716 = vpack.c.b16 %v4580, %v4576
        %v4717 = vpack.c.b16 %v4581, %v4577
        %v4718 = vpack.c.b16 %v4582, %v4578
        %v4719 = vpack.c.b16 %v4587, %v4583
        %v4720 = vpack.c.b16 %v4588, %v4584
        %v4721 = vpack.c.b16 %v4589, %v4585
        %v4722 = vpack.c.b16 %v4590, %v4586
        %v4723 = vpack.c.b16 %v4595, %v4591
        %v4724 = vpack.c.b16 %v4596, %v4592
        %v4725 = vpack.c.b16 %v4597, %v4593
        %v4726 = vpack.c.b16 %v4598, %v4594
        %v4727 = vpack.c.b16 %v4603, %v4599
        %v4728 = vpack.c.b16 %v4604, %v4600
        %v4729 = vpack.c.b16 %v4605, %v4601
        %v4730 = vpack.c.b16 %v4606, %v4602
        %v4731 = vpack.c.b16 %v4611, %v4607
        %v4732 = vpack.c.b16 %v4612, %v4608
        %v4733 = vpack.c.b16 %v4613, %v4609
        %v4734 = vpack.c.b16 %v4614, %v4610
        %v4735 = vpack.c.b16 %v4619, %v4615
        %v4736 = vpack.c.b16 %v4620, %v4616
        %v4737 = vpack.c.b16 %v4621, %v4617
        %v4738 = vpack.c.b16 %v4622, %v4618
        %v4739 = vpack.c.b16 %v4627, %v4623
        %v4740 = vpack.c.b16 %v4628, %v4624
        %v4741 = vpack.c.b16 %v4629, %v4625
        %v4742 = vpack.c.b16 %v4630, %v4626
        %v4743 = vpack.c.b16 %v4635, %v4631
        %v4744 = vpack.c.b16 %v4636, %v4632
        %v4745 = vpack.c.b16 %v4637, %v4633
        %v4746 = vpack.c.b16 %v4638, %v4634
        %v4747 = vpack.c.b16 %v4643, %v4639
        %v4748 = vpack.c.b16 %v4644, %v4640
        %v4749 = vpack.c.b16 %v4645, %v4641
        %v4750 = vpack.c.b16 %v4646, %v4642
        %v4751 = vpack.c.b16 %v4651, %v4647
        %v4752 = vpack.c.b16 %v4652, %v4648
        %v4753 = vpack.c.b16 %v4653, %v4649
        %v4754 = vpack.c.b16 %v4654, %v4650
        %v4755 = vpack.c.b16 %v4659, %v4655
        %v4756 = vpack.c.b16 %v4660, %v4656
        %v4757 = vpack.c.b16 %v4661, %v4657
        %v4758 = vpack.c.b16 %v4662, %v4658
        %v4759 = vpack.c.b16 %v4667, %v4663
        %v4760 = vpack.c.b16 %v4668, %v4664
        %v4761 = vpack.c.b16 %v4669, %v4665
        %v4762 = vpack.c.b16 %v4670, %v4666
        %v4763 = vpack.c.b16 %v4675, %v4671
        %v4764 = vpack.c.b16 %v4676, %v4672
        %v4765 = vpack.c.b16 %v4677, %v4673
        %v4766 = vpack.c.b16 %v4678, %v4674
        %v4767 = vpack.c.b16 %v4683, %v4679
        %v4768 = vpack.c.b16 %v4684, %v4680
        %v4769 = vpack.c.b16 %v4685, %v4681
        %v4770 = vpack.c.b16 %v4686, %v4682
        %v4771 = vpack.c.b16 %v4691, %v4687
        %v4772 = vpack.c.b16 %v4692, %v4688
        %v4773 = vpack.c.b16 %v4693, %v4689
        %v4774 = vpack.c.b16 %v4694, %v4690
        %v4775 = vpack.c.b16 %v4699, %v4695
        %v4776 = vpack.c.b16 %v4700, %v4696
        %v4777 = vpack.c.b16 %v4701, %v4697
        %v4778 = vpack.c.b16 %v4702, %v4698
        %v4779 = vpack.c.b16 %v4707, %v4703
        %v4780 = vpack.c.b16 %v4708, %v4704
        %v4781 = vpack.c.b16 %v4709, %v4705
        %v4782 = vpack.c.b16 %v4710, %v4706
        %v4856 = vsel %vm449, %v4487, 0
        %v4859 = vsel %vm449, %v4490, 0
        %4861 = vmatpush.bf16.msra.mxu0 %v4739
        %4862 = vmatpush.bf16.msra.mxu0 %v4735
        %4863 = vmatpush.bf16.msra.mxu0 %v4731
        %4864 = vmatpush.bf16.msra.mxu0 %v4727
        %4865 = vmatpush.bf16.msra.mxu0 %v4723
        %4866 = vmatpush.bf16.msra.mxu0 %v4719
        %4867 = vmatpush.bf16.msra.mxu0 %v4715
        %4868 = vmatpush.bf16.msra.mxu0 %v4711
        %4869 = vmatmul.bf16.gmra.mxu0 %v4485
        %v4870 = vpop.f32.mrf.mxu0
        %v4871 = vadd.f32 %v4451, %v4870
        %v4872 = vpop.f32.mrf.mxu0
        %v4873 = vadd.f32 %v4455, %v4872
        %4874 = vmatmul.bf16.gmra.mxu0 %v4488
        %v4875 = vpop.f32.mrf.mxu0
        %v4876 = vadd.f32 %v4459, %v4875
        %v4877 = vpop.f32.mrf.mxu0
        %v4878 = vadd.f32 %v4463, %v4877
        %4879 = vdwg.mxu0
        %4880 = vmatpush.bf16.msra.mxu0 %v4771
        %4881 = vmatpush.bf16.msra.mxu0 %v4767
        %4882 = vmatpush.bf16.msra.mxu0 %v4763
        %4883 = vmatpush.bf16.msra.mxu0 %v4759
        %4884 = vmatpush.bf16.msra.mxu0 %v4755
        %4885 = vmatpush.bf16.msra.mxu0 %v4751
        %4886 = vmatpush.bf16.msra.mxu0 %v4747
        %4887 = vmatpush.bf16.msra.mxu0 %v4743
        %4888 = vmatmul.bf16.gmra.mxu0 %v4486
        %v4889 = vpop.f32.mrf.mxu0
        %v4890 = vadd.f32 %v4871, %v4889
        %v4891 = vpop.f32.mrf.mxu0
        %v4892 = vadd.f32 %v4873, %v4891
        %4893 = vmatmul.bf16.gmra.mxu0 %v4489
        %v4894 = vpop.f32.mrf.mxu0
        %v4895 = vadd.f32 %v4876, %v4894
        %v4896 = vpop.f32.mrf.mxu0
        %v4897 = vadd.f32 %v4878, %v4896
        %4898 = vdwg.mxu0
        %4899 = vmatpush.bf16.msra.mxu0 0
        %4900 = vmatpush.bf16.msra.mxu0 0
        %4901 = vmatpush.bf16.msra.mxu0 0
        %4902 = vmatpush.bf16.msra.mxu0 0
        %4903 = vmatpush.bf16.msra.mxu0 0
        %4904 = vmatpush.bf16.msra.mxu0 0
        %4905 = vmatpush.bf16.msra.mxu0 %v4779
        %4906 = vmatpush.bf16.msra.mxu0 %v4775
        %4907 = vmatmul.bf16.gmra.mxu0 %v4856
        %v4908 = vpop.f32.mrf.mxu0
        %v4909 = vadd.f32 %v4890, %v4908
        %v4910 = vpop.f32.mrf.mxu0
        %v4911 = vadd.f32 %v4892, %v4910
        %4912 = vmatmul.bf16.gmra.mxu0 %v4859
        %v4913 = vpop.f32.mrf.mxu0
        %v4914 = vadd.f32 %v4895, %v4913
        %v4915 = vpop.f32.mrf.mxu0
        %v4916 = vadd.f32 %v4897, %v4915
        %4917 = vdwg.mxu0
        %4918 = vmatpush.bf16.msra.mxu0 %v4740
        %4919 = vmatpush.bf16.msra.mxu0 %v4736
        %4920 = vmatpush.bf16.msra.mxu0 %v4732
        %4921 = vmatpush.bf16.msra.mxu0 %v4728
        %4922 = vmatpush.bf16.msra.mxu0 %v4724
        %4923 = vmatpush.bf16.msra.mxu0 %v4720
        %4924 = vmatpush.bf16.msra.mxu0 %v4716
        %4925 = vmatpush.bf16.msra.mxu0 %v4712
        %4926 = vmatmul.bf16.gmra.mxu0 %v4485
        %v4927 = vpop.f32.mrf.mxu0
        %v4928 = vadd.f32 %v4451, %v4927
        %v4929 = vpop.f32.mrf.mxu0
        %v4930 = vadd.f32 %v4455, %v4929
        %4931 = vmatmul.bf16.gmra.mxu0 %v4488
        %v4932 = vpop.f32.mrf.mxu0
        %v4933 = vadd.f32 %v4459, %v4932
        %v4934 = vpop.f32.mrf.mxu0
        %v4935 = vadd.f32 %v4463, %v4934
        %4936 = vdwg.mxu0
        %4937 = vmatpush.bf16.msra.mxu0 %v4772
        %4938 = vmatpush.bf16.msra.mxu0 %v4768
        %4939 = vmatpush.bf16.msra.mxu0 %v4764
        %4940 = vmatpush.bf16.msra.mxu0 %v4760
        %4941 = vmatpush.bf16.msra.mxu0 %v4756
        %4942 = vmatpush.bf16.msra.mxu0 %v4752
        %4943 = vmatpush.bf16.msra.mxu0 %v4748
        %4944 = vmatpush.bf16.msra.mxu0 %v4744
        %4945 = vmatmul.bf16.gmra.mxu0 %v4486
        %v4946 = vpop.f32.mrf.mxu0
        %v4947 = vadd.f32 %v4928, %v4946
        %v4948 = vpop.f32.mrf.mxu0
        %v4949 = vadd.f32 %v4930, %v4948
        %4950 = vmatmul.bf16.gmra.mxu0 %v4489
        %v4951 = vpop.f32.mrf.mxu0
        %v4952 = vadd.f32 %v4933, %v4951
        %v4953 = vpop.f32.mrf.mxu0
        %v4954 = vadd.f32 %v4935, %v4953
        %4955 = vdwg.mxu0
        %4956 = vmatpush.bf16.msra.mxu0 0
        %4957 = vmatpush.bf16.msra.mxu0 0
        %4958 = vmatpush.bf16.msra.mxu0 0
        %4959 = vmatpush.bf16.msra.mxu0 0
        %4960 = vmatpush.bf16.msra.mxu0 0
        %4961 = vmatpush.bf16.msra.mxu0 0
        %4962 = vmatpush.bf16.msra.mxu0 %v4780
        %4963 = vmatpush.bf16.msra.mxu0 %v4776
        %4964 = vmatmul.bf16.gmra.mxu0 %v4856
        %v4965 = vpop.f32.mrf.mxu0
        %v4966 = vadd.f32 %v4947, %v4965
        %v4967 = vpop.f32.mrf.mxu0
        %v4968 = vadd.f32 %v4949, %v4967
        %4969 = vmatmul.bf16.gmra.mxu0 %v4859
        %v4970 = vpop.f32.mrf.mxu0
        %v4971 = vadd.f32 %v4952, %v4970
        %v4972 = vpop.f32.mrf.mxu0
        %v4973 = vadd.f32 %v4954, %v4972
        %4974 = vdwg.mxu0
        %4975 = vmatpush.bf16.msra.mxu0 %v4741
        %4976 = vmatpush.bf16.msra.mxu0 %v4737
        %4977 = vmatpush.bf16.msra.mxu0 %v4733
        %4978 = vmatpush.bf16.msra.mxu0 %v4729
        %4979 = vmatpush.bf16.msra.mxu0 %v4725
        %4980 = vmatpush.bf16.msra.mxu0 %v4721
        %4981 = vmatpush.bf16.msra.mxu0 %v4717
        %4982 = vmatpush.bf16.msra.mxu0 %v4713
        %4983 = vmatmul.bf16.gmra.mxu0 %v4485
        %v4984 = vpop.f32.mrf.mxu0
        %v4985 = vadd.f32 %v4451, %v4984
        %v4986 = vpop.f32.mrf.mxu0
        %v4987 = vadd.f32 %v4455, %v4986
        %4988 = vmatmul.bf16.gmra.mxu0 %v4488
        %v4989 = vpop.f32.mrf.mxu0
        %v4990 = vadd.f32 %v4459, %v4989
        %v4991 = vpop.f32.mrf.mxu0
        %v4992 = vadd.f32 %v4463, %v4991
        %4993 = vdwg.mxu0
        %4994 = vmatpush.bf16.msra.mxu0 %v4773
        %4995 = vmatpush.bf16.msra.mxu0 %v4769
        %4996 = vmatpush.bf16.msra.mxu0 %v4765
        %4997 = vmatpush.bf16.msra.mxu0 %v4761
        %4998 = vmatpush.bf16.msra.mxu0 %v4757
        %4999 = vmatpush.bf16.msra.mxu0 %v4753
        %5000 = vmatpush.bf16.msra.mxu0 %v4749
        %5001 = vmatpush.bf16.msra.mxu0 %v4745
        %5002 = vmatmul.bf16.gmra.mxu0 %v4486
        %v5003 = vpop.f32.mrf.mxu0
        %v5004 = vadd.f32 %v4985, %v5003
        %v5005 = vpop.f32.mrf.mxu0
        %v5006 = vadd.f32 %v4987, %v5005
        %5007 = vmatmul.bf16.gmra.mxu0 %v4489
        %v5008 = vpop.f32.mrf.mxu0
        %v5009 = vadd.f32 %v4990, %v5008
        %v5010 = vpop.f32.mrf.mxu0
        %v5011 = vadd.f32 %v4992, %v5010
        %5012 = vdwg.mxu0
        %5013 = vmatpush.bf16.msra.mxu0 0
        %5014 = vmatpush.bf16.msra.mxu0 0
        %5015 = vmatpush.bf16.msra.mxu0 0
        %5016 = vmatpush.bf16.msra.mxu0 0
        %5017 = vmatpush.bf16.msra.mxu0 0
        %5018 = vmatpush.bf16.msra.mxu0 0
        %5019 = vmatpush.bf16.msra.mxu0 %v4781
        %5020 = vmatpush.bf16.msra.mxu0 %v4777
        %5021 = vmatmul.bf16.gmra.mxu0 %v4856
        %v5022 = vpop.f32.mrf.mxu0
        %v5023 = vadd.f32 %v5004, %v5022
        %v5024 = vpop.f32.mrf.mxu0
        %v5025 = vadd.f32 %v5006, %v5024
        %5026 = vmatmul.bf16.gmra.mxu0 %v4859
        %v5027 = vpop.f32.mrf.mxu0
        %v5028 = vadd.f32 %v5009, %v5027
        %v5029 = vpop.f32.mrf.mxu0
        %v5030 = vadd.f32 %v5011, %v5029
        %5031 = vdwg.mxu0
        %5032 = vmatpush.bf16.msra.mxu0 %v4742
        %5033 = vmatpush.bf16.msra.mxu0 %v4738
        %5034 = vmatpush.bf16.msra.mxu0 %v4734
        %5035 = vmatpush.bf16.msra.mxu0 %v4730
        %5036 = vmatpush.bf16.msra.mxu0 %v4726
        %5037 = vmatpush.bf16.msra.mxu0 %v4722
        %5038 = vmatpush.bf16.msra.mxu0 %v4718
        %5039 = vmatpush.bf16.msra.mxu0 %v4714
        %5040 = vmatmul.bf16.gmra.mxu0 %v4485
        %v5041 = vpop.f32.mrf.mxu0
        %v5042 = vadd.f32 %v4451, %v5041
        %v5043 = vpop.f32.mrf.mxu0
        %v5044 = vadd.f32 %v4455, %v5043
        %5045 = vmatmul.bf16.gmra.mxu0 %v4488
        %v5046 = vpop.f32.mrf.mxu0
        %v5047 = vadd.f32 %v4459, %v5046
        %v5048 = vpop.f32.mrf.mxu0
        %v5049 = vadd.f32 %v4463, %v5048
        %5050 = vdwg.mxu0
        %5051 = vmatpush.bf16.msra.mxu0 %v4774
        %5052 = vmatpush.bf16.msra.mxu0 %v4770
        %5053 = vmatpush.bf16.msra.mxu0 %v4766
        %5054 = vmatpush.bf16.msra.mxu0 %v4762
        %5055 = vmatpush.bf16.msra.mxu0 %v4758
        %5056 = vmatpush.bf16.msra.mxu0 %v4754
        %5057 = vmatpush.bf16.msra.mxu0 %v4750
        %5058 = vmatpush.bf16.msra.mxu0 %v4746
        %5059 = vmatmul.bf16.gmra.mxu0 %v4486
        %v5060 = vpop.f32.mrf.mxu0
        %v5061 = vadd.f32 %v5042, %v5060
        %v5062 = vpop.f32.mrf.mxu0
        %v5063 = vadd.f32 %v5044, %v5062
        %5064 = vmatmul.bf16.gmra.mxu0 %v4489
        %v5065 = vpop.f32.mrf.mxu0
        %v5066 = vadd.f32 %v5047, %v5065
        %v5067 = vpop.f32.mrf.mxu0
        %v5068 = vadd.f32 %v5049, %v5067
        %5069 = vdwg.mxu0
        %5070 = vmatpush.bf16.msra.mxu0 0
        %5071 = vmatpush.bf16.msra.mxu0 0
        %5072 = vmatpush.bf16.msra.mxu0 0
        %5073 = vmatpush.bf16.msra.mxu0 0
        %5074 = vmatpush.bf16.msra.mxu0 0
        %5075 = vmatpush.bf16.msra.mxu0 0
        %5076 = vmatpush.bf16.msra.mxu0 %v4782
        %5077 = vmatpush.bf16.msra.mxu0 %v4778
        %5078 = vmatmul.bf16.gmra.mxu0 %v4856
        %v5079 = vpop.f32.mrf.mxu0
        %v5080 = vadd.f32 %v5061, %v5079
        %v5081 = vpop.f32.mrf.mxu0
        %v5082 = vadd.f32 %v5063, %v5081
        %5083 = vmatmul.bf16.gmra.mxu0 %v4859
        %v5084 = vpop.f32.mrf.mxu0
        %v5085 = vadd.f32 %v5066, %v5084
        %v5086 = vpop.f32.mrf.mxu0
        %v5087 = vadd.f32 %v5068, %v5086
        %5088 = vdwg.mxu0
        %v5089 = vmax.f32 %v4909, 0.0
        %v5090 = vmax.f32 %v4966, 0.0
        %v5091 = vmax.f32 %v5023, 0.0
        %v5092 = vmax.f32 %v5080, 0.0
        %v5093 = vmax.f32 %v4911, 0.0
        %v5094 = vmax.f32 %v4968, 0.0
        %v5095 = vmax.f32 %v5025, 0.0
        %v5096 = vmax.f32 %v5082, 0.0
        %v5097 = vmax.f32 %v4914, 0.0
        %v5098 = vmax.f32 %v4971, 0.0
        %v5099 = vmax.f32 %v5028, 0.0
        %v5100 = vmax.f32 %v5085, 0.0
        %v5101 = vmax.f32 %v4916, 0.0
        %v5102 = vmax.f32 %v4973, 0.0
        %v5103 = vmax.f32 %v5030, 0.0
        %v5104 = vmax.f32 %v5087, 0.0
        %v5105 = vld [vmem:[%s8] sm:$0xff]
        %v5106 = vld [vmem:[%s8 + $0x8] sm:$0xff]
        %v5107 = vld [vmem:[%s8 + $0x10] sm:$0xff]
        %v5108 = vld [vmem:[%s8 + $0x18] sm:$0xff]
        %v5109 = vld [vmem:[%s9] sm:$0x1]
        %5111 = vset.pattern.permute.xlu0 40
        %5112 = vperm.xlu0 %5111, %v5109
        %v5113 = vpop.permute.xlu0 %5112
        %v5115 = vperm.slane %v5113, 0
        %v5116 = vperm.slane %v5109, 0
        %5117 = vrot.lane.b32.xlu0 %v5116, 120
        %v5118 = vpop.permute.xlu0 %5117
        %v5119 = vsel %vm449, %v5118, 0
        %5121 = vmatpush.msra.mxu0 0.0
        %5122 = vmatpush.msra.mxu0 0.0
        %5123 = vmatpush.msra.mxu0 0.0
        %5124 = vmatpush.msra.mxu0 0.0
        %5125 = vmatpush.msra.mxu0 0.0
        %5126 = vmatpush.msra.mxu0 0.0
        %5127 = vmatpush.msra.mxu0 0.0
        %5128 = vmatpush.msra.mxu0 0.0
        %5129 = vmatpush.msra.mxu0 0.0
        %5130 = vmatpush.msra.mxu0 0.0
        %5131 = vmatpush.msra.mxu0 0.0
        %5132 = vmatpush.msra.mxu0 0.0
        %5133 = vmatpush.msra.mxu0 %v5101
        %5134 = vmatpush.msra.mxu0 %v5097
        %5135 = vmatpush.msra.mxu0 %v5093
        %5136 = vmatpush.msra.mxu0 %v5089
        %5137 = vmatmul.f32.gmra.mxu0 %v5119
        %v5138 = vpop.f32.mrf.mxu0
        %v5139 = vadd.f32 %v5115, %v5138
        %5140 = vdwg.mxu0
        %5141 = vmatpush.msra.mxu0 0.0
        %5142 = vmatpush.msra.mxu0 0.0
        %5143 = vmatpush.msra.mxu0 0.0
        %5144 = vmatpush.msra.mxu0 0.0
        %5145 = vmatpush.msra.mxu0 0.0
        %5146 = vmatpush.msra.mxu0 0.0
        %5147 = vmatpush.msra.mxu0 0.0
        %5148 = vmatpush.msra.mxu0 0.0
        %5149 = vmatpush.msra.mxu0 0.0
        %5150 = vmatpush.msra.mxu0 0.0
        %5151 = vmatpush.msra.mxu0 0.0
        %5152 = vmatpush.msra.mxu0 0.0
        %5153 = vmatpush.msra.mxu0 %v5102
        %5154 = vmatpush.msra.mxu0 %v5098
        %5155 = vmatpush.msra.mxu0 %v5094
        %5156 = vmatpush.msra.mxu0 %v5090
        %5157 = vmatmul.f32.gmra.mxu0 %v5119
        %v5158 = vpop.f32.mrf.mxu0
        %v5159 = vadd.f32 %v5115, %v5158
        %5160 = vdwg.mxu0
        %5161 = vmatpush.msra.mxu0 0.0
        %5162 = vmatpush.msra.mxu0 0.0
        %5163 = vmatpush.msra.mxu0 0.0
        %5164 = vmatpush.msra.mxu0 0.0
        %5165 = vmatpush.msra.mxu0 0.0
        %5166 = vmatpush.msra.mxu0 0.0
        %5167 = vmatpush.msra.mxu0 0.0
        %5168 = vmatpush.msra.mxu0 0.0
        %5169 = vmatpush.msra.mxu0 0.0
        %5170 = vmatpush.msra.mxu0 0.0
        %5171 = vmatpush.msra.mxu0 0.0
        %5172 = vmatpush.msra.mxu0 0.0
        %5173 = vmatpush.msra.mxu0 %v5103
        %5174 = vmatpush.msra.mxu0 %v5099
        %5175 = vmatpush.msra.mxu0 %v5095
        %5176 = vmatpush.msra.mxu0 %v5091
        %5177 = vmatmul.f32.gmra.mxu0 %v5119
        %v5178 = vpop.f32.mrf.mxu0
        %v5179 = vadd.f32 %v5115, %v5178
        %5180 = vdwg.mxu0
        %5181 = vmatpush.msra.mxu0 0.0
        %5182 = vmatpush.msra.mxu0 0.0
        %5183 = vmatpush.msra.mxu0 0.0
        %5184 = vmatpush.msra.mxu0 0.0
        %5185 = vmatpush.msra.mxu0 0.0
        %5186 = vmatpush.msra.mxu0 0.0
        %5187 = vmatpush.msra.mxu0 0.0
        %5188 = vmatpush.msra.mxu0 0.0
        %5189 = vmatpush.msra.mxu0 0.0
        %5190 = vmatpush.msra.mxu0 0.0
        %5191 = vmatpush.msra.mxu0 0.0
        %5192 = vmatpush.msra.mxu0 0.0
        %5193 = vmatpush.msra.mxu0 %v5104
        %5194 = vmatpush.msra.mxu0 %v5100
        %5195 = vmatpush.msra.mxu0 %v5096
        %5196 = vmatpush.msra.mxu0 %v5092
        %5197 = vmatmul.f32.gmra.mxu0 %v5119
        %v5198 = vpop.f32.mrf.mxu0
        %v5199 = vadd.f32 %v5115, %v5198
        %5200 = vdwg.mxu0
        %v5201 = vsub.f32 0.0, %v5139
        %v5202 = vsub.f32 0.0, %v5159
        %v5203 = vsub.f32 0.0, %v5179
        %v5204 = vsub.f32 0.0, %v5199
        %v5205 = vmul.f32 %v5201, 1.442695
        %v5206 = vpow.pop %v5205
        %v5207 = vmul.f32 %v5202, 1.442695
        %v5208 = vpow.pop %v5207
        %v5209 = vmul.f32 %v5203, 1.442695
        %v5210 = vpow.pop %v5209
        %v5211 = vmul.f32 %v5204, 1.442695
        %v5212 = vpow.pop %v5211
        %v5213 = vadd.f32 %v5206, 1.0
        %v5214 = vadd.f32 %v5208, 1.0
        %v5215 = vadd.f32 %v5210, 1.0
        %v5216 = vadd.f32 %v5212, 1.0
        %v5217 = vrcp.pop %v5213
        %v5218 = vmul.f32 %v5213, %v5217
        %v5219 = vsub.f32 1.0, %v5218
        %v5220 = vmul.f32 %v5217, %v5219
        %v5221 = vadd.f32 %v5217, %v5220
        %vm5222 = vweird.f32 %v5213
        %vm5223 = vweird.f32 %v5217
        %vm5224 = vmor %vm5222, %vm5223
        %v5225 = vsel %vm5224, %v5217, %v5221
        %v5226 = vand.u32 2147483647, %v5213
        %vm5227 = vcmp.eq.f32.partialorder %v5226, 8.507059e+37
        %v5228 = vand.u32 %v5213, 2147483648
        %v5229 = vor.u32 1.1754944e-38, %v5228
        %v5230 = vsel %vm5227, %v5229, %v5225
        %v5231 = vmul.f32 1.0, %v5230
        %v5232 = vrcp.pop %v5214
        %v5233 = vmul.f32 %v5214, %v5232
        %v5234 = vsub.f32 1.0, %v5233
        %v5235 = vmul.f32 %v5232, %v5234
        %v5236 = vadd.f32 %v5232, %v5235
        %vm5237 = vweird.f32 %v5214
        %vm5238 = vweird.f32 %v5232
        %vm5239 = vmor %vm5237, %vm5238
        %v5240 = vsel %vm5239, %v5232, %v5236
        %v5241 = vand.u32 2147483647, %v5214
        %vm5242 = vcmp.eq.f32.partialorder %v5241, 8.507059e+37
        %v5243 = vand.u32 %v5214, 2147483648
        %v5244 = vor.u32 1.1754944e-38, %v5243
        %v5245 = vsel %vm5242, %v5244, %v5240
        %v5246 = vmul.f32 1.0, %v5245
        %v5247 = vrcp.pop %v5215
        %v5248 = vmul.f32 %v5215, %v5247
        %v5249 = vsub.f32 1.0, %v5248
        %v5250 = vmul.f32 %v5247, %v5249
        %v5251 = vadd.f32 %v5247, %v5250
        %vm5252 = vweird.f32 %v5215
        %vm5253 = vweird.f32 %v5247
        %vm5254 = vmor %vm5252, %vm5253
        %v5255 = vsel %vm5254, %v5247, %v5251
        %v5256 = vand.u32 2147483647, %v5215
        %vm5257 = vcmp.eq.f32.partialorder %v5256, 8.507059e+37
        %v5258 = vand.u32 %v5215, 2147483648
        %v5259 = vor.u32 1.1754944e-38, %v5258
        %v5260 = vsel %vm5257, %v5259, %v5255
        %v5261 = vmul.f32 1.0, %v5260
        %v5262 = vrcp.pop %v5216
        %v5263 = vmul.f32 %v5216, %v5262
        %v5264 = vsub.f32 1.0, %v5263
        %v5265 = vmul.f32 %v5262, %v5264
        %v5266 = vadd.f32 %v5262, %v5265
        %vm5267 = vweird.f32 %v5216
        %vm5268 = vweird.f32 %v5262
        %vm5269 = vmor %vm5267, %vm5268
        %v5270 = vsel %vm5269, %v5262, %v5266
        %v5271 = vand.u32 2147483647, %v5216
        %vm5272 = vcmp.eq.f32.partialorder %v5271, 8.507059e+37
        %v5273 = vand.u32 %v5216, 2147483648
        %v5274 = vor.u32 1.1754944e-38, %v5273
        %v5275 = vsel %vm5272, %v5274, %v5270
        %v5276 = vmul.f32 1.0, %v5275
        %v5277 = vmul.f32 %v5089, %v617
        %v5278 = vmul.f32 %v5090, %v618
        %v5279 = vmul.f32 %v5091, %v619
        %v5280 = vmul.f32 %v5092, %v620
        %v5281 = vmul.f32 %v5093, %v617
        %v5282 = vmul.f32 %v5094, %v618
        %v5283 = vmul.f32 %v5095, %v619
        %v5284 = vmul.f32 %v5096, %v620
        %v5285 = vmul.f32 %v5097, %v617
        %v5286 = vmul.f32 %v5098, %v618
        %v5287 = vmul.f32 %v5099, %v619
        %v5288 = vmul.f32 %v5100, %v620
        %v5289 = vmul.f32 %v5101, %v617
        %v5290 = vmul.f32 %v5102, %v618
        %v5291 = vmul.f32 %v5103, %v619
        %v5292 = vmul.f32 %v5104, %v620
        %v5293 = vadd.f32 %v5277, %v5278
        %v5294 = vadd.f32 %v5293, %v5279
        %v5295 = vadd.f32 %v5294, %v5280
        %5296 = vadd.xlane.f32.xlu0 %v5295
        %v5297 = vpop.xlane.xlu0 %5296
        %v5298 = vadd.f32 %v5281, %v5282
        %v5299 = vadd.f32 %v5298, %v5283
        %v5300 = vadd.f32 %v5299, %v5284
        %5301 = vadd.xlane.f32.xlu0 %v5300
        %v5302 = vpop.xlane.xlu0 %5301
        %v5303 = vadd.f32 %v5285, %v5286
        %v5304 = vadd.f32 %v5303, %v5287
        %v5305 = vadd.f32 %v5304, %v5288
        %5306 = vadd.xlane.f32.xlu0 %v5305
        %v5307 = vpop.xlane.xlu0 %5306
        %v5308 = vadd.f32 %v5289, %v5290
        %v5309 = vadd.f32 %v5308, %v5291
        %v5310 = vadd.f32 %v5309, %v5292
        %5311 = vadd.xlane.f32.xlu0 %v5310
        %v5312 = vpop.xlane.xlu0 %5311
        %v5313 = vmul.f32 %v5297, 0.00390625
        %v5314 = vmul.f32 %v5302, 0.00390625
        %v5315 = vmul.f32 %v5307, 0.00390625
        %v5316 = vmul.f32 %v5312, 0.00390625
        %v5317 = vmul.f32 %v5105, %v5313
        %v5318 = vmul.f32 %v5106, %v5314
        %v5319 = vmul.f32 %v5107, %v5315
        %v5320 = vmul.f32 %v5108, %v5316
        %v5321 = vsel %vm665, %v5317, 0.0
        %v5322 = vsel %vm665, %v5318, 0.0
        %v5323 = vadd.f32 %v5321, %v5322
        %v5324 = vsel %vm665, %v5319, 0.0
        %v5325 = vadd.f32 %v5323, %v5324
        %v5326 = vsel %vm665, %v5320, 0.0
        %v5327 = vadd.f32 %v5325, %v5326
        %v5328 = vrot.slane %v5327, 4
        %v5329 = vadd.f32 %v5327, %v5328
        %v5330 = vrot.slane %v5329, 2
        %v5331 = vadd.f32 %v5329, %v5330
        %v5332 = vrot.slane %v5331, 1
        %v5333 = vadd.f32 %v5331, %v5332
        %v5334 = vadd.f32 %v5333, %v5109
        %v5335 = vmax.f32 %v5334, 0.0
        %v5336 = vperm.slane %v5335, 0
        %5338 = vrot.lane.b32.xlu0 %v5336, 8
        %v5339 = vpop.permute.xlu0 %5338
        %v5341 = vmul.f32 %v5105, %v5339
        %v5342 = vmul.f32 %v5106, %v5339
        %v5343 = vmul.f32 %v5107, %v5339
        %v5344 = vmul.f32 %v5108, %v5339
        %5349 = vrot.lane.b32.xlu0 %v5341, 120
        %v5350 = vpop.permute.xlu0 %5349
        %5351 = vrot.lane.b32.xlu0 %v5342, 120
        %v5352 = vpop.permute.xlu0 %5351
        %5353 = vrot.lane.b32.xlu0 %v5343, 120
        %v5354 = vpop.permute.xlu0 %5353
        %5355 = vrot.lane.b32.xlu0 %v5344, 120
        %v5356 = vpop.permute.xlu0 %5355
        %v5361 = vsel %vm665, %v5350, 0.0
        %5362 = vadd.xlane.f32.xlu0 %v5361
        %v5363 = vpop.xlane.xlu0 %5362
        %v5364 = vsel %vm665, %v5352, 0.0
        %5365 = vadd.xlane.f32.xlu0 %v5364
        %v5366 = vpop.xlane.xlu0 %5365
        %v5367 = vsel %vm665, %v5354, 0.0
        %5368 = vadd.xlane.f32.xlu0 %v5367
        %v5369 = vpop.xlane.xlu0 %5368
        %v5370 = vsel %vm665, %v5356, 0.0
        %5371 = vadd.xlane.f32.xlu0 %v5370
        %v5372 = vpop.xlane.xlu0 %5371
        %v5373 = vadd.f32 %v5363, %v5105
        %v5374 = vadd.f32 %v5366, %v5106
        %v5375 = vadd.f32 %v5369, %v5107
        %v5376 = vadd.f32 %v5372, %v5108
        %v5377 = vsub.f32 0.0, %v5373
        %v5378 = vsub.f32 0.0, %v5374
        %v5379 = vsub.f32 0.0, %v5375
        %v5380 = vsub.f32 0.0, %v5376
        %v5381 = vmul.f32 %v5377, 1.442695
        %v5382 = vpow.pop %v5381
        %v5383 = vmul.f32 %v5378, 1.442695
        %v5384 = vpow.pop %v5383
        %v5385 = vmul.f32 %v5379, 1.442695
        %v5386 = vpow.pop %v5385
        %v5387 = vmul.f32 %v5380, 1.442695
        %v5388 = vpow.pop %v5387
        %v5389 = vadd.f32 %v5382, 1.0
        %v5390 = vadd.f32 %v5384, 1.0
        %v5391 = vadd.f32 %v5386, 1.0
        %v5392 = vadd.f32 %v5388, 1.0
        %v5393 = vrcp.pop %v5389
        %v5394 = vmul.f32 %v5389, %v5393
        %v5395 = vsub.f32 1.0, %v5394
        %v5396 = vmul.f32 %v5393, %v5395
        %v5397 = vadd.f32 %v5393, %v5396
        %vm5398 = vweird.f32 %v5389
        %vm5399 = vweird.f32 %v5393
        %vm5400 = vmor %vm5398, %vm5399
        %v5401 = vsel %vm5400, %v5393, %v5397
        %v5402 = vand.u32 2147483647, %v5389
        %vm5403 = vcmp.eq.f32.partialorder %v5402, 8.507059e+37
        %v5404 = vand.u32 %v5389, 2147483648
        %v5405 = vor.u32 1.1754944e-38, %v5404
        %v5406 = vsel %vm5403, %v5405, %v5401
        %v5407 = vmul.f32 1.0, %v5406
        %v5408 = vrcp.pop %v5390
        %v5409 = vmul.f32 %v5390, %v5408
        %v5410 = vsub.f32 1.0, %v5409
        %v5411 = vmul.f32 %v5408, %v5410
        %v5412 = vadd.f32 %v5408, %v5411
        %vm5413 = vweird.f32 %v5390
        %vm5414 = vweird.f32 %v5408
        %vm5415 = vmor %vm5413, %vm5414
        %v5416 = vsel %vm5415, %v5408, %v5412
        %v5417 = vand.u32 2147483647, %v5390
        %vm5418 = vcmp.eq.f32.partialorder %v5417, 8.507059e+37
        %v5419 = vand.u32 %v5390, 2147483648
        %v5420 = vor.u32 1.1754944e-38, %v5419
        %v5421 = vsel %vm5418, %v5420, %v5416
        %v5422 = vmul.f32 1.0, %v5421
        %v5423 = vrcp.pop %v5391
        %v5424 = vmul.f32 %v5391, %v5423
        %v5425 = vsub.f32 1.0, %v5424
        %v5426 = vmul.f32 %v5423, %v5425
        %v5427 = vadd.f32 %v5423, %v5426
        %vm5428 = vweird.f32 %v5391
        %vm5429 = vweird.f32 %v5423
        %vm5430 = vmor %vm5428, %vm5429
        %v5431 = vsel %vm5430, %v5423, %v5427
        %v5432 = vand.u32 2147483647, %v5391
        %vm5433 = vcmp.eq.f32.partialorder %v5432, 8.507059e+37
        %v5434 = vand.u32 %v5391, 2147483648
        %v5435 = vor.u32 1.1754944e-38, %v5434
        %v5436 = vsel %vm5433, %v5435, %v5431
        %v5437 = vmul.f32 1.0, %v5436
        %v5438 = vrcp.pop %v5392
        %v5439 = vmul.f32 %v5392, %v5438
        %v5440 = vsub.f32 1.0, %v5439
        %v5441 = vmul.f32 %v5438, %v5440
        %v5442 = vadd.f32 %v5438, %v5441
        %vm5443 = vweird.f32 %v5392
        %vm5444 = vweird.f32 %v5438
        %vm5445 = vmor %vm5443, %vm5444
        %v5446 = vsel %vm5445, %v5438, %v5442
        %v5447 = vand.u32 2147483647, %v5392
        %vm5448 = vcmp.eq.f32.partialorder %v5447, 8.507059e+37
        %v5449 = vand.u32 %v5392, 2147483648
        %v5450 = vor.u32 1.1754944e-38, %v5449
        %v5451 = vsel %vm5448, %v5450, %v5446
        %v5452 = vmul.f32 1.0, %v5451
        %5454 = vset.pattern.permute.xlu0 16
        %5455 = vperm.xlu0 %5454, %v5407
        %v5456 = vpop.permute.xlu0 %5455
        %5459 = vset.pattern.permute.xlu0 16
        %5460 = vperm.xlu0 %5459, %v5422
        %v5461 = vpop.permute.xlu0 %5460
        %5464 = vset.pattern.permute.xlu0 16
        %5465 = vperm.xlu0 %5464, %v5437
        %v5466 = vpop.permute.xlu0 %5465
        %5469 = vset.pattern.permute.xlu0 16
        %5470 = vperm.xlu0 %5469, %v5452
        %v5471 = vpop.permute.xlu0 %5470
        %v5473 = vmul.f32 %v5456, %v617
        %v5474 = vmul.f32 %v5456, %v618
        %v5475 = vmul.f32 %v5456, %v619
        %v5476 = vmul.f32 %v5456, %v620
        %v5477 = vmul.f32 %v5461, %v617
        %v5478 = vmul.f32 %v5461, %v618
        %v5479 = vmul.f32 %v5461, %v619
        %v5480 = vmul.f32 %v5461, %v620
        %v5481 = vmul.f32 %v5466, %v617
        %v5482 = vmul.f32 %v5466, %v618
        %v5483 = vmul.f32 %v5466, %v619
        %v5484 = vmul.f32 %v5466, %v620
        %v5485 = vmul.f32 %v5471, %v617
        %v5486 = vmul.f32 %v5471, %v618
        %v5487 = vmul.f32 %v5471, %v619
        %v5488 = vmul.f32 %v5471, %v620
        %v5489 = vperm.slane %v5231, 0
        %v5490 = vperm.slane %v5246, 0
        %v5491 = vperm.slane %v5261, 0
        %v5492 = vperm.slane %v5276, 0
        %v5493 = vadd.f32 %v5489, %v5473
        %v5494 = vadd.f32 %v5490, %v5474
        %v5495 = vadd.f32 %v5491, %v5475
        %v5496 = vadd.f32 %v5492, %v5476
        %v5497 = vadd.f32 %v5489, %v5477
        %v5498 = vadd.f32 %v5490, %v5478
        %v5499 = vadd.f32 %v5491, %v5479
        %v5500 = vadd.f32 %v5492, %v5480
        %v5501 = vadd.f32 %v5489, %v5481
        %v5502 = vadd.f32 %v5490, %v5482
        %v5503 = vadd.f32 %v5491, %v5483
        %v5504 = vadd.f32 %v5492, %v5484
        %v5505 = vadd.f32 %v5489, %v5485
        %v5506 = vadd.f32 %v5490, %v5486
        %v5507 = vadd.f32 %v5491, %v5487
        %v5508 = vadd.f32 %v5492, %v5488
        %v5509 = vmul.f32 %v5089, %v862
        %v5510 = vmul.f32 %v5090, %v863
        %v5511 = vmul.f32 %v5091, %v864
        %v5512 = vmul.f32 %v5092, %v865
        %v5513 = vmul.f32 %v5093, %v862
        %v5514 = vmul.f32 %v5094, %v863
        %v5515 = vmul.f32 %v5095, %v864
        %v5516 = vmul.f32 %v5096, %v865
        %v5517 = vmul.f32 %v5097, %v862
        %v5518 = vmul.f32 %v5098, %v863
        %v5519 = vmul.f32 %v5099, %v864
        %v5520 = vmul.f32 %v5100, %v865
        %v5521 = vmul.f32 %v5101, %v862
        %v5522 = vmul.f32 %v5102, %v863
        %v5523 = vmul.f32 %v5103, %v864
        %v5524 = vmul.f32 %v5104, %v865
        %v5525 = vadd.f32 %v5509, %v5510
        %v5526 = vadd.f32 %v5525, %v5511
        %v5527 = vadd.f32 %v5526, %v5512
        %5528 = vadd.xlane.f32.xlu0 %v5527
        %v5529 = vpop.xlane.xlu0 %5528
        %v5530 = vadd.f32 %v5513, %v5514
        %v5531 = vadd.f32 %v5530, %v5515
        %v5532 = vadd.f32 %v5531, %v5516
        %5533 = vadd.xlane.f32.xlu0 %v5532
        %v5534 = vpop.xlane.xlu0 %5533
        %v5535 = vadd.f32 %v5517, %v5518
        %v5536 = vadd.f32 %v5535, %v5519
        %v5537 = vadd.f32 %v5536, %v5520
        %5538 = vadd.xlane.f32.xlu0 %v5537
        %v5539 = vpop.xlane.xlu0 %5538
        %v5540 = vadd.f32 %v5521, %v5522
        %v5541 = vadd.f32 %v5540, %v5523
        %v5542 = vadd.f32 %v5541, %v5524
        %5543 = vadd.xlane.f32.xlu0 %v5542
        %v5544 = vpop.xlane.xlu0 %5543
        %v5545 = vmul.f32 %v5529, 0.00390625
        %v5546 = vmul.f32 %v5534, 0.00390625
        %v5547 = vmul.f32 %v5539, 0.00390625
        %v5548 = vmul.f32 %v5544, 0.00390625
        %v5549 = vmul.f32 %v5105, %v5545
        %v5550 = vmul.f32 %v5106, %v5546
        %v5551 = vmul.f32 %v5107, %v5547
        %v5552 = vmul.f32 %v5108, %v5548
        %v5553 = vsel %vm665, %v5549, 0.0
        %v5554 = vsel %vm665, %v5550, 0.0
        %v5555 = vadd.f32 %v5553, %v5554
        %v5556 = vsel %vm665, %v5551, 0.0
        %v5557 = vadd.f32 %v5555, %v5556
        %v5558 = vsel %vm665, %v5552, 0.0
        %v5559 = vadd.f32 %v5557, %v5558
        %v5560 = vrot.slane %v5559, 4
        %v5561 = vadd.f32 %v5559, %v5560
        %v5562 = vrot.slane %v5561, 2
        %v5563 = vadd.f32 %v5561, %v5562
        %v5564 = vrot.slane %v5563, 1
        %v5565 = vadd.f32 %v5563, %v5564
        %v5566 = vadd.f32 %v5565, %v5109
        %v5567 = vmax.f32 %v5566, 0.0
        %v5568 = vperm.slane %v5567, 0
        %5570 = vrot.lane.b32.xlu0 %v5568, 8
        %v5571 = vpop.permute.xlu0 %5570
        %v5573 = vmul.f32 %v5105, %v5571
        %v5574 = vmul.f32 %v5106, %v5571
        %v5575 = vmul.f32 %v5107, %v5571
        %v5576 = vmul.f32 %v5108, %v5571
        %5581 = vrot.lane.b32.xlu0 %v5573, 120
        %v5582 = vpop.permute.xlu0 %5581
        %5583 = vrot.lane.b32.xlu0 %v5574, 120
        %v5584 = vpop.permute.xlu0 %5583
        %5585 = vrot.lane.b32.xlu0 %v5575, 120
        %v5586 = vpop.permute.xlu0 %5585
        %5587 = vrot.lane.b32.xlu0 %v5576, 120
        %v5588 = vpop.permute.xlu0 %5587
        %v5593 = vsel %vm665, %v5582, 0.0
        %5594 = vadd.xlane.f32.xlu0 %v5593
        %v5595 = vpop.xlane.xlu0 %5594
        %v5596 = vsel %vm665, %v5584, 0.0
        %5597 = vadd.xlane.f32.xlu0 %v5596
        %v5598 = vpop.xlane.xlu0 %5597
        %v5599 = vsel %vm665, %v5586, 0.0
        %5600 = vadd.xlane.f32.xlu0 %v5599
        %v5601 = vpop.xlane.xlu0 %5600
        %v5602 = vsel %vm665, %v5588, 0.0
        %5603 = vadd.xlane.f32.xlu0 %v5602
        %v5604 = vpop.xlane.xlu0 %5603
        %v5605 = vadd.f32 %v5595, %v5105
        %v5606 = vadd.f32 %v5598, %v5106
        %v5607 = vadd.f32 %v5601, %v5107
        %v5608 = vadd.f32 %v5604, %v5108
        %v5609 = vsub.f32 0.0, %v5605
        %v5610 = vsub.f32 0.0, %v5606
        %v5611 = vsub.f32 0.0, %v5607
        %v5612 = vsub.f32 0.0, %v5608
        %v5613 = vmul.f32 %v5609, 1.442695
        %v5614 = vpow.pop %v5613
        %v5615 = vmul.f32 %v5610, 1.442695
        %v5616 = vpow.pop %v5615
        %v5617 = vmul.f32 %v5611, 1.442695
        %v5618 = vpow.pop %v5617
        %v5619 = vmul.f32 %v5612, 1.442695
        %v5620 = vpow.pop %v5619
        %v5621 = vadd.f32 %v5614, 1.0
        %v5622 = vadd.f32 %v5616, 1.0
        %v5623 = vadd.f32 %v5618, 1.0
        %v5624 = vadd.f32 %v5620, 1.0
        %v5625 = vrcp.pop %v5621
        %v5626 = vmul.f32 %v5621, %v5625
        %v5627 = vsub.f32 1.0, %v5626
        %v5628 = vmul.f32 %v5625, %v5627
        %v5629 = vadd.f32 %v5625, %v5628
        %vm5630 = vweird.f32 %v5621
        %vm5631 = vweird.f32 %v5625
        %vm5632 = vmor %vm5630, %vm5631
        %v5633 = vsel %vm5632, %v5625, %v5629
        %v5634 = vand.u32 2147483647, %v5621
        %vm5635 = vcmp.eq.f32.partialorder %v5634, 8.507059e+37
        %v5636 = vand.u32 %v5621, 2147483648
        %v5637 = vor.u32 1.1754944e-38, %v5636
        %v5638 = vsel %vm5635, %v5637, %v5633
        %v5639 = vmul.f32 1.0, %v5638
        %v5640 = vrcp.pop %v5622
        %v5641 = vmul.f32 %v5622, %v5640
        %v5642 = vsub.f32 1.0, %v5641
        %v5643 = vmul.f32 %v5640, %v5642
        %v5644 = vadd.f32 %v5640, %v5643
        %vm5645 = vweird.f32 %v5622
        %vm5646 = vweird.f32 %v5640
        %vm5647 = vmor %vm5645, %vm5646
        %v5648 = vsel %vm5647, %v5640, %v5644
        %v5649 = vand.u32 2147483647, %v5622
        %vm5650 = vcmp.eq.f32.partialorder %v5649, 8.507059e+37
        %v5651 = vand.u32 %v5622, 2147483648
        %v5652 = vor.u32 1.1754944e-38, %v5651
        %v5653 = vsel %vm5650, %v5652, %v5648
        %v5654 = vmul.f32 1.0, %v5653
        %v5655 = vrcp.pop %v5623
        %v5656 = vmul.f32 %v5623, %v5655
        %v5657 = vsub.f32 1.0, %v5656
        %v5658 = vmul.f32 %v5655, %v5657
        %v5659 = vadd.f32 %v5655, %v5658
        %vm5660 = vweird.f32 %v5623
        %vm5661 = vweird.f32 %v5655
        %vm5662 = vmor %vm5660, %vm5661
        %v5663 = vsel %vm5662, %v5655, %v5659
        %v5664 = vand.u32 2147483647, %v5623
        %vm5665 = vcmp.eq.f32.partialorder %v5664, 8.507059e+37
        %v5666 = vand.u32 %v5623, 2147483648
        %v5667 = vor.u32 1.1754944e-38, %v5666
        %v5668 = vsel %vm5665, %v5667, %v5663
        %v5669 = vmul.f32 1.0, %v5668
        %v5670 = vrcp.pop %v5624
        %v5671 = vmul.f32 %v5624, %v5670
        %v5672 = vsub.f32 1.0, %v5671
        %v5673 = vmul.f32 %v5670, %v5672
        %v5674 = vadd.f32 %v5670, %v5673
        %vm5675 = vweird.f32 %v5624
        %vm5676 = vweird.f32 %v5670
        %vm5677 = vmor %vm5675, %vm5676
        %v5678 = vsel %vm5677, %v5670, %v5674
        %v5679 = vand.u32 2147483647, %v5624
        %vm5680 = vcmp.eq.f32.partialorder %v5679, 8.507059e+37
        %v5681 = vand.u32 %v5624, 2147483648
        %v5682 = vor.u32 1.1754944e-38, %v5681
        %v5683 = vsel %vm5680, %v5682, %v5678
        %v5684 = vmul.f32 1.0, %v5683
        %5686 = vset.pattern.permute.xlu0 16
        %5687 = vperm.xlu0 %5686, %v5639
        %v5688 = vpop.permute.xlu0 %5687
        %5691 = vset.pattern.permute.xlu0 16
        %5692 = vperm.xlu0 %5691, %v5654
        %v5693 = vpop.permute.xlu0 %5692
        %5696 = vset.pattern.permute.xlu0 16
        %5697 = vperm.xlu0 %5696, %v5669
        %v5698 = vpop.permute.xlu0 %5697
        %5701 = vset.pattern.permute.xlu0 16
        %5702 = vperm.xlu0 %5701, %v5684
        %v5703 = vpop.permute.xlu0 %5702
        %v5705 = vmul.f32 %v5688, %v862
        %v5706 = vmul.f32 %v5688, %v863
        %v5707 = vmul.f32 %v5688, %v864
        %v5708 = vmul.f32 %v5688, %v865
        %v5709 = vmul.f32 %v5693, %v862
        %v5710 = vmul.f32 %v5693, %v863
        %v5711 = vmul.f32 %v5693, %v864
        %v5712 = vmul.f32 %v5693, %v865
        %v5713 = vmul.f32 %v5698, %v862
        %v5714 = vmul.f32 %v5698, %v863
        %v5715 = vmul.f32 %v5698, %v864
        %v5716 = vmul.f32 %v5698, %v865
        %v5717 = vmul.f32 %v5703, %v862
        %v5718 = vmul.f32 %v5703, %v863
        %v5719 = vmul.f32 %v5703, %v864
        %v5720 = vmul.f32 %v5703, %v865
        %v5721 = vadd.f32 %v5493, %v5705
        %v5722 = vadd.f32 %v5494, %v5706
        %v5723 = vadd.f32 %v5495, %v5707
        %v5724 = vadd.f32 %v5496, %v5708
        %v5725 = vadd.f32 %v5497, %v5709
        %v5726 = vadd.f32 %v5498, %v5710
        %v5727 = vadd.f32 %v5499, %v5711
        %v5728 = vadd.f32 %v5500, %v5712
        %v5729 = vadd.f32 %v5501, %v5713
        %v5730 = vadd.f32 %v5502, %v5714
        %v5731 = vadd.f32 %v5503, %v5715
        %v5732 = vadd.f32 %v5504, %v5716
        %v5733 = vadd.f32 %v5505, %v5717
        %v5734 = vadd.f32 %v5506, %v5718
        %v5735 = vadd.f32 %v5507, %v5719
        %v5736 = vadd.f32 %v5508, %v5720
        %v5737 = vmul.f32 %v5089, %v5721
        %v5738 = vmul.f32 %v5090, %v5722
        %v5739 = vmul.f32 %v5091, %v5723
        %v5740 = vmul.f32 %v5092, %v5724
        %v5741 = vmul.f32 %v5093, %v5725
        %v5742 = vmul.f32 %v5094, %v5726
        %v5743 = vmul.f32 %v5095, %v5727
        %v5744 = vmul.f32 %v5096, %v5728
        %v5745 = vmul.f32 %v5097, %v5729
        %v5746 = vmul.f32 %v5098, %v5730
        %v5747 = vmul.f32 %v5099, %v5731
        %v5748 = vmul.f32 %v5100, %v5732
        %v5749 = vmul.f32 %v5101, %v5733
        %v5750 = vmul.f32 %v5102, %v5734
        %v5751 = vmul.f32 %v5103, %v5735
        %v5752 = vmul.f32 %v5104, %v5736
        %5753 = vst [vmem:[%s410] sm:$0xff] %v5737
        %5754 = vst [vmem:[%s410 + $0x8] sm:$0xff] %v5738
        %5755 = vst [vmem:[%s410 + $0x10] sm:$0xff] %v5739
        %5756 = vst [vmem:[%s410 + $0x18] sm:$0xff] %v5740
        %5757 = vst [vmem:[%s410 + $0x20] sm:$0xff] %v5741
        %5758 = vst [vmem:[%s410 + $0x28] sm:$0xff] %v5742
        %5759 = vst [vmem:[%s410 + $0x30] sm:$0xff] %v5743
        %5760 = vst [vmem:[%s410 + $0x38] sm:$0xff] %v5744
        %5761 = vst [vmem:[%s410 + $0x40] sm:$0xff] %v5745
        %5762 = vst [vmem:[%s410 + $0x48] sm:$0xff] %v5746
        %5763 = vst [vmem:[%s410 + $0x50] sm:$0xff] %v5747
        %5764 = vst [vmem:[%s410 + $0x58] sm:$0xff] %v5748
        %5765 = vst [vmem:[%s410 + $0x60] sm:$0xff] %v5749
        %5766 = vst [vmem:[%s410 + $0x68] sm:$0xff] %v5750
        %5767 = vst [vmem:[%s410 + $0x70] sm:$0xff] %v5751
        %5768 = vst [vmem:[%s410 + $0x78] sm:$0xff] %v5752
        %s5769 = sand.u32 %s251, 1
        %s5770 = scalar_lea.sflag [#allocation5], %s5769
        %s5771 = sand.u32 %s251, 1
        %s5772 = smul.addr %s5771, 128
        %s5773 = scalar_lea.vmem [#allocation9], %s5772
        // Predicated region
        $region73: #{tpu_custom_call.1} parent=59 // pred_check
          %p5774 = pneg %p261
        $region74: #{tpu_custom_call.1} parent=59 // pred_check_branch
          %5776 = sbr.rel (%p5774) target = $region76
        $region75: #{tpu_custom_call.1} parent=59 // pred_region
          %s5777 = smul.u32 4, %s28
          %5779 = vsyncadd %s5770, 0
          %s5780 = smul.addr %s5777, 8
          %s5781 = scalar_lea.hbm %s10, %s5780
          %s5782 = sshll.u32 %s5773, 4
          %s5783 = int_to_ptr.vmem [resolvable:$true] %s5782
          %s5784 = sshll.u32 %s5781, 4
          %s5785 = int_to_ptr.hbm [resolvable:$true] %s5784
          %5790 = dma.vmem_to_hbm [thread:$0]  %s5783, 2048, %s5785, %s5770, 512, 1024, 32
        $region76: #{tpu_custom_call.1} parent=59 // pred_fallthru
          _
      $region60: #{tpu_custom_call.1} parent=5 // pred_fallthru
        _
      %p5791 = scmp.le.s32.totalorder 2, %s23
      // Predicated region
      $region77: #{tpu_custom_call.1} parent=5 // pred_check
        %p5792 = pneg %p5791
      $region78: #{tpu_custom_call.1} parent=5 // pred_check_branch
        %5794 = sbr.rel (%p5792) target = $region80
      $region79: #{tpu_custom_call.1} parent=5 // pred_region
        %s5795 = ssub.s32 %s23, 2
        // Predicated region
        $region81: #{tpu_custom_call.1} parent=79 // pred_check
          %p5796 = pneg %p267
        $region82: #{tpu_custom_call.1} parent=79 // pred_check_branch
          %5798 = sbr.rel (%p5796) target = $region84
        $region83: #{tpu_custom_call.1} parent=79 // pred_region
          %s5799 = sand.u32 %s252, 1
          %s5800 = scalar_lea.sflag [#allocation5], %s5799
          %s5801 = sand.u32 %s252, 1
          %s5802 = smul.addr %s5801, 128
          %s5803 = scalar_lea.vmem [#allocation9], %s5802
          %5805 = dma.done %s5800, 2048
        $region84: #{tpu_custom_call.1} parent=79 // pred_fallthru
          _
      $region80: #{tpu_custom_call.1} parent=5 // pred_fallthru
        _
    $region6: #{tpu_custom_call.1} parent=1 // loop_footer
      %s27 = sadd.s32 1, %s23
    $region7: #{tpu_custom_call.1} parent=1 // loop_footer_branch
      %22 = sbr.rel target = $region3
    $region8: #{tpu_custom_call.1} parent=1 // loop_exit
      _
    %5806 = vsyncpa [#allocation4], 1
    %s5807 = scalar_lea.sflag [#allocation4], 1
    %5808 = vsyncpa %s5807, 1
    %5809 = vsyncpa [#allocation7], 1
    %5810 = vsyncpa [#allocation5], 1
    %s5811 = scalar_lea.sflag [#allocation5], 1
    %5812 = vsyncpa %s5811, 1

</llo_original>
